<compile_context>
chip_gen: v7x
topology: tpu7x:2x2x1
jax: 0.10.0
libtpu: 0.0.40
codegen_flags: <defaults>
</compile_context>

<pallas_src>
import jax
import jax.numpy as jnp
from jax.experimental import pallas as pl
from jax.experimental.pallas import tpu as pltpu


# Flattened-row extents on the 7-wide working grid used inside the kernel.
_R1 = 42   # pooled conv1 rows: r = qh*7 + qw, qh,qw in 0..5 (rows with qw=6 are junk)
_R2 = 25   # conv2 rows:        r = oh*7 + ow, oh,ow in 0..3


# --------------------------------------------------------------------------
# Fused kernel: conv1+relu+pool -> conv2+relu+pool -> fc -> log_softmax
# --------------------------------------------------------------------------

def _fused_forward_kernel(x_ref, w1_ref, b1_ref, w2_ref, b2_ref,
                          wfc_ref, bfc_ref, o_ref):
    # x_ref: (4, 56, 1)  -- the 4 pooling-phase planes of one sample,
    #                        each 7x7 flattened row-major and zero-padded.
    planes = [x_ref[p] for p in range(4)]          # each (56, 1)
    w1 = w1_ref[...]                               # (9, 64)  rows = (kh, kw)

    # ---- conv1 (1->64, k3) as 9 shifted VPU multiply-accumulates, computed
    # per 2x2-pool phase; relu+bias commute with the max so they are applied
    # once after the phase max (this IS the 2x2 max-pool). ----
    def conv1_phase(ph_h, ph_w):
        acc = jnp.zeros((_R1, 64), jnp.float32)
        for i in range(3):
            e_h, a = (ph_h + i) % 2, (ph_h + i) // 2
            for j in range(3):
                e_w, b = (ph_w + j) % 2, (ph_w + j) // 2
                d = a * 7 + b
                tap = planes[e_h * 2 + e_w][d:d + _R1, :]           # (R1, 1)
                acc = acc + tap * w1[i * 3 + j:i * 3 + j + 1, :]    # (R1, 64)
        return acc

    m = conv1_phase(0, 0)
    m = jnp.maximum(m, conv1_phase(0, 1))
    m = jnp.maximum(m, conv1_phase(1, 0))
    m = jnp.maximum(m, conv1_phase(1, 1))
    y1 = jnp.maximum(m + b1_ref[...], 0.0)          # (42, 64) pooled conv1 act

    # ---- conv2 (64->32, k3): in-kernel im2col via 9 shifted row slices,
    # each a (25, 64) @ (64, 32) MXU matmul accumulated in f32. ----
    z = jnp.zeros((_R2, 32), jnp.float32)
    for i in range(3):
        for j in range(3):
            d = i * 7 + j
            z = z + jnp.dot(y1[d:d + _R2, :], w2_ref[i * 3 + j],
                            preferred_element_type=jnp.float32)
    z = jnp.maximum(z + b2_ref[...], 0.0)           # relu(conv2 + b2), row = oh*7+ow

    # ---- 2x2 max-pool + fc(128->2); the PyTorch NCHW flatten permutation is
    # folded into the pre-packed fc weight (wfc_ref[s] pairs with pool site s). ----
    logits = bfc_ref[...]                            # (1, 2)
    for s, (ph, pw) in enumerate(((0, 0), (0, 1), (1, 0), (1, 1))):
        base = 14 * ph + 2 * pw
        pooled = jnp.maximum(
            jnp.maximum(z[base:base + 1, :], z[base + 1:base + 2, :]),
            jnp.maximum(z[base + 7:base + 8, :], z[base + 8:base + 9, :]))
        logits = logits + jnp.dot(pooled, wfc_ref[s],
                                  preferred_element_type=jnp.float32)

    # ---- log_softmax over the 2 classes ----
    mx = jnp.max(logits, axis=1, keepdims=True)
    lse = mx + jnp.log(jnp.sum(jnp.exp(logits - mx), axis=1, keepdims=True))
    o_ref[0] = logits - lse


# --------------------------------------------------------------------------
# Host-side packing / layout prep + wrapper
# --------------------------------------------------------------------------

def prepack_params(params):
    """One-time weight packing (keep out of the per-call hot path)."""
    w1, b1, w2, b2, wfc, bfc = params
    w1p = w1.reshape(64, 9).T                            # (9, 64)   [kh*3+kw, cout]
    b1p = b1.reshape(1, 64)
    w2p = w2.transpose(2, 3, 1, 0).reshape(9, 64, 32)    # (9,64,32) [kh*3+kw, cin, cout]
    b2p = b2.reshape(1, 32)
    wfcp = wfc.reshape(2, 32, 4).transpose(2, 1, 0)      # (4,32,2)  [pool-site, c, n]
    bfcp = bfc.reshape(1, 2)
    return w1p, b1p, w2p, b2p, wfcp, bfcp


def _phase_decompose(x):
    """(B,1,14,14) -> (B*4, 56, 1): the four 2x2-phase planes of each sample,
    each 7x7 flattened row-major and zero-padded to 56 rows."""
    B = x.shape[0]
    x2 = x[:, 0]                                           # (B, 14, 14)
    planes = jnp.stack([x2[:, 0::2, 0::2], x2[:, 0::2, 1::2],
                        x2[:, 1::2, 0::2], x2[:, 1::2, 1::2]], axis=1)  # (B,4,7,7)
    planes = planes.reshape(B, 4, 49, 1)
    planes = jnp.pad(planes, ((0, 0), (0, 0), (0, 7), (0, 0)))          # (B,4,56,1)
    return planes.reshape(B * 4, 56, 1)


def forward(x, packed):
    w1p, b1p, w2p, b2p, wfcp, bfcp = packed
    assert x.shape[1:] == (1, 14, 14), "M.forward requires (B, 1, 14, 14) input"
    B = x.shape[0]
    xp = _phase_decompose(x)

    out = pl.pallas_call(
        _fused_forward_kernel,
        out_shape=jax.ShapeDtypeStruct((B, 1, 2), jnp.float32),
        grid=(B,),
        in_specs=[
            pl.BlockSpec((4, 56, 1), lambda b: (b, 0, 0)),     # per-sample phases
            pl.BlockSpec((9, 64), lambda b: (0, 0)),           # w1
            pl.BlockSpec((1, 64), lambda b: (0, 0)),           # b1
            pl.BlockSpec((9, 64, 32), lambda b: (0, 0, 0)),    # w2
            pl.BlockSpec((1, 32), lambda b: (0, 0)),           # b2
            pl.BlockSpec((4, 32, 2), lambda b: (0, 0, 0)),     # wfc (flatten folded in)
            pl.BlockSpec((1, 2), lambda b: (0, 0)),            # bfc
        ],
        out_specs=pl.BlockSpec((1, 1, 2), lambda b: (b, 0, 0)),
        compiler_params=pltpu.CompilerParams(
            dimension_semantics=("parallel",)),                # v7x: 2 TCs split batch
    )(xp, w1p, b1p, w2p, b2p, wfcp, bfcp)
    return out.reshape(B, 2)


# --------------------------------------------------------------------------
# Pure-JAX reference (correctness check only)
# --------------------------------------------------------------------------

def ref_forward(x, params):
    w1, b1, w2, b2, wfc, bfc = params

    def conv(x, w, b):
        y = jax.lax.conv_general_dilated(
            x, w, window_strides=(1, 1), padding='VALID',
            dimension_numbers=('NCHW', 'OIHW', 'NCHW'))
        return y + b[None, :, None, None]

    def pool(x):
        B, C, H, W = x.shape
        return x.reshape(B, C, H // 2, 2, W // 2, 2).max(axis=(3, 5))

    y = pool(jax.nn.relu(conv(x, w1, b1)))
    y = pool(jax.nn.relu(conv(y, w2, b2)))
    feat = y.reshape(y.shape[0], -1)
    logits = feat @ wfc.T + bfc
    return jax.nn.log_softmax(logits, axis=1)


# --------------------------------------------------------------------------
# Main
# --------------------------------------------------------------------------

if __name__ == "__main__":
    key = jax.random.PRNGKey(0)
    kx, k1, k2, k3, k4, k5, k6 = jax.random.split(key, 7)

    # deterministic synthetic parameters (shapes from M.__init__)
    w1 = jax.random.normal(k1, (64, 1, 3, 3), jnp.float32) * 0.1
    b1 = jax.random.normal(k2, (64,), jnp.float32) * 0.1
    w2 = jax.random.normal(k3, (32, 64, 3, 3), jnp.float32) * 0.05
    b2 = jax.random.normal(k4, (32,), jnp.float32) * 0.05
    wfc = jax.random.normal(k5, (2, 128), jnp.float32) * 0.05
    bfc = jax.random.normal(k6, (2,), jnp.float32) * 0.05
    params = (w1, b1, w2, b2, wfc, bfc)

    # input: batch=2, 1 channel, 14x14 (flatten then yields exactly 128 feats)
    x = jax.random.normal(kx, (2, 1, 14, 14), jnp.float32)

    packed = prepack_params(params)            # weight packing out of hot path
    fwd = jax.jit(forward)

    out = jax.block_until_ready(fwd(x, packed))
    ref = jax.block_until_ready(ref_forward(x, params))

    assert out.shape == (2, 2) and out.dtype == jnp.float32
    assert jnp.allclose(out, ref, atol=1e-4, rtol=1e-4)
    print("KERNEL_OK")
</pallas_src>

<mosaic_0001>
module attributes {stable_mosaic.version = 11 : i64} {
  func.func @_fused_forward_kernel(%arg0: i32, %arg1: memref<4x56x1xf32, #tpu.memory_space<vmem>>, %arg2: memref<9x64xf32, #tpu.memory_space<vmem>>, %arg3: memref<1x64xf32, #tpu.memory_space<vmem>>, %arg4: memref<9x64x32xf32, #tpu.memory_space<vmem>>, %arg5: memref<1x32xf32, #tpu.memory_space<vmem>>, %arg6: memref<4x32x2xf32, #tpu.memory_space<vmem>>, %arg7: memref<1x2xf32, #tpu.memory_space<vmem>>, %arg8: memref<1x1x2xf32, #tpu.memory_space<vmem>>) attributes {dimension_semantics = [#tpu.dimension_semantics<parallel>], iteration_bounds = array<i64: 2>, scalar_prefetch = 0 : i64, scratch_operands = 0 : i64, tpu.core_type = #tpu.core_type<tc>, window_params = [{transform_indices = @transform_0, window_bounds = array<i64: 4, 56, 1>}, {pipeline_mode = #tpu.pipeline_mode<synchronous>, transform_indices = @transform_1, window_bounds = array<i64: 9, 64>}, {pipeline_mode = #tpu.pipeline_mode<synchronous>, transform_indices = @transform_2, window_bounds = array<i64: 1, 64>}, {pipeline_mode = #tpu.pipeline_mode<synchronous>, transform_indices = @transform_3, window_bounds = array<i64: 9, 64, 32>}, {pipeline_mode = #tpu.pipeline_mode<synchronous>, transform_indices = @transform_4, window_bounds = array<i64: 1, 32>}, {pipeline_mode = #tpu.pipeline_mode<synchronous>, transform_indices = @transform_5, window_bounds = array<i64: 4, 32, 2>}, {pipeline_mode = #tpu.pipeline_mode<synchronous>, transform_indices = @transform_6, window_bounds = array<i64: 1, 2>}, {transform_indices = @transform_7, window_bounds = array<i64: 1, 1, 2>}]} {
    %c0 = arith.constant 0 : index
    %c0_0 = arith.constant 0 : index
    %c0_1 = arith.constant 0 : index
    %0 = vector.load %arg1[%c0, %c0_0, %c0_1] : memref<4x56x1xf32, #tpu.memory_space<vmem>>, vector<1x56x1xf32>
    %1 = vector.shape_cast %0 : vector<1x56x1xf32> to vector<56x1xf32>
    %c1 = arith.constant 1 : index
    %c0_2 = arith.constant 0 : index
    %c0_3 = arith.constant 0 : index
    %2 = vector.load %arg1[%c1, %c0_2, %c0_3] : memref<4x56x1xf32, #tpu.memory_space<vmem>>, vector<1x56x1xf32>
    %3 = vector.shape_cast %2 : vector<1x56x1xf32> to vector<56x1xf32>
    %c2 = arith.constant 2 : index
    %c0_4 = arith.constant 0 : index
    %c0_5 = arith.constant 0 : index
    %4 = vector.load %arg1[%c2, %c0_4, %c0_5] : memref<4x56x1xf32, #tpu.memory_space<vmem>>, vector<1x56x1xf32>
    %5 = vector.shape_cast %4 : vector<1x56x1xf32> to vector<56x1xf32>
    %c3 = arith.constant 3 : index
    %c0_6 = arith.constant 0 : index
    %c0_7 = arith.constant 0 : index
    %6 = vector.load %arg1[%c3, %c0_6, %c0_7] : memref<4x56x1xf32, #tpu.memory_space<vmem>>, vector<1x56x1xf32>
    %7 = vector.shape_cast %6 : vector<1x56x1xf32> to vector<56x1xf32>
    %c0_8 = arith.constant 0 : index
    %c0_9 = arith.constant 0 : index
    %8 = vector.load %arg2[%c0_8, %c0_9] : memref<9x64xf32, #tpu.memory_space<vmem>>, vector<9x64xf32>
    %cst = arith.constant 0.000000e+00 : f32
    %9 = vector.broadcast %cst : f32 to vector<42x64xf32>
    %10 = vector.extract_strided_slice %1 {offsets = [0, 0], sizes = [42, 1], strides = [1, 1]} : vector<56x1xf32> to vector<42x1xf32>
    %11 = vector.extract_strided_slice %8 {offsets = [0, 0], sizes = [1, 64], strides = [1, 1]} : vector<9x64xf32> to vector<1x64xf32>
    %12 = vector.broadcast %10 : vector<42x1xf32> to vector<42x64xf32>
    %13 = vector.broadcast %11 : vector<1x64xf32> to vector<42x64xf32>
    %14 = arith.mulf %12, %13 : vector<42x64xf32>
    %15 = arith.addf %9, %14 : vector<42x64xf32>
    %16 = vector.extract_strided_slice %3 {offsets = [0, 0], sizes = [42, 1], strides = [1, 1]} : vector<56x1xf32> to vector<42x1xf32>
    %17 = vector.extract_strided_slice %8 {offsets = [1, 0], sizes = [1, 64], strides = [1, 1]} : vector<9x64xf32> to vector<1x64xf32>
    %18 = vector.broadcast %16 : vector<42x1xf32> to vector<42x64xf32>
    %19 = vector.broadcast %17 : vector<1x64xf32> to vector<42x64xf32>
    %20 = arith.mulf %18, %19 : vector<42x64xf32>
    %21 = arith.addf %15, %20 : vector<42x64xf32>
    %22 = vector.extract_strided_slice %1 {offsets = [1, 0], sizes = [42, 1], strides = [1, 1]} : vector<56x1xf32> to vector<42x1xf32>
    %23 = vector.extract_strided_slice %8 {offsets = [2, 0], sizes = [1, 64], strides = [1, 1]} : vector<9x64xf32> to vector<1x64xf32>
    %24 = vector.broadcast %22 : vector<42x1xf32> to vector<42x64xf32>
    %25 = vector.broadcast %23 : vector<1x64xf32> to vector<42x64xf32>
    %26 = arith.mulf %24, %25 : vector<42x64xf32>
    %27 = arith.addf %21, %26 : vector<42x64xf32>
    %28 = vector.extract_strided_slice %5 {offsets = [0, 0], sizes = [42, 1], strides = [1, 1]} : vector<56x1xf32> to vector<42x1xf32>
    %29 = vector.extract_strided_slice %8 {offsets = [3, 0], sizes = [1, 64], strides = [1, 1]} : vector<9x64xf32> to vector<1x64xf32>
    %30 = vector.broadcast %28 : vector<42x1xf32> to vector<42x64xf32>
    %31 = vector.broadcast %29 : vector<1x64xf32> to vector<42x64xf32>
    %32 = arith.mulf %30, %31 : vector<42x64xf32>
    %33 = arith.addf %27, %32 : vector<42x64xf32>
    %34 = vector.extract_strided_slice %7 {offsets = [0, 0], sizes = [42, 1], strides = [1, 1]} : vector<56x1xf32> to vector<42x1xf32>
    %35 = vector.extract_strided_slice %8 {offsets = [4, 0], sizes = [1, 64], strides = [1, 1]} : vector<9x64xf32> to vector<1x64xf32>
    %36 = vector.broadcast %34 : vector<42x1xf32> to vector<42x64xf32>
    %37 = vector.broadcast %35 : vector<1x64xf32> to vector<42x64xf32>
    %38 = arith.mulf %36, %37 : vector<42x64xf32>
    %39 = arith.addf %33, %38 : vector<42x64xf32>
    %40 = vector.extract_strided_slice %5 {offsets = [1, 0], sizes = [42, 1], strides = [1, 1]} : vector<56x1xf32> to vector<42x1xf32>
    %41 = vector.extract_strided_slice %8 {offsets = [5, 0], sizes = [1, 64], strides = [1, 1]} : vector<9x64xf32> to vector<1x64xf32>
    %42 = vector.broadcast %40 : vector<42x1xf32> to vector<42x64xf32>
    %43 = vector.broadcast %41 : vector<1x64xf32> to vector<42x64xf32>
    %44 = arith.mulf %42, %43 : vector<42x64xf32>
    %45 = arith.addf %39, %44 : vector<42x64xf32>
    %46 = vector.extract_strided_slice %1 {offsets = [7, 0], sizes = [42, 1], strides = [1, 1]} : vector<56x1xf32> to vector<42x1xf32>
    %47 = vector.extract_strided_slice %8 {offsets = [6, 0], sizes = [1, 64], strides = [1, 1]} : vector<9x64xf32> to vector<1x64xf32>
    %48 = vector.broadcast %46 : vector<42x1xf32> to vector<42x64xf32>
    %49 = vector.broadcast %47 : vector<1x64xf32> to vector<42x64xf32>
    %50 = arith.mulf %48, %49 : vector<42x64xf32>
    %51 = arith.addf %45, %50 : vector<42x64xf32>
    %52 = vector.extract_strided_slice %3 {offsets = [7, 0], sizes = [42, 1], strides = [1, 1]} : vector<56x1xf32> to vector<42x1xf32>
    %53 = vector.extract_strided_slice %8 {offsets = [7, 0], sizes = [1, 64], strides = [1, 1]} : vector<9x64xf32> to vector<1x64xf32>
    %54 = vector.broadcast %52 : vector<42x1xf32> to vector<42x64xf32>
    %55 = vector.broadcast %53 : vector<1x64xf32> to vector<42x64xf32>
    %56 = arith.mulf %54, %55 : vector<42x64xf32>
    %57 = arith.addf %51, %56 : vector<42x64xf32>
    %58 = vector.extract_strided_slice %1 {offsets = [8, 0], sizes = [42, 1], strides = [1, 1]} : vector<56x1xf32> to vector<42x1xf32>
    %59 = vector.extract_strided_slice %8 {offsets = [8, 0], sizes = [1, 64], strides = [1, 1]} : vector<9x64xf32> to vector<1x64xf32>
    %60 = vector.broadcast %58 : vector<42x1xf32> to vector<42x64xf32>
    %61 = vector.broadcast %59 : vector<1x64xf32> to vector<42x64xf32>
    %62 = arith.mulf %60, %61 : vector<42x64xf32>
    %63 = arith.addf %57, %62 : vector<42x64xf32>
    %cst_10 = arith.constant 0.000000e+00 : f32
    %64 = vector.broadcast %cst_10 : f32 to vector<42x64xf32>
    %65 = vector.extract_strided_slice %3 {offsets = [0, 0], sizes = [42, 1], strides = [1, 1]} : vector<56x1xf32> to vector<42x1xf32>
    %66 = vector.extract_strided_slice %8 {offsets = [0, 0], sizes = [1, 64], strides = [1, 1]} : vector<9x64xf32> to vector<1x64xf32>
    %67 = vector.broadcast %65 : vector<42x1xf32> to vector<42x64xf32>
    %68 = vector.broadcast %66 : vector<1x64xf32> to vector<42x64xf32>
    %69 = arith.mulf %67, %68 : vector<42x64xf32>
    %70 = arith.addf %64, %69 : vector<42x64xf32>
    %71 = vector.extract_strided_slice %1 {offsets = [1, 0], sizes = [42, 1], strides = [1, 1]} : vector<56x1xf32> to vector<42x1xf32>
    %72 = vector.extract_strided_slice %8 {offsets = [1, 0], sizes = [1, 64], strides = [1, 1]} : vector<9x64xf32> to vector<1x64xf32>
    %73 = vector.broadcast %71 : vector<42x1xf32> to vector<42x64xf32>
    %74 = vector.broadcast %72 : vector<1x64xf32> to vector<42x64xf32>
    %75 = arith.mulf %73, %74 : vector<42x64xf32>
    %76 = arith.addf %70, %75 : vector<42x64xf32>
    %77 = vector.extract_strided_slice %3 {offsets = [1, 0], sizes = [42, 1], strides = [1, 1]} : vector<56x1xf32> to vector<42x1xf32>
    %78 = vector.extract_strided_slice %8 {offsets = [2, 0], sizes = [1, 64], strides = [1, 1]} : vector<9x64xf32> to vector<1x64xf32>
    %79 = vector.broadcast %77 : vector<42x1xf32> to vector<42x64xf32>
    %80 = vector.broadcast %78 : vector<1x64xf32> to vector<42x64xf32>
    %81 = arith.mulf %79, %80 : vector<42x64xf32>
    %82 = arith.addf %76, %81 : vector<42x64xf32>
    %83 = vector.extract_strided_slice %7 {offsets = [0, 0], sizes = [42, 1], strides = [1, 1]} : vector<56x1xf32> to vector<42x1xf32>
    %84 = vector.extract_strided_slice %8 {offsets = [3, 0], sizes = [1, 64], strides = [1, 1]} : vector<9x64xf32> to vector<1x64xf32>
    %85 = vector.broadcast %83 : vector<42x1xf32> to vector<42x64xf32>
    %86 = vector.broadcast %84 : vector<1x64xf32> to vector<42x64xf32>
    %87 = arith.mulf %85, %86 : vector<42x64xf32>
    %88 = arith.addf %82, %87 : vector<42x64xf32>
    %89 = vector.extract_strided_slice %5 {offsets = [1, 0], sizes = [42, 1], strides = [1, 1]} : vector<56x1xf32> to vector<42x1xf32>
    %90 = vector.extract_strided_slice %8 {offsets = [4, 0], sizes = [1, 64], strides = [1, 1]} : vector<9x64xf32> to vector<1x64xf32>
    %91 = vector.broadcast %89 : vector<42x1xf32> to vector<42x64xf32>
    %92 = vector.broadcast %90 : vector<1x64xf32> to vector<42x64xf32>
    %93 = arith.mulf %91, %92 : vector<42x64xf32>
    %94 = arith.addf %88, %93 : vector<42x64xf32>
    %95 = vector.extract_strided_slice %7 {offsets = [1, 0], sizes = [42, 1], strides = [1, 1]} : vector<56x1xf32> to vector<42x1xf32>
    %96 = vector.extract_strided_slice %8 {offsets = [5, 0], sizes = [1, 64], strides = [1, 1]} : vector<9x64xf32> to vector<1x64xf32>
    %97 = vector.broadcast %95 : vector<42x1xf32> to vector<42x64xf32>
    %98 = vector.broadcast %96 : vector<1x64xf32> to vector<42x64xf32>
    %99 = arith.mulf %97, %98 : vector<42x64xf32>
    %100 = arith.addf %94, %99 : vector<42x64xf32>
    %101 = vector.extract_strided_slice %3 {offsets = [7, 0], sizes = [42, 1], strides = [1, 1]} : vector<56x1xf32> to vector<42x1xf32>
    %102 = vector.extract_strided_slice %8 {offsets = [6, 0], sizes = [1, 64], strides = [1, 1]} : vector<9x64xf32> to vector<1x64xf32>
    %103 = vector.broadcast %101 : vector<42x1xf32> to vector<42x64xf32>
    %104 = vector.broadcast %102 : vector<1x64xf32> to vector<42x64xf32>
    %105 = arith.mulf %103, %104 : vector<42x64xf32>
    %106 = arith.addf %100, %105 : vector<42x64xf32>
    %107 = vector.extract_strided_slice %1 {offsets = [8, 0], sizes = [42, 1], strides = [1, 1]} : vector<56x1xf32> to vector<42x1xf32>
    %108 = vector.extract_strided_slice %8 {offsets = [7, 0], sizes = [1, 64], strides = [1, 1]} : vector<9x64xf32> to vector<1x64xf32>
    %109 = vector.broadcast %107 : vector<42x1xf32> to vector<42x64xf32>
    %110 = vector.broadcast %108 : vector<1x64xf32> to vector<42x64xf32>
    %111 = arith.mulf %109, %110 : vector<42x64xf32>
    %112 = arith.addf %106, %111 : vector<42x64xf32>
    %113 = vector.extract_strided_slice %3 {offsets = [8, 0], sizes = [42, 1], strides = [1, 1]} : vector<56x1xf32> to vector<42x1xf32>
    %114 = vector.extract_strided_slice %8 {offsets = [8, 0], sizes = [1, 64], strides = [1, 1]} : vector<9x64xf32> to vector<1x64xf32>
    %115 = vector.broadcast %113 : vector<42x1xf32> to vector<42x64xf32>
    %116 = vector.broadcast %114 : vector<1x64xf32> to vector<42x64xf32>
    %117 = arith.mulf %115, %116 : vector<42x64xf32>
    %118 = arith.addf %112, %117 : vector<42x64xf32>
    %119 = arith.maximumf %63, %118 : vector<42x64xf32>
    %cst_11 = arith.constant 0.000000e+00 : f32
    %120 = vector.broadcast %cst_11 : f32 to vector<42x64xf32>
    %121 = vector.extract_strided_slice %5 {offsets = [0, 0], sizes = [42, 1], strides = [1, 1]} : vector<56x1xf32> to vector<42x1xf32>
    %122 = vector.extract_strided_slice %8 {offsets = [0, 0], sizes = [1, 64], strides = [1, 1]} : vector<9x64xf32> to vector<1x64xf32>
    %123 = vector.broadcast %121 : vector<42x1xf32> to vector<42x64xf32>
    %124 = vector.broadcast %122 : vector<1x64xf32> to vector<42x64xf32>
    %125 = arith.mulf %123, %124 : vector<42x64xf32>
    %126 = arith.addf %120, %125 : vector<42x64xf32>
    %127 = vector.extract_strided_slice %7 {offsets = [0, 0], sizes = [42, 1], strides = [1, 1]} : vector<56x1xf32> to vector<42x1xf32>
    %128 = vector.extract_strided_slice %8 {offsets = [1, 0], sizes = [1, 64], strides = [1, 1]} : vector<9x64xf32> to vector<1x64xf32>
    %129 = vector.broadcast %127 : vector<42x1xf32> to vector<42x64xf32>
    %130 = vector.broadcast %128 : vector<1x64xf32> to vector<42x64xf32>
    %131 = arith.mulf %129, %130 : vector<42x64xf32>
    %132 = arith.addf %126, %131 : vector<42x64xf32>
    %133 = vector.extract_strided_slice %5 {offsets = [1, 0], sizes = [42, 1], strides = [1, 1]} : vector<56x1xf32> to vector<42x1xf32>
    %134 = vector.extract_strided_slice %8 {offsets = [2, 0], sizes = [1, 64], strides = [1, 1]} : vector<9x64xf32> to vector<1x64xf32>
    %135 = vector.broadcast %133 : vector<42x1xf32> to vector<42x64xf32>
    %136 = vector.broadcast %134 : vector<1x64xf32> to vector<42x64xf32>
    %137 = arith.mulf %135, %136 : vector<42x64xf32>
    %138 = arith.addf %132, %137 : vector<42x64xf32>
    %139 = vector.extract_strided_slice %1 {offsets = [7, 0], sizes = [42, 1], strides = [1, 1]} : vector<56x1xf32> to vector<42x1xf32>
    %140 = vector.extract_strided_slice %8 {offsets = [3, 0], sizes = [1, 64], strides = [1, 1]} : vector<9x64xf32> to vector<1x64xf32>
    %141 = vector.broadcast %139 : vector<42x1xf32> to vector<42x64xf32>
    %142 = vector.broadcast %140 : vector<1x64xf32> to vector<42x64xf32>
    %143 = arith.mulf %141, %142 : vector<42x64xf32>
    %144 = arith.addf %138, %143 : vector<42x64xf32>
    %145 = vector.extract_strided_slice %3 {offsets = [7, 0], sizes = [42, 1], strides = [1, 1]} : vector<56x1xf32> to vector<42x1xf32>
    %146 = vector.extract_strided_slice %8 {offsets = [4, 0], sizes = [1, 64], strides = [1, 1]} : vector<9x64xf32> to vector<1x64xf32>
    %147 = vector.broadcast %145 : vector<42x1xf32> to vector<42x64xf32>
    %148 = vector.broadcast %146 : vector<1x64xf32> to vector<42x64xf32>
    %149 = arith.mulf %147, %148 : vector<42x64xf32>
    %150 = arith.addf %144, %149 : vector<42x64xf32>
    %151 = vector.extract_strided_slice %1 {offsets = [8, 0], sizes = [42, 1], strides = [1, 1]} : vector<56x1xf32> to vector<42x1xf32>
    %152 = vector.extract_strided_slice %8 {offsets = [5, 0], sizes = [1, 64], strides = [1, 1]} : vector<9x64xf32> to vector<1x64xf32>
    %153 = vector.broadcast %151 : vector<42x1xf32> to vector<42x64xf32>
    %154 = vector.broadcast %152 : vector<1x64xf32> to vector<42x64xf32>
    %155 = arith.mulf %153, %154 : vector<42x64xf32>
    %156 = arith.addf %150, %155 : vector<42x64xf32>
    %157 = vector.extract_strided_slice %5 {offsets = [7, 0], sizes = [42, 1], strides = [1, 1]} : vector<56x1xf32> to vector<42x1xf32>
    %158 = vector.extract_strided_slice %8 {offsets = [6, 0], sizes = [1, 64], strides = [1, 1]} : vector<9x64xf32> to vector<1x64xf32>
    %159 = vector.broadcast %157 : vector<42x1xf32> to vector<42x64xf32>
    %160 = vector.broadcast %158 : vector<1x64xf32> to vector<42x64xf32>
    %161 = arith.mulf %159, %160 : vector<42x64xf32>
    %162 = arith.addf %156, %161 : vector<42x64xf32>
    %163 = vector.extract_strided_slice %7 {offsets = [7, 0], sizes = [42, 1], strides = [1, 1]} : vector<56x1xf32> to vector<42x1xf32>
    %164 = vector.extract_strided_slice %8 {offsets = [7, 0], sizes = [1, 64], strides = [1, 1]} : vector<9x64xf32> to vector<1x64xf32>
    %165 = vector.broadcast %163 : vector<42x1xf32> to vector<42x64xf32>
    %166 = vector.broadcast %164 : vector<1x64xf32> to vector<42x64xf32>
    %167 = arith.mulf %165, %166 : vector<42x64xf32>
    %168 = arith.addf %162, %167 : vector<42x64xf32>
    %169 = vector.extract_strided_slice %5 {offsets = [8, 0], sizes = [42, 1], strides = [1, 1]} : vector<56x1xf32> to vector<42x1xf32>
    %170 = vector.extract_strided_slice %8 {offsets = [8, 0], sizes = [1, 64], strides = [1, 1]} : vector<9x64xf32> to vector<1x64xf32>
    %171 = vector.broadcast %169 : vector<42x1xf32> to vector<42x64xf32>
    %172 = vector.broadcast %170 : vector<1x64xf32> to vector<42x64xf32>
    %173 = arith.mulf %171, %172 : vector<42x64xf32>
    %174 = arith.addf %168, %173 : vector<42x64xf32>
    %175 = arith.maximumf %119, %174 : vector<42x64xf32>
    %cst_12 = arith.constant 0.000000e+00 : f32
    %176 = vector.broadcast %cst_12 : f32 to vector<42x64xf32>
    %177 = vector.extract_strided_slice %7 {offsets = [0, 0], sizes = [42, 1], strides = [1, 1]} : vector<56x1xf32> to vector<42x1xf32>
    %178 = vector.extract_strided_slice %8 {offsets = [0, 0], sizes = [1, 64], strides = [1, 1]} : vector<9x64xf32> to vector<1x64xf32>
    %179 = vector.broadcast %177 : vector<42x1xf32> to vector<42x64xf32>
    %180 = vector.broadcast %178 : vector<1x64xf32> to vector<42x64xf32>
    %181 = arith.mulf %179, %180 : vector<42x64xf32>
    %182 = arith.addf %176, %181 : vector<42x64xf32>
    %183 = vector.extract_strided_slice %5 {offsets = [1, 0], sizes = [42, 1], strides = [1, 1]} : vector<56x1xf32> to vector<42x1xf32>
    %184 = vector.extract_strided_slice %8 {offsets = [1, 0], sizes = [1, 64], strides = [1, 1]} : vector<9x64xf32> to vector<1x64xf32>
    %185 = vector.broadcast %183 : vector<42x1xf32> to vector<42x64xf32>
    %186 = vector.broadcast %184 : vector<1x64xf32> to vector<42x64xf32>
    %187 = arith.mulf %185, %186 : vector<42x64xf32>
    %188 = arith.addf %182, %187 : vector<42x64xf32>
    %189 = vector.extract_strided_slice %7 {offsets = [1, 0], sizes = [42, 1], strides = [1, 1]} : vector<56x1xf32> to vector<42x1xf32>
    %190 = vector.extract_strided_slice %8 {offsets = [2, 0], sizes = [1, 64], strides = [1, 1]} : vector<9x64xf32> to vector<1x64xf32>
    %191 = vector.broadcast %189 : vector<42x1xf32> to vector<42x64xf32>
    %192 = vector.broadcast %190 : vector<1x64xf32> to vector<42x64xf32>
    %193 = arith.mulf %191, %192 : vector<42x64xf32>
    %194 = arith.addf %188, %193 : vector<42x64xf32>
    %195 = vector.extract_strided_slice %3 {offsets = [7, 0], sizes = [42, 1], strides = [1, 1]} : vector<56x1xf32> to vector<42x1xf32>
    %196 = vector.extract_strided_slice %8 {offsets = [3, 0], sizes = [1, 64], strides = [1, 1]} : vector<9x64xf32> to vector<1x64xf32>
    %197 = vector.broadcast %195 : vector<42x1xf32> to vector<42x64xf32>
    %198 = vector.broadcast %196 : vector<1x64xf32> to vector<42x64xf32>
    %199 = arith.mulf %197, %198 : vector<42x64xf32>
    %200 = arith.addf %194, %199 : vector<42x64xf32>
    %201 = vector.extract_strided_slice %1 {offsets = [8, 0], sizes = [42, 1], strides = [1, 1]} : vector<56x1xf32> to vector<42x1xf32>
    %202 = vector.extract_strided_slice %8 {offsets = [4, 0], sizes = [1, 64], strides = [1, 1]} : vector<9x64xf32> to vector<1x64xf32>
    %203 = vector.broadcast %201 : vector<42x1xf32> to vector<42x64xf32>
    %204 = vector.broadcast %202 : vector<1x64xf32> to vector<42x64xf32>
    %205 = arith.mulf %203, %204 : vector<42x64xf32>
    %206 = arith.addf %200, %205 : vector<42x64xf32>
    %207 = vector.extract_strided_slice %3 {offsets = [8, 0], sizes = [42, 1], strides = [1, 1]} : vector<56x1xf32> to vector<42x1xf32>
    %208 = vector.extract_strided_slice %8 {offsets = [5, 0], sizes = [1, 64], strides = [1, 1]} : vector<9x64xf32> to vector<1x64xf32>
    %209 = vector.broadcast %207 : vector<42x1xf32> to vector<42x64xf32>
    %210 = vector.broadcast %208 : vector<1x64xf32> to vector<42x64xf32>
    %211 = arith.mulf %209, %210 : vector<42x64xf32>
    %212 = arith.addf %206, %211 : vector<42x64xf32>
    %213 = vector.extract_strided_slice %7 {offsets = [7, 0], sizes = [42, 1], strides = [1, 1]} : vector<56x1xf32> to vector<42x1xf32>
    %214 = vector.extract_strided_slice %8 {offsets = [6, 0], sizes = [1, 64], strides = [1, 1]} : vector<9x64xf32> to vector<1x64xf32>
    %215 = vector.broadcast %213 : vector<42x1xf32> to vector<42x64xf32>
    %216 = vector.broadcast %214 : vector<1x64xf32> to vector<42x64xf32>
    %217 = arith.mulf %215, %216 : vector<42x64xf32>
    %218 = arith.addf %212, %217 : vector<42x64xf32>
    %219 = vector.extract_strided_slice %5 {offsets = [8, 0], sizes = [42, 1], strides = [1, 1]} : vector<56x1xf32> to vector<42x1xf32>
    %220 = vector.extract_strided_slice %8 {offsets = [7, 0], sizes = [1, 64], strides = [1, 1]} : vector<9x64xf32> to vector<1x64xf32>
    %221 = vector.broadcast %219 : vector<42x1xf32> to vector<42x64xf32>
    %222 = vector.broadcast %220 : vector<1x64xf32> to vector<42x64xf32>
    %223 = arith.mulf %221, %222 : vector<42x64xf32>
    %224 = arith.addf %218, %223 : vector<42x64xf32>
    %225 = vector.extract_strided_slice %7 {offsets = [8, 0], sizes = [42, 1], strides = [1, 1]} : vector<56x1xf32> to vector<42x1xf32>
    %226 = vector.extract_strided_slice %8 {offsets = [8, 0], sizes = [1, 64], strides = [1, 1]} : vector<9x64xf32> to vector<1x64xf32>
    %227 = vector.broadcast %225 : vector<42x1xf32> to vector<42x64xf32>
    %228 = vector.broadcast %226 : vector<1x64xf32> to vector<42x64xf32>
    %229 = arith.mulf %227, %228 : vector<42x64xf32>
    %230 = arith.addf %224, %229 : vector<42x64xf32>
    %231 = arith.maximumf %175, %230 : vector<42x64xf32>
    %c0_13 = arith.constant 0 : index
    %c0_14 = arith.constant 0 : index
    %232 = vector.load %arg3[%c0_13, %c0_14] : memref<1x64xf32, #tpu.memory_space<vmem>>, vector<1x64xf32>
    %233 = vector.broadcast %232 : vector<1x64xf32> to vector<42x64xf32>
    %234 = arith.addf %231, %233 : vector<42x64xf32>
    %cst_15 = arith.constant 0.000000e+00 : f32
    %235 = vector.broadcast %cst_15 : f32 to vector<42x64xf32>
    %236 = arith.maximumf %234, %235 : vector<42x64xf32>
    %cst_16 = arith.constant 0.000000e+00 : f32
    %237 = vector.broadcast %cst_16 : f32 to vector<25x32xf32>
    %238 = vector.extract_strided_slice %236 {offsets = [0, 0], sizes = [25, 64], strides = [1, 1]} : vector<42x64xf32> to vector<25x64xf32>
    %c0_17 = arith.constant 0 : index
    %c0_18 = arith.constant 0 : index
    %c0_19 = arith.constant 0 : index
    %239 = vector.load %arg4[%c0_17, %c0_18, %c0_19] : memref<9x64x32xf32, #tpu.memory_space<vmem>>, vector<1x64x32xf32>
    %240 = vector.shape_cast %239 : vector<1x64x32xf32> to vector<64x32xf32>
    %cst_20 = arith.constant dense<0.000000e+00> : vector<25x32xf32>
    %241 = tpu.matmul %238, %240, %cst_20 {dimension_numbers = #tpu.dot_dimension_numbers<[1], [0], [0], [1], [0, 0, 1, 1], [], []>} : vector<25x64xf32>, vector<64x32xf32>, vector<25x32xf32> -> vector<25x32xf32>
    %242 = arith.addf %237, %241 : vector<25x32xf32>
    %243 = vector.extract_strided_slice %236 {offsets = [1, 0], sizes = [25, 64], strides = [1, 1]} : vector<42x64xf32> to vector<25x64xf32>
    %c1_21 = arith.constant 1 : index
    %c0_22 = arith.constant 0 : index
    %c0_23 = arith.constant 0 : index
    %244 = vector.load %arg4[%c1_21, %c0_22, %c0_23] : memref<9x64x32xf32, #tpu.memory_space<vmem>>, vector<1x64x32xf32>
    %245 = vector.shape_cast %244 : vector<1x64x32xf32> to vector<64x32xf32>
    %cst_24 = arith.constant dense<0.000000e+00> : vector<25x32xf32>
    %246 = tpu.matmul %243, %245, %cst_24 {dimension_numbers = #tpu.dot_dimension_numbers<[1], [0], [0], [1], [0, 0, 1, 1], [], []>} : vector<25x64xf32>, vector<64x32xf32>, vector<25x32xf32> -> vector<25x32xf32>
    %247 = arith.addf %242, %246 : vector<25x32xf32>
    %248 = vector.extract_strided_slice %236 {offsets = [2, 0], sizes = [25, 64], strides = [1, 1]} : vector<42x64xf32> to vector<25x64xf32>
    %c2_25 = arith.constant 2 : index
    %c0_26 = arith.constant 0 : index
    %c0_27 = arith.constant 0 : index
    %249 = vector.load %arg4[%c2_25, %c0_26, %c0_27] : memref<9x64x32xf32, #tpu.memory_space<vmem>>, vector<1x64x32xf32>
    %250 = vector.shape_cast %249 : vector<1x64x32xf32> to vector<64x32xf32>
    %cst_28 = arith.constant dense<0.000000e+00> : vector<25x32xf32>
    %251 = tpu.matmul %248, %250, %cst_28 {dimension_numbers = #tpu.dot_dimension_numbers<[1], [0], [0], [1], [0, 0, 1, 1], [], []>} : vector<25x64xf32>, vector<64x32xf32>, vector<25x32xf32> -> vector<25x32xf32>
    %252 = arith.addf %247, %251 : vector<25x32xf32>
    %253 = vector.extract_strided_slice %236 {offsets = [7, 0], sizes = [25, 64], strides = [1, 1]} : vector<42x64xf32> to vector<25x64xf32>
    %c3_29 = arith.constant 3 : index
    %c0_30 = arith.constant 0 : index
    %c0_31 = arith.constant 0 : index
    %254 = vector.load %arg4[%c3_29, %c0_30, %c0_31] : memref<9x64x32xf32, #tpu.memory_space<vmem>>, vector<1x64x32xf32>
    %255 = vector.shape_cast %254 : vector<1x64x32xf32> to vector<64x32xf32>
    %cst_32 = arith.constant dense<0.000000e+00> : vector<25x32xf32>
    %256 = tpu.matmul %253, %255, %cst_32 {dimension_numbers = #tpu.dot_dimension_numbers<[1], [0], [0], [1], [0, 0, 1, 1], [], []>} : vector<25x64xf32>, vector<64x32xf32>, vector<25x32xf32> -> vector<25x32xf32>
    %257 = arith.addf %252, %256 : vector<25x32xf32>
    %258 = vector.extract_strided_slice %236 {offsets = [8, 0], sizes = [25, 64], strides = [1, 1]} : vector<42x64xf32> to vector<25x64xf32>
    %c4 = arith.constant 4 : index
    %c0_33 = arith.constant 0 : index
    %c0_34 = arith.constant 0 : index
    %259 = vector.load %arg4[%c4, %c0_33, %c0_34] : memref<9x64x32xf32, #tpu.memory_space<vmem>>, vector<1x64x32xf32>
    %260 = vector.shape_cast %259 : vector<1x64x32xf32> to vector<64x32xf32>
    %cst_35 = arith.constant dense<0.000000e+00> : vector<25x32xf32>
    %261 = tpu.matmul %258, %260, %cst_35 {dimension_numbers = #tpu.dot_dimension_numbers<[1], [0], [0], [1], [0, 0, 1, 1], [], []>} : vector<25x64xf32>, vector<64x32xf32>, vector<25x32xf32> -> vector<25x32xf32>
    %262 = arith.addf %257, %261 : vector<25x32xf32>
    %263 = vector.extract_strided_slice %236 {offsets = [9, 0], sizes = [25, 64], strides = [1, 1]} : vector<42x64xf32> to vector<25x64xf32>
    %c5 = arith.constant 5 : index
    %c0_36 = arith.constant 0 : index
    %c0_37 = arith.constant 0 : index
    %264 = vector.load %arg4[%c5, %c0_36, %c0_37] : memref<9x64x32xf32, #tpu.memory_space<vmem>>, vector<1x64x32xf32>
    %265 = vector.shape_cast %264 : vector<1x64x32xf32> to vector<64x32xf32>
    %cst_38 = arith.constant dense<0.000000e+00> : vector<25x32xf32>
    %266 = tpu.matmul %263, %265, %cst_38 {dimension_numbers = #tpu.dot_dimension_numbers<[1], [0], [0], [1], [0, 0, 1, 1], [], []>} : vector<25x64xf32>, vector<64x32xf32>, vector<25x32xf32> -> vector<25x32xf32>
    %267 = arith.addf %262, %266 : vector<25x32xf32>
    %268 = vector.extract_strided_slice %236 {offsets = [14, 0], sizes = [25, 64], strides = [1, 1]} : vector<42x64xf32> to vector<25x64xf32>
    %c6 = arith.constant 6 : index
    %c0_39 = arith.constant 0 : index
    %c0_40 = arith.constant 0 : index
    %269 = vector.load %arg4[%c6, %c0_39, %c0_40] : memref<9x64x32xf32, #tpu.memory_space<vmem>>, vector<1x64x32xf32>
    %270 = vector.shape_cast %269 : vector<1x64x32xf32> to vector<64x32xf32>
    %cst_41 = arith.constant dense<0.000000e+00> : vector<25x32xf32>
    %271 = tpu.matmul %268, %270, %cst_41 {dimension_numbers = #tpu.dot_dimension_numbers<[1], [0], [0], [1], [0, 0, 1, 1], [], []>} : vector<25x64xf32>, vector<64x32xf32>, vector<25x32xf32> -> vector<25x32xf32>
    %272 = arith.addf %267, %271 : vector<25x32xf32>
    %273 = vector.extract_strided_slice %236 {offsets = [15, 0], sizes = [25, 64], strides = [1, 1]} : vector<42x64xf32> to vector<25x64xf32>
    %c7 = arith.constant 7 : index
    %c0_42 = arith.constant 0 : index
    %c0_43 = arith.constant 0 : index
    %274 = vector.load %arg4[%c7, %c0_42, %c0_43] : memref<9x64x32xf32, #tpu.memory_space<vmem>>, vector<1x64x32xf32>
    %275 = vector.shape_cast %274 : vector<1x64x32xf32> to vector<64x32xf32>
    %cst_44 = arith.constant dense<0.000000e+00> : vector<25x32xf32>
    %276 = tpu.matmul %273, %275, %cst_44 {dimension_numbers = #tpu.dot_dimension_numbers<[1], [0], [0], [1], [0, 0, 1, 1], [], []>} : vector<25x64xf32>, vector<64x32xf32>, vector<25x32xf32> -> vector<25x32xf32>
    %277 = arith.addf %272, %276 : vector<25x32xf32>
    %278 = vector.extract_strided_slice %236 {offsets = [16, 0], sizes = [25, 64], strides = [1, 1]} : vector<42x64xf32> to vector<25x64xf32>
    %c8 = arith.constant 8 : index
    %c0_45 = arith.constant 0 : index
    %c0_46 = arith.constant 0 : index
    %279 = vector.load %arg4[%c8, %c0_45, %c0_46] : memref<9x64x32xf32, #tpu.memory_space<vmem>>, vector<1x64x32xf32>
    %280 = vector.shape_cast %279 : vector<1x64x32xf32> to vector<64x32xf32>
    %cst_47 = arith.constant dense<0.000000e+00> : vector<25x32xf32>
    %281 = tpu.matmul %278, %280, %cst_47 {dimension_numbers = #tpu.dot_dimension_numbers<[1], [0], [0], [1], [0, 0, 1, 1], [], []>} : vector<25x64xf32>, vector<64x32xf32>, vector<25x32xf32> -> vector<25x32xf32>
    %282 = arith.addf %277, %281 : vector<25x32xf32>
    %c0_48 = arith.constant 0 : index
    %c0_49 = arith.constant 0 : index
    %283 = vector.load %arg5[%c0_48, %c0_49] : memref<1x32xf32, #tpu.memory_space<vmem>>, vector<1x32xf32>
    %284 = vector.broadcast %283 : vector<1x32xf32> to vector<25x32xf32>
    %285 = arith.addf %282, %284 : vector<25x32xf32>
    %cst_50 = arith.constant 0.000000e+00 : f32
    %286 = vector.broadcast %cst_50 : f32 to vector<25x32xf32>
    %287 = arith.maximumf %285, %286 : vector<25x32xf32>
    %c0_51 = arith.constant 0 : index
    %c0_52 = arith.constant 0 : index
    %288 = vector.load %arg7[%c0_51, %c0_52] : memref<1x2xf32, #tpu.memory_space<vmem>>, vector<1x2xf32>
    %289 = vector.extract_strided_slice %287 {offsets = [0, 0], sizes = [1, 32], strides = [1, 1]} : vector<25x32xf32> to vector<1x32xf32>
    %290 = vector.extract_strided_slice %287 {offsets = [1, 0], sizes = [1, 32], strides = [1, 1]} : vector<25x32xf32> to vector<1x32xf32>
    %291 = arith.maximumf %289, %290 : vector<1x32xf32>
    %292 = vector.extract_strided_slice %287 {offsets = [7, 0], sizes = [1, 32], strides = [1, 1]} : vector<25x32xf32> to vector<1x32xf32>
    %293 = vector.extract_strided_slice %287 {offsets = [8, 0], sizes = [1, 32], strides = [1, 1]} : vector<25x32xf32> to vector<1x32xf32>
    %294 = arith.maximumf %292, %293 : vector<1x32xf32>
    %295 = arith.maximumf %291, %294 : vector<1x32xf32>
    %c0_53 = arith.constant 0 : index
    %c0_54 = arith.constant 0 : index
    %c0_55 = arith.constant 0 : index
    %296 = vector.load %arg6[%c0_53, %c0_54, %c0_55] : memref<4x32x2xf32, #tpu.memory_space<vmem>>, vector<1x32x2xf32>
    %297 = vector.shape_cast %296 : vector<1x32x2xf32> to vector<32x2xf32>
    %cst_56 = arith.constant dense<0.000000e+00> : vector<1x2xf32>
    %298 = tpu.matmul %295, %297, %cst_56 {dimension_numbers = #tpu.dot_dimension_numbers<[1], [0], [0], [1], [0, 0, 1, 1], [], []>} : vector<1x32xf32>, vector<32x2xf32>, vector<1x2xf32> -> vector<1x2xf32>
    %299 = arith.addf %288, %298 : vector<1x2xf32>
    %300 = vector.extract_strided_slice %287 {offsets = [2, 0], sizes = [1, 32], strides = [1, 1]} : vector<25x32xf32> to vector<1x32xf32>
    %301 = vector.extract_strided_slice %287 {offsets = [3, 0], sizes = [1, 32], strides = [1, 1]} : vector<25x32xf32> to vector<1x32xf32>
    %302 = arith.maximumf %300, %301 : vector<1x32xf32>
    %303 = vector.extract_strided_slice %287 {offsets = [9, 0], sizes = [1, 32], strides = [1, 1]} : vector<25x32xf32> to vector<1x32xf32>
    %304 = vector.extract_strided_slice %287 {offsets = [10, 0], sizes = [1, 32], strides = [1, 1]} : vector<25x32xf32> to vector<1x32xf32>
    %305 = arith.maximumf %303, %304 : vector<1x32xf32>
    %306 = arith.maximumf %302, %305 : vector<1x32xf32>
    %c1_57 = arith.constant 1 : index
    %c0_58 = arith.constant 0 : index
    %c0_59 = arith.constant 0 : index
    %307 = vector.load %arg6[%c1_57, %c0_58, %c0_59] : memref<4x32x2xf32, #tpu.memory_space<vmem>>, vector<1x32x2xf32>
    %308 = vector.shape_cast %307 : vector<1x32x2xf32> to vector<32x2xf32>
    %cst_60 = arith.constant dense<0.000000e+00> : vector<1x2xf32>
    %309 = tpu.matmul %306, %308, %cst_60 {dimension_numbers = #tpu.dot_dimension_numbers<[1], [0], [0], [1], [0, 0, 1, 1], [], []>} : vector<1x32xf32>, vector<32x2xf32>, vector<1x2xf32> -> vector<1x2xf32>
    %310 = arith.addf %299, %309 : vector<1x2xf32>
    %311 = vector.extract_strided_slice %287 {offsets = [14, 0], sizes = [1, 32], strides = [1, 1]} : vector<25x32xf32> to vector<1x32xf32>
    %312 = vector.extract_strided_slice %287 {offsets = [15, 0], sizes = [1, 32], strides = [1, 1]} : vector<25x32xf32> to vector<1x32xf32>
    %313 = arith.maximumf %311, %312 : vector<1x32xf32>
    %314 = vector.extract_strided_slice %287 {offsets = [21, 0], sizes = [1, 32], strides = [1, 1]} : vector<25x32xf32> to vector<1x32xf32>
    %315 = vector.extract_strided_slice %287 {offsets = [22, 0], sizes = [1, 32], strides = [1, 1]} : vector<25x32xf32> to vector<1x32xf32>
    %316 = arith.maximumf %314, %315 : vector<1x32xf32>
    %317 = arith.maximumf %313, %316 : vector<1x32xf32>
    %c2_61 = arith.constant 2 : index
    %c0_62 = arith.constant 0 : index
    %c0_63 = arith.constant 0 : index
    %318 = vector.load %arg6[%c2_61, %c0_62, %c0_63] : memref<4x32x2xf32, #tpu.memory_space<vmem>>, vector<1x32x2xf32>
    %319 = vector.shape_cast %318 : vector<1x32x2xf32> to vector<32x2xf32>
    %cst_64 = arith.constant dense<0.000000e+00> : vector<1x2xf32>
    %320 = tpu.matmul %317, %319, %cst_64 {dimension_numbers = #tpu.dot_dimension_numbers<[1], [0], [0], [1], [0, 0, 1, 1], [], []>} : vector<1x32xf32>, vector<32x2xf32>, vector<1x2xf32> -> vector<1x2xf32>
    %321 = arith.addf %310, %320 : vector<1x2xf32>
    %322 = vector.extract_strided_slice %287 {offsets = [16, 0], sizes = [1, 32], strides = [1, 1]} : vector<25x32xf32> to vector<1x32xf32>
    %323 = vector.extract_strided_slice %287 {offsets = [17, 0], sizes = [1, 32], strides = [1, 1]} : vector<25x32xf32> to vector<1x32xf32>
    %324 = arith.maximumf %322, %323 : vector<1x32xf32>
    %325 = vector.extract_strided_slice %287 {offsets = [23, 0], sizes = [1, 32], strides = [1, 1]} : vector<25x32xf32> to vector<1x32xf32>
    %326 = vector.extract_strided_slice %287 {offsets = [24, 0], sizes = [1, 32], strides = [1, 1]} : vector<25x32xf32> to vector<1x32xf32>
    %327 = arith.maximumf %325, %326 : vector<1x32xf32>
    %328 = arith.maximumf %324, %327 : vector<1x32xf32>
    %c3_65 = arith.constant 3 : index
    %c0_66 = arith.constant 0 : index
    %c0_67 = arith.constant 0 : index
    %329 = vector.load %arg6[%c3_65, %c0_66, %c0_67] : memref<4x32x2xf32, #tpu.memory_space<vmem>>, vector<1x32x2xf32>
    %330 = vector.shape_cast %329 : vector<1x32x2xf32> to vector<32x2xf32>
    %cst_68 = arith.constant dense<0.000000e+00> : vector<1x2xf32>
    %331 = tpu.matmul %328, %330, %cst_68 {dimension_numbers = #tpu.dot_dimension_numbers<[1], [0], [0], [1], [0, 0, 1, 1], [], []>} : vector<1x32xf32>, vector<32x2xf32>, vector<1x2xf32> -> vector<1x2xf32>
    %332 = arith.addf %321, %331 : vector<1x2xf32>
    %cst_69 = arith.constant dense<0xFF800000> : vector<1xf32>
    %333 = vector.multi_reduction <maximumf>, %332, %cst_69 [1] : vector<1x2xf32> to vector<1xf32>
    %334 = vector.shape_cast %333 : vector<1xf32> to vector<1x1xf32>
    %335 = vector.broadcast %334 : vector<1x1xf32> to vector<1x2xf32>
    %336 = arith.subf %332, %335 : vector<1x2xf32>
    %337 = math.exp %336 : vector<1x2xf32>
    %cst_70 = arith.constant dense<0.000000e+00> : vector<1xf32>
    %338 = vector.multi_reduction <add>, %337, %cst_70 [1] : vector<1x2xf32> to vector<1xf32>
    %339 = vector.shape_cast %338 : vector<1xf32> to vector<1x1xf32>
    %340 = math.log %339 : vector<1x1xf32>
    %341 = arith.addf %334, %340 : vector<1x1xf32>
    %342 = vector.broadcast %341 : vector<1x1xf32> to vector<1x2xf32>
    %343 = arith.subf %332, %342 : vector<1x2xf32>
    %c0_71 = arith.constant 0 : index
    %c0_72 = arith.constant 0 : index
    %c0_73 = arith.constant 0 : index
    %344 = vector.load %arg8[%c0_71, %c0_72, %c0_73] : memref<1x1x2xf32, #tpu.memory_space<vmem>>, vector<1x1x2xf32>
    %345 = vector.shape_cast %344 : vector<1x1x2xf32> to vector<1x2xf32>
    %346 = vector.shape_cast %343 : vector<1x2xf32> to vector<1x1x2xf32>
    tpu.vector_store %arg8[%c0_71, %c0_72, %c0_73], %346 {strides = array<i32>} : memref<1x1x2xf32, #tpu.memory_space<vmem>>, vector<1x1x2xf32>,
    return
  }
  func.func @transform_0(%arg0: i32) -> (i32, i32, i32) {
    %c0_i32 = arith.constant 0 : i32
    %c0_i32_0 = arith.constant 0 : i32
    %c0_i32_1 = arith.constant 0 : i32
    return %arg0, %c0_i32, %c0_i32_0 : i32, i32, i32
  }
  func.func @transform_1(%arg0: i32) -> (i32, i32) {
    %c0_i32 = arith.constant 0 : i32
    %c0_i32_0 = arith.constant 0 : i32
    %c0_i32_1 = arith.constant 0 : i32
    return %c0_i32, %c0_i32_0 : i32, i32
  }
  func.func @transform_2(%arg0: i32) -> (i32, i32) {
    %c0_i32 = arith.constant 0 : i32
    %c0_i32_0 = arith.constant 0 : i32
    %c0_i32_1 = arith.constant 0 : i32
    return %c0_i32, %c0_i32_0 : i32, i32
  }
  func.func @transform_3(%arg0: i32) -> (i32, i32, i32) {
    %c0_i32 = arith.constant 0 : i32
    %c0_i32_0 = arith.constant 0 : i32
    %c0_i32_1 = arith.constant 0 : i32
    %c0_i32_2 = arith.constant 0 : i32
    return %c0_i32, %c0_i32_0, %c0_i32_1 : i32, i32, i32
  }
  func.func @transform_4(%arg0: i32) -> (i32, i32) {
    %c0_i32 = arith.constant 0 : i32
    %c0_i32_0 = arith.constant 0 : i32
    %c0_i32_1 = arith.constant 0 : i32
    return %c0_i32, %c0_i32_0 : i32, i32
  }
  func.func @transform_5(%arg0: i32) -> (i32, i32, i32) {
    %c0_i32 = arith.constant 0 : i32
    %c0_i32_0 = arith.constant 0 : i32
    %c0_i32_1 = arith.constant 0 : i32
    %c0_i32_2 = arith.constant 0 : i32
    return %c0_i32, %c0_i32_0, %c0_i32_1 : i32, i32, i32
  }
  func.func @transform_6(%arg0: i32) -> (i32, i32) {
    %c0_i32 = arith.constant 0 : i32
    %c0_i32_0 = arith.constant 0 : i32
    %c0_i32_1 = arith.constant 0 : i32
    return %c0_i32, %c0_i32_0 : i32, i32
  }
  func.func @transform_7(%arg0: i32) -> (i32, i32, i32) {
    %c0_i32 = arith.constant 0 : i32
    %c0_i32_0 = arith.constant 0 : i32
    %c0_i32_1 = arith.constant 0 : i32
    return %arg0, %c0_i32, %c0_i32_0 : i32, i32, i32
  }
}

</mosaic_0001>

<llo_original>
// kernel: forward.1
$region0: #{forward.1}
  #allocation0 [shape = 'u32[]', space=smem, size = 0x4, offset = 0x4, fixed_abs, tag = 'smem constant byte address 0x4 - core index']
  #allocation1 [shape = 'u32[144,128]{1,0:T(1,128)}', space=vmem, size = 0x12000, scoped, tag = 'internal scratch']
  %s0 = inlined_call_operand.vmem [shape: f32[8,56,1], index: 0, kind: input, shape index: {}]
  %s1 = inlined_call_operand.vmem [shape: f32[9,64], index: 1, kind: input, shape index: {}]
  %s2 = inlined_call_operand.vmem [shape: f32[1,64], index: 2, kind: input, shape index: {}]
  %s3 = inlined_call_operand.vmem [shape: f32[9,64,32], index: 3, kind: input, shape index: {}]
  %s4 = inlined_call_operand.vmem [shape: f32[1,32], index: 4, kind: input, shape index: {}]
  %s5 = inlined_call_operand.vmem [shape: f32[4,32,2], index: 5, kind: input, shape index: {}]
  %s6 = inlined_call_operand.vmem [shape: f32[1,2], index: 6, kind: input, shape index: {}]
  %s7 = inlined_call_operand.hbm [shape: f32[2,1,2], index: 7, kind: output, shape index: {}]
  %s8 = sld [smem:[#allocation0]]
  $region61: #{forward.1} parent=0
    _
  %s10 = ssub.s32 1, %s8
  %s11 = scalar_select 0, %s10, %s8
  $region1: #{forward.1} parent=0
    #allocation2 [shape = 'u8[1024]{0}', space=vmem, size = 0x400, scoped, tag = 'output window, operand 0']
    #allocation3 [shape = 's32[2]{0}', space=sflag, size = 0x8, scoped, tag = 'scoped memory for forward.1']
    %12 = vsyncpa [#allocation3], 0
    %s13 = scalar_lea.sflag [#allocation3], 1
    %14 = vsyncpa %s13, 0
    loop: start=0, step=1, limit=4
    $region2: #{forward.1} parent=1 // loop_pre_header
      _
    $region3: #{forward.1} parent=1 // loop_header
      %s16 = sphi 0, %s20
      %p17 = scmp.ge.s32.totalorder %s16, 4
      %s26 = sphi 0, %s28
      %s29 = sphi 0, %s26
      %s30 = sphi 0, %s29
      %s46 = sphi 0, %s30
      %s50 = sphi 0, %s50
      %s52 = sphi 0, %s50
      %s53 = sphi 0, %s52
      %s67 = sphi 0, %s53
      %s71 = sphi 0, %s71
      %s73 = sphi 0, %s71
      %s74 = sphi 0, %s73
      %s88 = sphi 0, %s74
      %s92 = sphi 0, %s92
      %s94 = sphi 0, %s92
      %s95 = sphi 0, %s94
      %s109 = sphi 0, %s95
      %s113 = sphi 0, %s113
      %s115 = sphi 0, %s113
      %s116 = sphi 0, %s115
      %s130 = sphi 0, %s116
      %s134 = sphi 0, %s134
      %s136 = sphi 0, %s134
      %s137 = sphi 0, %s136
      %s151 = sphi 0, %s137
      %s155 = sphi 0, %s155
      %s157 = sphi 0, %s155
      %s158 = sphi 0, %s157
      %s172 = sphi 0, %s158
      %s178 = sphi 0, %s180
      %s181 = sphi 0, %s178
      %s182 = sphi 0, %s181
      %s198 = sphi 0, %s182
    $region4: #{forward.1} parent=1 // loop_header_branch
      %19 = sbr.rel (%p17) target = $region8
    $region5: #{forward.1} parent=1 // loop_body
      %s21 = ssub.s32 %s16, 1
      %s22 = ssub.s32 %s16, 2
      %s23 = sadd.s32 %s16, 1
      %s24 = ssub.s32 %s16, %s23
      %p25 = scmp.eq.s32.totalorder %s24, 0
      %s27 = sadd.s32 %s26, 1
      %s28 = scalar_select %p25, %s26, %s27
      %p31 = pneg %p25
      %p32 = scmp.eq.s32.totalorder %s16, 1
      %p33 = por %p31, %p32
      %p34 = scmp.ne.s32.totalorder %s26, %s29
      %p35 = scmp.eq.s32.totalorder %s16, 0
      %p36 = por %p34, %p35
      %p37 = scmp.ne.s32.totalorder %s26, %s29
      %p38 = scmp.eq.s32.totalorder %s21, 1
      %p39 = por %p37, %p38
      %p40 = scmp.ne.s32.totalorder %s29, %s30
      %p41 = scmp.eq.s32.totalorder %s21, 0
      %p42 = por %p40, %p41
      %p43 = scmp.ne.s32.totalorder %s29, %s30
      %p44 = scmp.eq.s32.totalorder %s22, 1
      %p45 = por %p43, %p44
      %p47 = scmp.ne.s32.totalorder %s30, %s46
      %p48 = scmp.eq.s32.totalorder %s22, 0
      %p49 = por %p47, %p48
      %s51 = sadd.s32 %s50, 1
      %p54 = scmp.eq.s32.totalorder %s16, 1
      %p55 = scmp.ne.s32.totalorder %s50, %s52
      %p56 = scmp.eq.s32.totalorder %s16, 0
      %p57 = por %p55, %p56
      %p58 = scmp.ne.s32.totalorder %s50, %s52
      %p59 = scmp.eq.s32.totalorder %s21, 1
      %p60 = por %p58, %p59
      %p61 = scmp.ne.s32.totalorder %s52, %s53
      %p62 = scmp.eq.s32.totalorder %s21, 0
      %p63 = por %p61, %p62
      %p64 = scmp.ne.s32.totalorder %s52, %s53
      %p65 = scmp.eq.s32.totalorder %s22, 1
      %p66 = por %p64, %p65
      %p68 = scmp.ne.s32.totalorder %s53, %s67
      %p69 = scmp.eq.s32.totalorder %s22, 0
      %p70 = por %p68, %p69
      %s72 = sadd.s32 %s71, 1
      %p75 = scmp.eq.s32.totalorder %s16, 1
      %p76 = scmp.ne.s32.totalorder %s71, %s73
      %p77 = scmp.eq.s32.totalorder %s16, 0
      %p78 = por %p76, %p77
      %p79 = scmp.ne.s32.totalorder %s71, %s73
      %p80 = scmp.eq.s32.totalorder %s21, 1
      %p81 = por %p79, %p80
      %p82 = scmp.ne.s32.totalorder %s73, %s74
      %p83 = scmp.eq.s32.totalorder %s21, 0
      %p84 = por %p82, %p83
      %p85 = scmp.ne.s32.totalorder %s73, %s74
      %p86 = scmp.eq.s32.totalorder %s22, 1
      %p87 = por %p85, %p86
      %p89 = scmp.ne.s32.totalorder %s74, %s88
      %p90 = scmp.eq.s32.totalorder %s22, 0
      %p91 = por %p89, %p90
      %s93 = sadd.s32 %s92, 1
      %p96 = scmp.eq.s32.totalorder %s16, 1
      %p97 = scmp.ne.s32.totalorder %s92, %s94
      %p98 = scmp.eq.s32.totalorder %s16, 0
      %p99 = por %p97, %p98
      %p100 = scmp.ne.s32.totalorder %s92, %s94
      %p101 = scmp.eq.s32.totalorder %s21, 1
      %p102 = por %p100, %p101
      %p103 = scmp.ne.s32.totalorder %s94, %s95
      %p104 = scmp.eq.s32.totalorder %s21, 0
      %p105 = por %p103, %p104
      %p106 = scmp.ne.s32.totalorder %s94, %s95
      %p107 = scmp.eq.s32.totalorder %s22, 1
      %p108 = por %p106, %p107
      %p110 = scmp.ne.s32.totalorder %s95, %s109
      %p111 = scmp.eq.s32.totalorder %s22, 0
      %p112 = por %p110, %p111
      %s114 = sadd.s32 %s113, 1
      %p117 = scmp.eq.s32.totalorder %s16, 1
      %p118 = scmp.ne.s32.totalorder %s113, %s115
      %p119 = scmp.eq.s32.totalorder %s16, 0
      %p120 = por %p118, %p119
      %p121 = scmp.ne.s32.totalorder %s113, %s115
      %p122 = scmp.eq.s32.totalorder %s21, 1
      %p123 = por %p121, %p122
      %p124 = scmp.ne.s32.totalorder %s115, %s116
      %p125 = scmp.eq.s32.totalorder %s21, 0
      %p126 = por %p124, %p125
      %p127 = scmp.ne.s32.totalorder %s115, %s116
      %p128 = scmp.eq.s32.totalorder %s22, 1
      %p129 = por %p127, %p128
      %p131 = scmp.ne.s32.totalorder %s116, %s130
      %p132 = scmp.eq.s32.totalorder %s22, 0
      %p133 = por %p131, %p132
      %s135 = sadd.s32 %s134, 1
      %p138 = scmp.eq.s32.totalorder %s16, 1
      %p139 = scmp.ne.s32.totalorder %s134, %s136
      %p140 = scmp.eq.s32.totalorder %s16, 0
      %p141 = por %p139, %p140
      %p142 = scmp.ne.s32.totalorder %s134, %s136
      %p143 = scmp.eq.s32.totalorder %s21, 1
      %p144 = por %p142, %p143
      %p145 = scmp.ne.s32.totalorder %s136, %s137
      %p146 = scmp.eq.s32.totalorder %s21, 0
      %p147 = por %p145, %p146
      %p148 = scmp.ne.s32.totalorder %s136, %s137
      %p149 = scmp.eq.s32.totalorder %s22, 1
      %p150 = por %p148, %p149
      %p152 = scmp.ne.s32.totalorder %s137, %s151
      %p153 = scmp.eq.s32.totalorder %s22, 0
      %p154 = por %p152, %p153
      %s156 = sadd.s32 %s155, 1
      %p159 = scmp.eq.s32.totalorder %s16, 1
      %p160 = scmp.ne.s32.totalorder %s155, %s157
      %p161 = scmp.eq.s32.totalorder %s16, 0
      %p162 = por %p160, %p161
      %p163 = scmp.ne.s32.totalorder %s155, %s157
      %p164 = scmp.eq.s32.totalorder %s21, 1
      %p165 = por %p163, %p164
      %p166 = scmp.ne.s32.totalorder %s157, %s158
      %p167 = scmp.eq.s32.totalorder %s21, 0
      %p168 = por %p166, %p167
      %p169 = scmp.ne.s32.totalorder %s157, %s158
      %p170 = scmp.eq.s32.totalorder %s22, 1
      %p171 = por %p169, %p170
      %p173 = scmp.ne.s32.totalorder %s158, %s172
      %p174 = scmp.eq.s32.totalorder %s22, 0
      %p175 = por %p173, %p174
      %s176 = ssub.s32 %s16, %s23
      %p177 = scmp.eq.s32.totalorder %s176, 0
      %s179 = sadd.s32 %s178, 1
      %s180 = scalar_select %p177, %s178, %s179
      %p183 = pneg %p177
      %p184 = scmp.eq.s32.totalorder %s16, 1
      %p185 = por %p183, %p184
      %p186 = scmp.ne.s32.totalorder %s178, %s181
      %p187 = scmp.eq.s32.totalorder %s16, 0
      %p188 = por %p186, %p187
      %p189 = scmp.ne.s32.totalorder %s178, %s181
      %p190 = scmp.eq.s32.totalorder %s21, 1
      %p191 = por %p189, %p190
      %p192 = scmp.ne.s32.totalorder %s181, %s182
      %p193 = scmp.eq.s32.totalorder %s21, 0
      %p194 = por %p192, %p193
      %p195 = scmp.ne.s32.totalorder %s181, %s182
      %p196 = scmp.eq.s32.totalorder %s22, 1
      %p197 = por %p195, %p196
      %p199 = scmp.ne.s32.totalorder %s182, %s198
      %p200 = scmp.eq.s32.totalorder %s22, 0
      %p201 = por %p199, %p200
      %p202 = scmp.le.s32.totalorder 1, %s16
      %p203 = scmp.lt.s32.totalorder %s16, 3
      %p204 = pnand %p202, %p203
      %p205 = pneg %p204
      // Predicated region
      $region9: #{forward.1} parent=5 // pred_check
        _
      $region10: #{forward.1} parent=5 // pred_check_branch
        %207 = sbr.rel (%p204) target = $region12
      $region11: #{forward.1} parent=5 // pred_region
        %s208 = ssub.s32 %s16, 1
        // Predicated region
        $region13: #{forward.1} parent=11 // pred_check
          %p209 = pneg %p63
        $region14: #{forward.1} parent=11 // pred_check_branch
          %211 = sbr.rel (%p209) target = $region16
        $region15: #{forward.1} parent=11 // pred_region
          _
        $region16: #{forward.1} parent=11 // pred_fallthru
          _
        // Predicated region
        $region17: #{forward.1} parent=11 // pred_check
          %p212 = pneg %p84
        $region18: #{forward.1} parent=11 // pred_check_branch
          %214 = sbr.rel (%p212) target = $region20
        $region19: #{forward.1} parent=11 // pred_region
          _
        $region20: #{forward.1} parent=11 // pred_fallthru
          _
        // Predicated region
        $region21: #{forward.1} parent=11 // pred_check
          %p215 = pneg %p105
        $region22: #{forward.1} parent=11 // pred_check_branch
          %217 = sbr.rel (%p215) target = $region24
        $region23: #{forward.1} parent=11 // pred_region
          _
        $region24: #{forward.1} parent=11 // pred_fallthru
          _
        // Predicated region
        $region25: #{forward.1} parent=11 // pred_check
          %p218 = pneg %p126
        $region26: #{forward.1} parent=11 // pred_check_branch
          %220 = sbr.rel (%p218) target = $region28
        $region27: #{forward.1} parent=11 // pred_region
          _
        $region28: #{forward.1} parent=11 // pred_fallthru
          _
        // Predicated region
        $region29: #{forward.1} parent=11 // pred_check
          %p221 = pneg %p147
        $region30: #{forward.1} parent=11 // pred_check_branch
          %223 = sbr.rel (%p221) target = $region32
        $region31: #{forward.1} parent=11 // pred_region
          _
        $region32: #{forward.1} parent=11 // pred_fallthru
          _
        // Predicated region
        $region33: #{forward.1} parent=11 // pred_check
          %p224 = pneg %p168
        $region34: #{forward.1} parent=11 // pred_check_branch
          %226 = sbr.rel (%p224) target = $region36
        $region35: #{forward.1} parent=11 // pred_region
          _
        $region36: #{forward.1} parent=11 // pred_fallthru
          _
      $region12: #{forward.1} parent=5 // pred_fallthru
        _
      %p227 = scmp.lt.s32.totalorder %s16, 2
      // Predicated region
      $region37: #{forward.1} parent=5 // pred_check
        %p228 = pneg %p227
      $region38: #{forward.1} parent=5 // pred_check_branch
        %230 = sbr.rel (%p228) target = $region40
      $region39: #{forward.1} parent=5 // pred_region
        // Predicated region
        $region41: #{forward.1} parent=39 // pred_check
          %p231 = pneg %p36
        $region42: #{forward.1} parent=39 // pred_check_branch
          %233 = sbr.rel (%p231) target = $region44
        $region43: #{forward.1} parent=39 // pred_region
          %s234 = smul.u32 4, %s16
          %p235 = scmp.lt.s32.totalorder %s234, 7
          %s236 = scalar_select %p235, %s234, 7
          %s237 = smul.addr %s236, 7
          %s238 = smul.addr %s237, 8
          %s239 = scalar_lea.vmem %s0, %s238
          %s240 = smul.u32 4, %s16
        $region44: #{forward.1} parent=39 // pred_fallthru
          _
      $region40: #{forward.1} parent=5 // pred_fallthru
        _
      %p241 = scmp.le.s32.totalorder 1, %s16
      %p242 = scmp.lt.s32.totalorder %s16, 3
      %p243 = pnand %p241, %p242
      %p244 = pneg %p243
      // Predicated region
      $region45: #{forward.1} parent=5 // pred_check
        _
      $region46: #{forward.1} parent=5 // pred_check_branch
        %246 = sbr.rel (%p243) target = $region48
      $region47: #{forward.1} parent=5 // pred_region
        %s247 = ssub.s32 %s16, 1
        %s248 = smul.u32 4, %s21
        %p249 = scmp.lt.s32.totalorder %s248, 7
        %s250 = scalar_select %p249, %s248, 7
        %s251 = smul.addr %s250, 7
        %s252 = smul.addr %s251, 8
        %s253 = scalar_lea.vmem %s0, %s252
        %p254 = pneg %p42
        %p255 = pneg %p39
        %p256 = pneg %p63
        %p257 = pneg %p60
        %p258 = pneg %p84
        %p259 = pneg %p81
        %p260 = pneg %p105
        %p261 = pneg %p102
        %p262 = pneg %p126
        %p263 = pneg %p123
        %p264 = pneg %p147
        %p265 = pneg %p144
        %p266 = pneg %p168
        %p267 = pneg %p165
        %p268 = pneg %p194
        %p269 = pneg %p191
        %s270 = sand.u32 %s181, 1
        %s271 = scalar_lea.sflag [#allocation3], %s270
        %s272 = sand.u32 %s181, 1
        %s273 = scalar_lea.vmem [#allocation2], %s272
        %s274 = smul.u32 4, %s21
        %p275 = scmp.lt.s32.totalorder %s274, 7
        %s276 = scalar_select %p275, %s274, 7
        %s277 = smul.addr %s276, 7
        %s278 = smul.addr %s277, 8
        %s279 = scalar_lea.vmem %s0, %s278
        %s280 = smul.u32 4, %s21
        %v281 = vld [vmem:[%s279] sm:$0xff]
        %v282 = vld [vmem:[%s279 + $0x8] sm:$0xff]
        %v283 = vld [vmem:[%s279 + $0x10] sm:$0xff]
        %v284 = vld [vmem:[%s279 + $0x18] sm:$0xff]
        %v285 = vld [vmem:[%s279 + $0x20] sm:$0xff]
        %v286 = vld [vmem:[%s279 + $0x28] sm:$0xff]
        %v287 = vld [vmem:[%s279 + $0x30] sm:$0xff]
        %s288 = scalar_lea.vmem %s279, 56
        %v289 = vld [vmem:[%s288] sm:$0xff]
        %v290 = vld [vmem:[%s288 + $0x8] sm:$0xff]
        %v291 = vld [vmem:[%s288 + $0x10] sm:$0xff]
        %v292 = vld [vmem:[%s288 + $0x18] sm:$0xff]
        %v293 = vld [vmem:[%s288 + $0x20] sm:$0xff]
        %v294 = vld [vmem:[%s288 + $0x28] sm:$0xff]
        %v295 = vld [vmem:[%s288 + $0x30] sm:$0xff]
        %s296 = scalar_lea.vmem %s279, 112
        %v297 = vld [vmem:[%s296] sm:$0xff]
        %v298 = vld [vmem:[%s296 + $0x8] sm:$0xff]
        %v299 = vld [vmem:[%s296 + $0x10] sm:$0xff]
        %v300 = vld [vmem:[%s296 + $0x18] sm:$0xff]
        %v301 = vld [vmem:[%s296 + $0x20] sm:$0xff]
        %v302 = vld [vmem:[%s296 + $0x28] sm:$0xff]
        %v303 = vld [vmem:[%s296 + $0x30] sm:$0xff]
        %s304 = scalar_lea.vmem %s279, 168
        %v305 = vld [vmem:[%s304] sm:$0xff]
        %v306 = vld [vmem:[%s304 + $0x8] sm:$0xff]
        %v307 = vld [vmem:[%s304 + $0x10] sm:$0xff]
        %v308 = vld [vmem:[%s304 + $0x18] sm:$0xff]
        %v309 = vld [vmem:[%s304 + $0x20] sm:$0xff]
        %v310 = vld [vmem:[%s304 + $0x28] sm:$0xff]
        %v311 = vld [vmem:[%s304 + $0x30] sm:$0xff]
        %v312 = vld [vmem:[%s1] sm:$0xff]
        %v313 = vld [vmem:[%s1 + $0x8] sm:$0x1]
        %315 = vset.pattern.permute.xlu0 0
        %316 = vperm.xlu0 %315, %v281
        %v317 = vpop.permute.xlu0 %316
        %320 = vset.pattern.permute.xlu0 0
        %321 = vperm.xlu0 %320, %v282
        %v322 = vpop.permute.xlu0 %321
        %325 = vset.pattern.permute.xlu0 0
        %326 = vperm.xlu0 %325, %v283
        %v327 = vpop.permute.xlu0 %326
        %330 = vset.pattern.permute.xlu0 0
        %331 = vperm.xlu0 %330, %v284
        %v332 = vpop.permute.xlu0 %331
        %335 = vset.pattern.permute.xlu0 0
        %336 = vperm.xlu0 %335, %v285
        %v337 = vpop.permute.xlu0 %336
        %340 = vset.pattern.permute.xlu0 0
        %341 = vperm.xlu0 %340, %v286
        %v342 = vpop.permute.xlu0 %341
        %v344 = vlaneseq
        %v345 = vshrl.u32 %v344, 7
        %v346 = vsub.s32 0, %v345
        %v347 = vrot.slane %v312, %v346
        %v348 = vmul.f32 %v317, %v347
        %v349 = vmul.f32 %v322, %v347
        %v350 = vmul.f32 %v327, %v347
        %v351 = vmul.f32 %v332, %v347
        %v352 = vmul.f32 %v337, %v347
        %v353 = vmul.f32 %v342, %v347
        %v354 = vadd.f32 %v348, 0.0
        %v355 = vadd.f32 %v349, 0.0
        %v356 = vadd.f32 %v350, 0.0
        %v357 = vadd.f32 %v351, 0.0
        %v358 = vadd.f32 %v352, 0.0
        %v359 = vadd.f32 %v353, 0.0
        %361 = vset.pattern.permute.xlu0 0
        %362 = vperm.xlu0 %361, %v289
        %v363 = vpop.permute.xlu0 %362
        %366 = vset.pattern.permute.xlu0 0
        %367 = vperm.xlu0 %366, %v290
        %v368 = vpop.permute.xlu0 %367
        %371 = vset.pattern.permute.xlu0 0
        %372 = vperm.xlu0 %371, %v291
        %v373 = vpop.permute.xlu0 %372
        %376 = vset.pattern.permute.xlu0 0
        %377 = vperm.xlu0 %376, %v292
        %v378 = vpop.permute.xlu0 %377
        %381 = vset.pattern.permute.xlu0 0
        %382 = vperm.xlu0 %381, %v293
        %v383 = vpop.permute.xlu0 %382
        %386 = vset.pattern.permute.xlu0 0
        %387 = vperm.xlu0 %386, %v294
        %v388 = vpop.permute.xlu0 %387
        %v390 = vlaneseq
        %v391 = vshrl.u32 %v390, 7
        %v392 = vsub.s32 1, %v391
        %v393 = vrot.slane %v312, %v392
        %v394 = vmul.f32 %v363, %v393
        %v395 = vmul.f32 %v368, %v393
        %v396 = vmul.f32 %v373, %v393
        %v397 = vmul.f32 %v378, %v393
        %v398 = vmul.f32 %v383, %v393
        %v399 = vmul.f32 %v388, %v393
        %v400 = vadd.f32 %v354, %v394
        %v401 = vadd.f32 %v355, %v395
        %v402 = vadd.f32 %v356, %v396
        %v403 = vadd.f32 %v357, %v397
        %v404 = vadd.f32 %v358, %v398
        %v405 = vadd.f32 %v359, %v399
        %v406 = vlaneseq
        %v407 = vshrl.u32 %v406, 7
        %v408 = vsub.s32 2, %v407
        %v409 = vrot.slane %v312, %v408
        %v410 = vmul.f32 %v317, %v409
        %v411 = vmul.f32 %v322, %v409
        %v412 = vmul.f32 %v327, %v409
        %v413 = vmul.f32 %v332, %v409
        %v414 = vmul.f32 %v337, %v409
        %v415 = vmul.f32 %v342, %v409
        %vm422 = vcmask 1046528
        %v423 = vrot.slane %v410, 1
        %v424 = vrot.slane %v411, 1
        %v425 = vsel %vm422, %v423, %v424
        %v426 = vrot.slane %v412, 1
        %v427 = vsel %vm422, %v424, %v426
        %v428 = vrot.slane %v413, 1
        %v429 = vsel %vm422, %v426, %v428
        %v430 = vrot.slane %v414, 1
        %v431 = vsel %vm422, %v428, %v430
        %v432 = vrot.slane %v415, 1
        %v433 = vsel %vm422, %v430, %v432
        %v440 = vadd.f32 %v400, %v425
        %v441 = vadd.f32 %v401, %v427
        %v442 = vadd.f32 %v402, %v429
        %v443 = vadd.f32 %v403, %v431
        %v444 = vadd.f32 %v404, %v433
        %v445 = vadd.f32 %v405, %v432
        %447 = vset.pattern.permute.xlu0 0
        %448 = vperm.xlu0 %447, %v297
        %v449 = vpop.permute.xlu0 %448
        %452 = vset.pattern.permute.xlu0 0
        %453 = vperm.xlu0 %452, %v298
        %v454 = vpop.permute.xlu0 %453
        %457 = vset.pattern.permute.xlu0 0
        %458 = vperm.xlu0 %457, %v299
        %v459 = vpop.permute.xlu0 %458
        %462 = vset.pattern.permute.xlu0 0
        %463 = vperm.xlu0 %462, %v300
        %v464 = vpop.permute.xlu0 %463
        %467 = vset.pattern.permute.xlu0 0
        %468 = vperm.xlu0 %467, %v301
        %v469 = vpop.permute.xlu0 %468
        %472 = vset.pattern.permute.xlu0 0
        %473 = vperm.xlu0 %472, %v302
        %v474 = vpop.permute.xlu0 %473
        %v476 = vlaneseq
        %v477 = vshrl.u32 %v476, 7
        %v478 = vsub.s32 3, %v477
        %v479 = vrot.slane %v312, %v478
        %v480 = vmul.f32 %v449, %v479
        %v481 = vmul.f32 %v454, %v479
        %v482 = vmul.f32 %v459, %v479
        %v483 = vmul.f32 %v464, %v479
        %v484 = vmul.f32 %v469, %v479
        %v485 = vmul.f32 %v474, %v479
        %v486 = vadd.f32 %v440, %v480
        %v487 = vadd.f32 %v441, %v481
        %v488 = vadd.f32 %v442, %v482
        %v489 = vadd.f32 %v443, %v483
        %v490 = vadd.f32 %v444, %v484
        %v491 = vadd.f32 %v445, %v485
        %493 = vset.pattern.permute.xlu0 0
        %494 = vperm.xlu0 %493, %v305
        %v495 = vpop.permute.xlu0 %494
        %498 = vset.pattern.permute.xlu0 0
        %499 = vperm.xlu0 %498, %v306
        %v500 = vpop.permute.xlu0 %499
        %503 = vset.pattern.permute.xlu0 0
        %504 = vperm.xlu0 %503, %v307
        %v505 = vpop.permute.xlu0 %504
        %508 = vset.pattern.permute.xlu0 0
        %509 = vperm.xlu0 %508, %v308
        %v510 = vpop.permute.xlu0 %509
        %513 = vset.pattern.permute.xlu0 0
        %514 = vperm.xlu0 %513, %v309
        %v515 = vpop.permute.xlu0 %514
        %518 = vset.pattern.permute.xlu0 0
        %519 = vperm.xlu0 %518, %v310
        %v520 = vpop.permute.xlu0 %519
        %v522 = vlaneseq
        %v523 = vshrl.u32 %v522, 7
        %v524 = vsub.s32 4, %v523
        %v525 = vrot.slane %v312, %v524
        %v526 = vmul.f32 %v495, %v525
        %v527 = vmul.f32 %v500, %v525
        %v528 = vmul.f32 %v505, %v525
        %v529 = vmul.f32 %v510, %v525
        %v530 = vmul.f32 %v515, %v525
        %v531 = vmul.f32 %v520, %v525
        %v532 = vadd.f32 %v486, %v526
        %v533 = vadd.f32 %v487, %v527
        %v534 = vadd.f32 %v488, %v528
        %v535 = vadd.f32 %v489, %v529
        %v536 = vadd.f32 %v490, %v530
        %v537 = vadd.f32 %v491, %v531
        %v538 = vlaneseq
        %v539 = vshrl.u32 %v538, 7
        %v540 = vsub.s32 5, %v539
        %v541 = vrot.slane %v312, %v540
        %v542 = vmul.f32 %v449, %v541
        %v543 = vmul.f32 %v454, %v541
        %v544 = vmul.f32 %v459, %v541
        %v545 = vmul.f32 %v464, %v541
        %v546 = vmul.f32 %v469, %v541
        %v547 = vmul.f32 %v474, %v541
        %v554 = vrot.slane %v542, 1
        %v555 = vrot.slane %v543, 1
        %v556 = vsel %vm422, %v554, %v555
        %v557 = vrot.slane %v544, 1
        %v558 = vsel %vm422, %v555, %v557
        %v559 = vrot.slane %v545, 1
        %v560 = vsel %vm422, %v557, %v559
        %v561 = vrot.slane %v546, 1
        %v562 = vsel %vm422, %v559, %v561
        %v563 = vrot.slane %v547, 1
        %v564 = vsel %vm422, %v561, %v563
        %v571 = vadd.f32 %v532, %v556
        %v572 = vadd.f32 %v533, %v558
        %v573 = vadd.f32 %v534, %v560
        %v574 = vadd.f32 %v535, %v562
        %v575 = vadd.f32 %v536, %v564
        %v576 = vadd.f32 %v537, %v563
        %578 = vset.pattern.permute.xlu0 0
        %579 = vperm.xlu0 %578, %v287
        %v580 = vpop.permute.xlu0 %579
        %v582 = vlaneseq
        %v583 = vshrl.u32 %v582, 7
        %v584 = vsub.s32 6, %v583
        %v585 = vrot.slane %v312, %v584
        %v586 = vmul.f32 %v317, %v585
        %v587 = vmul.f32 %v322, %v585
        %v588 = vmul.f32 %v327, %v585
        %v589 = vmul.f32 %v332, %v585
        %v590 = vmul.f32 %v337, %v585
        %v591 = vmul.f32 %v342, %v585
        %v592 = vmul.f32 %v580, %v585
        %vm600 = vcmask 1040384
        %v601 = vrot.slane %v586, 7
        %v602 = vrot.slane %v587, 7
        %v603 = vsel %vm600, %v601, %v602
        %v604 = vrot.slane %v588, 7
        %v605 = vsel %vm600, %v602, %v604
        %v606 = vrot.slane %v589, 7
        %v607 = vsel %vm600, %v604, %v606
        %v608 = vrot.slane %v590, 7
        %v609 = vsel %vm600, %v606, %v608
        %v610 = vrot.slane %v591, 7
        %v611 = vsel %vm600, %v608, %v610
        %v612 = vrot.slane %v592, 7
        %v613 = vsel %vm600, %v610, %v612
        %v620 = vadd.f32 %v571, %v603
        %v621 = vadd.f32 %v572, %v605
        %v622 = vadd.f32 %v573, %v607
        %v623 = vadd.f32 %v574, %v609
        %v624 = vadd.f32 %v575, %v611
        %v625 = vadd.f32 %v576, %v613
        %627 = vset.pattern.permute.xlu0 0
        %628 = vperm.xlu0 %627, %v295
        %v629 = vpop.permute.xlu0 %628
        %v631 = vlaneseq
        %v632 = vshrl.u32 %v631, 7
        %v633 = vsub.s32 7, %v632
        %v634 = vrot.slane %v312, %v633
        %v635 = vmul.f32 %v363, %v634
        %v636 = vmul.f32 %v368, %v634
        %v637 = vmul.f32 %v373, %v634
        %v638 = vmul.f32 %v378, %v634
        %v639 = vmul.f32 %v383, %v634
        %v640 = vmul.f32 %v388, %v634
        %v641 = vmul.f32 %v629, %v634
        %v649 = vrot.slane %v635, 7
        %v650 = vrot.slane %v636, 7
        %v651 = vsel %vm600, %v649, %v650
        %v652 = vrot.slane %v637, 7
        %v653 = vsel %vm600, %v650, %v652
        %v654 = vrot.slane %v638, 7
        %v655 = vsel %vm600, %v652, %v654
        %v656 = vrot.slane %v639, 7
        %v657 = vsel %vm600, %v654, %v656
        %v658 = vrot.slane %v640, 7
        %v659 = vsel %vm600, %v656, %v658
        %v660 = vrot.slane %v641, 7
        %v661 = vsel %vm600, %v658, %v660
        %v668 = vadd.f32 %v620, %v651
        %v669 = vadd.f32 %v621, %v653
        %v670 = vadd.f32 %v622, %v655
        %v671 = vadd.f32 %v623, %v657
        %v672 = vadd.f32 %v624, %v659
        %v673 = vadd.f32 %v625, %v661
        %v674 = vlaneseq
        %v675 = vshrl.u32 %v674, 7
        %v676 = vsub.s32 0, %v675
        %v677 = vrot.slane %v313, %v676
        %v678 = vmul.f32 %v322, %v677
        %v679 = vmul.f32 %v327, %v677
        %v680 = vmul.f32 %v332, %v677
        %v681 = vmul.f32 %v337, %v677
        %v682 = vmul.f32 %v342, %v677
        %v683 = vmul.f32 %v580, %v677
        %v684 = vadd.f32 %v668, %v678
        %v685 = vadd.f32 %v669, %v679
        %v686 = vadd.f32 %v670, %v680
        %v687 = vadd.f32 %v671, %v681
        %v688 = vadd.f32 %v672, %v682
        %v689 = vadd.f32 %v673, %v683
        %v690 = vmul.f32 %v363, %v347
        %v691 = vmul.f32 %v368, %v347
        %v692 = vmul.f32 %v373, %v347
        %v693 = vmul.f32 %v378, %v347
        %v694 = vmul.f32 %v383, %v347
        %v695 = vmul.f32 %v388, %v347
        %v696 = vadd.f32 %v690, 0.0
        %v697 = vadd.f32 %v691, 0.0
        %v698 = vadd.f32 %v692, 0.0
        %v699 = vadd.f32 %v693, 0.0
        %v700 = vadd.f32 %v694, 0.0
        %v701 = vadd.f32 %v695, 0.0
        %v702 = vmul.f32 %v317, %v393
        %v703 = vmul.f32 %v322, %v393
        %v704 = vmul.f32 %v327, %v393
        %v705 = vmul.f32 %v332, %v393
        %v706 = vmul.f32 %v337, %v393
        %v707 = vmul.f32 %v342, %v393
        %v714 = vrot.slane %v702, 1
        %v715 = vrot.slane %v703, 1
        %v716 = vsel %vm422, %v714, %v715
        %v717 = vrot.slane %v704, 1
        %v718 = vsel %vm422, %v715, %v717
        %v719 = vrot.slane %v705, 1
        %v720 = vsel %vm422, %v717, %v719
        %v721 = vrot.slane %v706, 1
        %v722 = vsel %vm422, %v719, %v721
        %v723 = vrot.slane %v707, 1
        %v724 = vsel %vm422, %v721, %v723
        %v731 = vadd.f32 %v696, %v716
        %v732 = vadd.f32 %v697, %v718
        %v733 = vadd.f32 %v698, %v720
        %v734 = vadd.f32 %v699, %v722
        %v735 = vadd.f32 %v700, %v724
        %v736 = vadd.f32 %v701, %v723
        %v737 = vmul.f32 %v363, %v409
        %v738 = vmul.f32 %v368, %v409
        %v739 = vmul.f32 %v373, %v409
        %v740 = vmul.f32 %v378, %v409
        %v741 = vmul.f32 %v383, %v409
        %v742 = vmul.f32 %v388, %v409
        %v749 = vrot.slane %v737, 1
        %v750 = vrot.slane %v738, 1
        %v751 = vsel %vm422, %v749, %v750
        %v752 = vrot.slane %v739, 1
        %v753 = vsel %vm422, %v750, %v752
        %v754 = vrot.slane %v740, 1
        %v755 = vsel %vm422, %v752, %v754
        %v756 = vrot.slane %v741, 1
        %v757 = vsel %vm422, %v754, %v756
        %v758 = vrot.slane %v742, 1
        %v759 = vsel %vm422, %v756, %v758
        %v766 = vadd.f32 %v731, %v751
        %v767 = vadd.f32 %v732, %v753
        %v768 = vadd.f32 %v733, %v755
        %v769 = vadd.f32 %v734, %v757
        %v770 = vadd.f32 %v735, %v759
        %v771 = vadd.f32 %v736, %v758
        %v772 = vmul.f32 %v495, %v479
        %v773 = vmul.f32 %v500, %v479
        %v774 = vmul.f32 %v505, %v479
        %v775 = vmul.f32 %v510, %v479
        %v776 = vmul.f32 %v515, %v479
        %v777 = vmul.f32 %v520, %v479
        %v778 = vadd.f32 %v766, %v772
        %v779 = vadd.f32 %v767, %v773
        %v780 = vadd.f32 %v768, %v774
        %v781 = vadd.f32 %v769, %v775
        %v782 = vadd.f32 %v770, %v776
        %v783 = vadd.f32 %v771, %v777
        %v784 = vmul.f32 %v449, %v525
        %v785 = vmul.f32 %v454, %v525
        %v786 = vmul.f32 %v459, %v525
        %v787 = vmul.f32 %v464, %v525
        %v788 = vmul.f32 %v469, %v525
        %v789 = vmul.f32 %v474, %v525
        %v796 = vrot.slane %v784, 1
        %v797 = vrot.slane %v785, 1
        %v798 = vsel %vm422, %v796, %v797
        %v799 = vrot.slane %v786, 1
        %v800 = vsel %vm422, %v797, %v799
        %v801 = vrot.slane %v787, 1
        %v802 = vsel %vm422, %v799, %v801
        %v803 = vrot.slane %v788, 1
        %v804 = vsel %vm422, %v801, %v803
        %v805 = vrot.slane %v789, 1
        %v806 = vsel %vm422, %v803, %v805
        %v813 = vadd.f32 %v778, %v798
        %v814 = vadd.f32 %v779, %v800
        %v815 = vadd.f32 %v780, %v802
        %v816 = vadd.f32 %v781, %v804
        %v817 = vadd.f32 %v782, %v806
        %v818 = vadd.f32 %v783, %v805
        %v819 = vmul.f32 %v495, %v541
        %v820 = vmul.f32 %v500, %v541
        %v821 = vmul.f32 %v505, %v541
        %v822 = vmul.f32 %v510, %v541
        %v823 = vmul.f32 %v515, %v541
        %v824 = vmul.f32 %v520, %v541
        %v831 = vrot.slane %v819, 1
        %v832 = vrot.slane %v820, 1
        %v833 = vsel %vm422, %v831, %v832
        %v834 = vrot.slane %v821, 1
        %v835 = vsel %vm422, %v832, %v834
        %v836 = vrot.slane %v822, 1
        %v837 = vsel %vm422, %v834, %v836
        %v838 = vrot.slane %v823, 1
        %v839 = vsel %vm422, %v836, %v838
        %v840 = vrot.slane %v824, 1
        %v841 = vsel %vm422, %v838, %v840
        %v848 = vadd.f32 %v813, %v833
        %v849 = vadd.f32 %v814, %v835
        %v850 = vadd.f32 %v815, %v837
        %v851 = vadd.f32 %v816, %v839
        %v852 = vadd.f32 %v817, %v841
        %v853 = vadd.f32 %v818, %v840
        %v854 = vmul.f32 %v363, %v585
        %v855 = vmul.f32 %v368, %v585
        %v856 = vmul.f32 %v373, %v585
        %v857 = vmul.f32 %v378, %v585
        %v858 = vmul.f32 %v383, %v585
        %v859 = vmul.f32 %v388, %v585
        %v860 = vmul.f32 %v629, %v585
        %v868 = vrot.slane %v854, 7
        %v869 = vrot.slane %v855, 7
        %v870 = vsel %vm600, %v868, %v869
        %v871 = vrot.slane %v856, 7
        %v872 = vsel %vm600, %v869, %v871
        %v873 = vrot.slane %v857, 7
        %v874 = vsel %vm600, %v871, %v873
        %v875 = vrot.slane %v858, 7
        %v876 = vsel %vm600, %v873, %v875
        %v877 = vrot.slane %v859, 7
        %v878 = vsel %vm600, %v875, %v877
        %v879 = vrot.slane %v860, 7
        %v880 = vsel %vm600, %v877, %v879
        %v887 = vadd.f32 %v848, %v870
        %v888 = vadd.f32 %v849, %v872
        %v889 = vadd.f32 %v850, %v874
        %v890 = vadd.f32 %v851, %v876
        %v891 = vadd.f32 %v852, %v878
        %v892 = vadd.f32 %v853, %v880
        %v893 = vmul.f32 %v322, %v634
        %v894 = vmul.f32 %v327, %v634
        %v895 = vmul.f32 %v332, %v634
        %v896 = vmul.f32 %v337, %v634
        %v897 = vmul.f32 %v342, %v634
        %v898 = vmul.f32 %v580, %v634
        %v899 = vadd.f32 %v887, %v893
        %v900 = vadd.f32 %v888, %v894
        %v901 = vadd.f32 %v889, %v895
        %v902 = vadd.f32 %v890, %v896
        %v903 = vadd.f32 %v891, %v897
        %v904 = vadd.f32 %v892, %v898
        %v905 = vmul.f32 %v368, %v677
        %v906 = vmul.f32 %v373, %v677
        %v907 = vmul.f32 %v378, %v677
        %v908 = vmul.f32 %v383, %v677
        %v909 = vmul.f32 %v388, %v677
        %v910 = vmul.f32 %v629, %v677
        %v911 = vadd.f32 %v899, %v905
        %v912 = vadd.f32 %v900, %v906
        %v913 = vadd.f32 %v901, %v907
        %v914 = vadd.f32 %v902, %v908
        %v915 = vadd.f32 %v903, %v909
        %v916 = vadd.f32 %v904, %v910
        %v917 = vmax.f32 %v684, %v911
        %v918 = vmax.f32 %v685, %v912
        %v919 = vmax.f32 %v686, %v913
        %v920 = vmax.f32 %v687, %v914
        %v921 = vmax.f32 %v688, %v915
        %v922 = vmax.f32 %v689, %v916
        %v923 = vmul.f32 %v449, %v347
        %v924 = vmul.f32 %v454, %v347
        %v925 = vmul.f32 %v459, %v347
        %v926 = vmul.f32 %v464, %v347
        %v927 = vmul.f32 %v469, %v347
        %v928 = vmul.f32 %v474, %v347
        %v929 = vadd.f32 %v923, 0.0
        %v930 = vadd.f32 %v924, 0.0
        %v931 = vadd.f32 %v925, 0.0
        %v932 = vadd.f32 %v926, 0.0
        %v933 = vadd.f32 %v927, 0.0
        %v934 = vadd.f32 %v928, 0.0
        %v935 = vmul.f32 %v495, %v393
        %v936 = vmul.f32 %v500, %v393
        %v937 = vmul.f32 %v505, %v393
        %v938 = vmul.f32 %v510, %v393
        %v939 = vmul.f32 %v515, %v393
        %v940 = vmul.f32 %v520, %v393
        %v941 = vadd.f32 %v929, %v935
        %v942 = vadd.f32 %v930, %v936
        %v943 = vadd.f32 %v931, %v937
        %v944 = vadd.f32 %v932, %v938
        %v945 = vadd.f32 %v933, %v939
        %v946 = vadd.f32 %v934, %v940
        %v947 = vmul.f32 %v449, %v409
        %v948 = vmul.f32 %v454, %v409
        %v949 = vmul.f32 %v459, %v409
        %v950 = vmul.f32 %v464, %v409
        %v951 = vmul.f32 %v469, %v409
        %v952 = vmul.f32 %v474, %v409
        %v959 = vrot.slane %v947, 1
        %v960 = vrot.slane %v948, 1
        %v961 = vsel %vm422, %v959, %v960
        %v962 = vrot.slane %v949, 1
        %v963 = vsel %vm422, %v960, %v962
        %v964 = vrot.slane %v950, 1
        %v965 = vsel %vm422, %v962, %v964
        %v966 = vrot.slane %v951, 1
        %v967 = vsel %vm422, %v964, %v966
        %v968 = vrot.slane %v952, 1
        %v969 = vsel %vm422, %v966, %v968
        %v976 = vadd.f32 %v941, %v961
        %v977 = vadd.f32 %v942, %v963
        %v978 = vadd.f32 %v943, %v965
        %v979 = vadd.f32 %v944, %v967
        %v980 = vadd.f32 %v945, %v969
        %v981 = vadd.f32 %v946, %v968
        %v982 = vmul.f32 %v317, %v479
        %v983 = vmul.f32 %v322, %v479
        %v984 = vmul.f32 %v327, %v479
        %v985 = vmul.f32 %v332, %v479
        %v986 = vmul.f32 %v337, %v479
        %v987 = vmul.f32 %v342, %v479
        %v988 = vmul.f32 %v580, %v479
        %v996 = vrot.slane %v982, 7
        %v997 = vrot.slane %v983, 7
        %v998 = vsel %vm600, %v996, %v997
        %v999 = vrot.slane %v984, 7
        %v1000 = vsel %vm600, %v997, %v999
        %v1001 = vrot.slane %v985, 7
        %v1002 = vsel %vm600, %v999, %v1001
        %v1003 = vrot.slane %v986, 7
        %v1004 = vsel %vm600, %v1001, %v1003
        %v1005 = vrot.slane %v987, 7
        %v1006 = vsel %vm600, %v1003, %v1005
        %v1007 = vrot.slane %v988, 7
        %v1008 = vsel %vm600, %v1005, %v1007
        %v1015 = vadd.f32 %v976, %v998
        %v1016 = vadd.f32 %v977, %v1000
        %v1017 = vadd.f32 %v978, %v1002
        %v1018 = vadd.f32 %v979, %v1004
        %v1019 = vadd.f32 %v980, %v1006
        %v1020 = vadd.f32 %v981, %v1008
        %v1021 = vmul.f32 %v363, %v525
        %v1022 = vmul.f32 %v368, %v525
        %v1023 = vmul.f32 %v373, %v525
        %v1024 = vmul.f32 %v378, %v525
        %v1025 = vmul.f32 %v383, %v525
        %v1026 = vmul.f32 %v388, %v525
        %v1027 = vmul.f32 %v629, %v525
        %v1035 = vrot.slane %v1021, 7
        %v1036 = vrot.slane %v1022, 7
        %v1037 = vsel %vm600, %v1035, %v1036
        %v1038 = vrot.slane %v1023, 7
        %v1039 = vsel %vm600, %v1036, %v1038
        %v1040 = vrot.slane %v1024, 7
        %v1041 = vsel %vm600, %v1038, %v1040
        %v1042 = vrot.slane %v1025, 7
        %v1043 = vsel %vm600, %v1040, %v1042
        %v1044 = vrot.slane %v1026, 7
        %v1045 = vsel %vm600, %v1042, %v1044
        %v1046 = vrot.slane %v1027, 7
        %v1047 = vsel %vm600, %v1044, %v1046
        %v1054 = vadd.f32 %v1015, %v1037
        %v1055 = vadd.f32 %v1016, %v1039
        %v1056 = vadd.f32 %v1017, %v1041
        %v1057 = vadd.f32 %v1018, %v1043
        %v1058 = vadd.f32 %v1019, %v1045
        %v1059 = vadd.f32 %v1020, %v1047
        %v1060 = vmul.f32 %v322, %v541
        %v1061 = vmul.f32 %v327, %v541
        %v1062 = vmul.f32 %v332, %v541
        %v1063 = vmul.f32 %v337, %v541
        %v1064 = vmul.f32 %v342, %v541
        %v1065 = vmul.f32 %v580, %v541
        %v1066 = vadd.f32 %v1054, %v1060
        %v1067 = vadd.f32 %v1055, %v1061
        %v1068 = vadd.f32 %v1056, %v1062
        %v1069 = vadd.f32 %v1057, %v1063
        %v1070 = vadd.f32 %v1058, %v1064
        %v1071 = vadd.f32 %v1059, %v1065
        %1073 = vset.pattern.permute.xlu0 0
        %1074 = vperm.xlu0 %1073, %v303
        %v1075 = vpop.permute.xlu0 %1074
        %v1077 = vmul.f32 %v449, %v585
        %v1078 = vmul.f32 %v454, %v585
        %v1079 = vmul.f32 %v459, %v585
        %v1080 = vmul.f32 %v464, %v585
        %v1081 = vmul.f32 %v469, %v585
        %v1082 = vmul.f32 %v474, %v585
        %v1083 = vmul.f32 %v1075, %v585
        %v1091 = vrot.slane %v1077, 7
        %v1092 = vrot.slane %v1078, 7
        %v1093 = vsel %vm600, %v1091, %v1092
        %v1094 = vrot.slane %v1079, 7
        %v1095 = vsel %vm600, %v1092, %v1094
        %v1096 = vrot.slane %v1080, 7
        %v1097 = vsel %vm600, %v1094, %v1096
        %v1098 = vrot.slane %v1081, 7
        %v1099 = vsel %vm600, %v1096, %v1098
        %v1100 = vrot.slane %v1082, 7
        %v1101 = vsel %vm600, %v1098, %v1100
        %v1102 = vrot.slane %v1083, 7
        %v1103 = vsel %vm600, %v1100, %v1102
        %v1110 = vadd.f32 %v1066, %v1093
        %v1111 = vadd.f32 %v1067, %v1095
        %v1112 = vadd.f32 %v1068, %v1097
        %v1113 = vadd.f32 %v1069, %v1099
        %v1114 = vadd.f32 %v1070, %v1101
        %v1115 = vadd.f32 %v1071, %v1103
        %1117 = vset.pattern.permute.xlu0 0
        %1118 = vperm.xlu0 %1117, %v311
        %v1119 = vpop.permute.xlu0 %1118
        %v1121 = vmul.f32 %v495, %v634
        %v1122 = vmul.f32 %v500, %v634
        %v1123 = vmul.f32 %v505, %v634
        %v1124 = vmul.f32 %v510, %v634
        %v1125 = vmul.f32 %v515, %v634
        %v1126 = vmul.f32 %v520, %v634
        %v1127 = vmul.f32 %v1119, %v634
        %v1135 = vrot.slane %v1121, 7
        %v1136 = vrot.slane %v1122, 7
        %v1137 = vsel %vm600, %v1135, %v1136
        %v1138 = vrot.slane %v1123, 7
        %v1139 = vsel %vm600, %v1136, %v1138
        %v1140 = vrot.slane %v1124, 7
        %v1141 = vsel %vm600, %v1138, %v1140
        %v1142 = vrot.slane %v1125, 7
        %v1143 = vsel %vm600, %v1140, %v1142
        %v1144 = vrot.slane %v1126, 7
        %v1145 = vsel %vm600, %v1142, %v1144
        %v1146 = vrot.slane %v1127, 7
        %v1147 = vsel %vm600, %v1144, %v1146
        %v1154 = vadd.f32 %v1110, %v1137
        %v1155 = vadd.f32 %v1111, %v1139
        %v1156 = vadd.f32 %v1112, %v1141
        %v1157 = vadd.f32 %v1113, %v1143
        %v1158 = vadd.f32 %v1114, %v1145
        %v1159 = vadd.f32 %v1115, %v1147
        %v1160 = vmul.f32 %v454, %v677
        %v1161 = vmul.f32 %v459, %v677
        %v1162 = vmul.f32 %v464, %v677
        %v1163 = vmul.f32 %v469, %v677
        %v1164 = vmul.f32 %v474, %v677
        %v1165 = vmul.f32 %v1075, %v677
        %v1166 = vadd.f32 %v1154, %v1160
        %v1167 = vadd.f32 %v1155, %v1161
        %v1168 = vadd.f32 %v1156, %v1162
        %v1169 = vadd.f32 %v1157, %v1163
        %v1170 = vadd.f32 %v1158, %v1164
        %v1171 = vadd.f32 %v1159, %v1165
        %v1172 = vmax.f32 %v917, %v1166
        %v1173 = vmax.f32 %v918, %v1167
        %v1174 = vmax.f32 %v919, %v1168
        %v1175 = vmax.f32 %v920, %v1169
        %v1176 = vmax.f32 %v921, %v1170
        %v1177 = vmax.f32 %v922, %v1171
        %v1178 = vmul.f32 %v495, %v347
        %v1179 = vmul.f32 %v500, %v347
        %v1180 = vmul.f32 %v505, %v347
        %v1181 = vmul.f32 %v510, %v347
        %v1182 = vmul.f32 %v515, %v347
        %v1183 = vmul.f32 %v520, %v347
        %v1184 = vadd.f32 %v1178, 0.0
        %v1185 = vadd.f32 %v1179, 0.0
        %v1186 = vadd.f32 %v1180, 0.0
        %v1187 = vadd.f32 %v1181, 0.0
        %v1188 = vadd.f32 %v1182, 0.0
        %v1189 = vadd.f32 %v1183, 0.0
        %v1190 = vmul.f32 %v449, %v393
        %v1191 = vmul.f32 %v454, %v393
        %v1192 = vmul.f32 %v459, %v393
        %v1193 = vmul.f32 %v464, %v393
        %v1194 = vmul.f32 %v469, %v393
        %v1195 = vmul.f32 %v474, %v393
        %v1202 = vrot.slane %v1190, 1
        %v1203 = vrot.slane %v1191, 1
        %v1204 = vsel %vm422, %v1202, %v1203
        %v1205 = vrot.slane %v1192, 1
        %v1206 = vsel %vm422, %v1203, %v1205
        %v1207 = vrot.slane %v1193, 1
        %v1208 = vsel %vm422, %v1205, %v1207
        %v1209 = vrot.slane %v1194, 1
        %v1210 = vsel %vm422, %v1207, %v1209
        %v1211 = vrot.slane %v1195, 1
        %v1212 = vsel %vm422, %v1209, %v1211
        %v1219 = vadd.f32 %v1184, %v1204
        %v1220 = vadd.f32 %v1185, %v1206
        %v1221 = vadd.f32 %v1186, %v1208
        %v1222 = vadd.f32 %v1187, %v1210
        %v1223 = vadd.f32 %v1188, %v1212
        %v1224 = vadd.f32 %v1189, %v1211
        %v1225 = vmul.f32 %v495, %v409
        %v1226 = vmul.f32 %v500, %v409
        %v1227 = vmul.f32 %v505, %v409
        %v1228 = vmul.f32 %v510, %v409
        %v1229 = vmul.f32 %v515, %v409
        %v1230 = vmul.f32 %v520, %v409
        %v1237 = vrot.slane %v1225, 1
        %v1238 = vrot.slane %v1226, 1
        %v1239 = vsel %vm422, %v1237, %v1238
        %v1240 = vrot.slane %v1227, 1
        %v1241 = vsel %vm422, %v1238, %v1240
        %v1242 = vrot.slane %v1228, 1
        %v1243 = vsel %vm422, %v1240, %v1242
        %v1244 = vrot.slane %v1229, 1
        %v1245 = vsel %vm422, %v1242, %v1244
        %v1246 = vrot.slane %v1230, 1
        %v1247 = vsel %vm422, %v1244, %v1246
        %v1254 = vadd.f32 %v1219, %v1239
        %v1255 = vadd.f32 %v1220, %v1241
        %v1256 = vadd.f32 %v1221, %v1243
        %v1257 = vadd.f32 %v1222, %v1245
        %v1258 = vadd.f32 %v1223, %v1247
        %v1259 = vadd.f32 %v1224, %v1246
        %v1260 = vmul.f32 %v363, %v479
        %v1261 = vmul.f32 %v368, %v479
        %v1262 = vmul.f32 %v373, %v479
        %v1263 = vmul.f32 %v378, %v479
        %v1264 = vmul.f32 %v383, %v479
        %v1265 = vmul.f32 %v388, %v479
        %v1266 = vmul.f32 %v629, %v479
        %v1274 = vrot.slane %v1260, 7
        %v1275 = vrot.slane %v1261, 7
        %v1276 = vsel %vm600, %v1274, %v1275
        %v1277 = vrot.slane %v1262, 7
        %v1278 = vsel %vm600, %v1275, %v1277
        %v1279 = vrot.slane %v1263, 7
        %v1280 = vsel %vm600, %v1277, %v1279
        %v1281 = vrot.slane %v1264, 7
        %v1282 = vsel %vm600, %v1279, %v1281
        %v1283 = vrot.slane %v1265, 7
        %v1284 = vsel %vm600, %v1281, %v1283
        %v1285 = vrot.slane %v1266, 7
        %v1286 = vsel %vm600, %v1283, %v1285
        %v1293 = vadd.f32 %v1254, %v1276
        %v1294 = vadd.f32 %v1255, %v1278
        %v1295 = vadd.f32 %v1256, %v1280
        %v1296 = vadd.f32 %v1257, %v1282
        %v1297 = vadd.f32 %v1258, %v1284
        %v1298 = vadd.f32 %v1259, %v1286
        %v1299 = vmul.f32 %v322, %v525
        %v1300 = vmul.f32 %v327, %v525
        %v1301 = vmul.f32 %v332, %v525
        %v1302 = vmul.f32 %v337, %v525
        %v1303 = vmul.f32 %v342, %v525
        %v1304 = vmul.f32 %v580, %v525
        %v1305 = vadd.f32 %v1293, %v1299
        %v1306 = vadd.f32 %v1294, %v1300
        %v1307 = vadd.f32 %v1295, %v1301
        %v1308 = vadd.f32 %v1296, %v1302
        %v1309 = vadd.f32 %v1297, %v1303
        %v1310 = vadd.f32 %v1298, %v1304
        %v1311 = vmul.f32 %v368, %v541
        %v1312 = vmul.f32 %v373, %v541
        %v1313 = vmul.f32 %v378, %v541
        %v1314 = vmul.f32 %v383, %v541
        %v1315 = vmul.f32 %v388, %v541
        %v1316 = vmul.f32 %v629, %v541
        %v1317 = vadd.f32 %v1305, %v1311
        %v1318 = vadd.f32 %v1306, %v1312
        %v1319 = vadd.f32 %v1307, %v1313
        %v1320 = vadd.f32 %v1308, %v1314
        %v1321 = vadd.f32 %v1309, %v1315
        %v1322 = vadd.f32 %v1310, %v1316
        %v1323 = vmul.f32 %v495, %v585
        %v1324 = vmul.f32 %v500, %v585
        %v1325 = vmul.f32 %v505, %v585
        %v1326 = vmul.f32 %v510, %v585
        %v1327 = vmul.f32 %v515, %v585
        %v1328 = vmul.f32 %v520, %v585
        %v1329 = vmul.f32 %v1119, %v585
        %v1337 = vrot.slane %v1323, 7
        %v1338 = vrot.slane %v1324, 7
        %v1339 = vsel %vm600, %v1337, %v1338
        %v1340 = vrot.slane %v1325, 7
        %v1341 = vsel %vm600, %v1338, %v1340
        %v1342 = vrot.slane %v1326, 7
        %v1343 = vsel %vm600, %v1340, %v1342
        %v1344 = vrot.slane %v1327, 7
        %v1345 = vsel %vm600, %v1342, %v1344
        %v1346 = vrot.slane %v1328, 7
        %v1347 = vsel %vm600, %v1344, %v1346
        %v1348 = vrot.slane %v1329, 7
        %v1349 = vsel %vm600, %v1346, %v1348
        %v1356 = vadd.f32 %v1317, %v1339
        %v1357 = vadd.f32 %v1318, %v1341
        %v1358 = vadd.f32 %v1319, %v1343
        %v1359 = vadd.f32 %v1320, %v1345
        %v1360 = vadd.f32 %v1321, %v1347
        %v1361 = vadd.f32 %v1322, %v1349
        %v1362 = vmul.f32 %v454, %v634
        %v1363 = vmul.f32 %v459, %v634
        %v1364 = vmul.f32 %v464, %v634
        %v1365 = vmul.f32 %v469, %v634
        %v1366 = vmul.f32 %v474, %v634
        %v1367 = vmul.f32 %v1075, %v634
        %v1368 = vadd.f32 %v1356, %v1362
        %v1369 = vadd.f32 %v1357, %v1363
        %v1370 = vadd.f32 %v1358, %v1364
        %v1371 = vadd.f32 %v1359, %v1365
        %v1372 = vadd.f32 %v1360, %v1366
        %v1373 = vadd.f32 %v1361, %v1367
        %v1374 = vmul.f32 %v500, %v677
        %v1375 = vmul.f32 %v505, %v677
        %v1376 = vmul.f32 %v510, %v677
        %v1377 = vmul.f32 %v515, %v677
        %v1378 = vmul.f32 %v520, %v677
        %v1379 = vmul.f32 %v1119, %v677
        %v1380 = vadd.f32 %v1368, %v1374
        %v1381 = vadd.f32 %v1369, %v1375
        %v1382 = vadd.f32 %v1370, %v1376
        %v1383 = vadd.f32 %v1371, %v1377
        %v1384 = vadd.f32 %v1372, %v1378
        %v1385 = vadd.f32 %v1373, %v1379
        %v1386 = vmax.f32 %v1172, %v1380
        %v1387 = vmax.f32 %v1173, %v1381
        %v1388 = vmax.f32 %v1174, %v1382
        %v1389 = vmax.f32 %v1175, %v1383
        %v1390 = vmax.f32 %v1176, %v1384
        %v1391 = vmax.f32 %v1177, %v1385
        %v1392 = vld [vmem:[%s2] sm:$0x1]
        %v1394 = vlaneseq
        %v1395 = vshrl.u32 %v1394, 7
        %v1396 = vsub.s32 0, %v1395
        %v1397 = vrot.slane %v1392, %v1396
        %v1399 = vadd.f32 %v1386, %v1397
        %v1400 = vadd.f32 %v1387, %v1397
        %v1401 = vadd.f32 %v1388, %v1397
        %v1402 = vadd.f32 %v1389, %v1397
        %v1403 = vadd.f32 %v1390, %v1397
        %v1404 = vadd.f32 %v1391, %v1397
        %v1405 = vmax.f32 %v1399, 0.0
        %v1406 = vmax.f32 %v1400, 0.0
        %v1407 = vmax.f32 %v1401, 0.0
        %v1408 = vmax.f32 %v1402, 0.0
        %v1409 = vmax.f32 %v1403, 0.0
        %v1410 = vmax.f32 %v1404, 0.0
        %v1411 = vld [vmem:[%s3] sm:$0xff]
        %v1412 = vld [vmem:[%s3 + $0x8] sm:$0xff]
        %v1413 = vld [vmem:[%s3 + $0x10] sm:$0xff]
        %v1414 = vld [vmem:[%s3 + $0x18] sm:$0xff]
        %v1415 = vld [vmem:[%s3 + $0x20] sm:$0xff]
        %v1416 = vld [vmem:[%s3 + $0x28] sm:$0xff]
        %v1417 = vld [vmem:[%s3 + $0x30] sm:$0xff]
        %v1418 = vld [vmem:[%s3 + $0x38] sm:$0xff]
        %s1419 = scalar_lea.vmem %s3, 64
        %v1420 = vld [vmem:[%s1419] sm:$0xff]
        %v1421 = vld [vmem:[%s1419 + $0x8] sm:$0xff]
        %v1422 = vld [vmem:[%s1419 + $0x10] sm:$0xff]
        %v1423 = vld [vmem:[%s1419 + $0x18] sm:$0xff]
        %v1424 = vld [vmem:[%s1419 + $0x20] sm:$0xff]
        %v1425 = vld [vmem:[%s1419 + $0x28] sm:$0xff]
        %v1426 = vld [vmem:[%s1419 + $0x30] sm:$0xff]
        %v1427 = vld [vmem:[%s1419 + $0x38] sm:$0xff]
        %v1432 = vrot.slane %v1405, 1
        %v1433 = vrot.slane %v1406, 1
        %v1434 = vsel %vm422, %v1432, %v1433
        %v1435 = vrot.slane %v1407, 1
        %v1436 = vsel %vm422, %v1433, %v1435
        %v1437 = vrot.slane %v1408, 1
        %v1438 = vsel %vm422, %v1435, %v1437
        %vm1439 = vcmask 523264
        %v1440 = vsel %vm1439, %v1434, 0
        %v1442 = vsel %vm1439, %v1436, 0
        %v1444 = vsel %vm1439, %v1438, 0
        %v1446 = vsel %vm1439, %v1437, 0
        %1448 = vmatprep.subr.mxu0 0.0
        %1449 = vmatpush1.msra.mxu0 %v1420
        %1450 = vmatprep.subr.mxu0 0.0
        %1451 = vmatpush1.msra.mxu0 %v1421
        %1452 = vmatprep.subr.mxu0 0.0
        %1453 = vmatpush1.msra.mxu0 %v1422
        %1454 = vmatprep.subr.mxu0 0.0
        %1455 = vmatpush1.msra.mxu0 %v1423
        %1456 = vmatprep.subr.mxu0 0.0
        %1457 = vmatpush1.msra.mxu0 %v1424
        %1458 = vmatprep.subr.mxu0 0.0
        %1459 = vmatpush1.msra.mxu0 %v1425
        %1460 = vmatprep.subr.mxu0 0.0
        %1461 = vmatpush1.msra.mxu0 %v1426
        %1462 = vmatprep.subr.mxu0 0.0
        %1463 = vmatpush1.msra.mxu0 %v1427
        %1464 = vmatprep.subr.mxu0 0.0
        %1465 = vmatpush1.msra.mxu0 0.0
        %1466 = vmatprep.subr.mxu0 0.0
        %1467 = vmatpush1.msra.mxu0 0.0
        %1468 = vmatprep.subr.mxu0 0.0
        %1469 = vmatpush1.msra.mxu0 0.0
        %1470 = vmatprep.subr.mxu0 0.0
        %1471 = vmatpush1.msra.mxu0 0.0
        %1472 = vmatprep.subr.mxu0 0.0
        %1473 = vmatpush1.msra.mxu0 0.0
        %1474 = vmatprep.subr.mxu0 0.0
        %1475 = vmatpush1.msra.mxu0 0.0
        %1476 = vmatprep.subr.mxu0 0.0
        %1477 = vmatpush1.msra.mxu0 0.0
        %1478 = vmatprep.subr.mxu0 0.0
        %1479 = vmatpush1.msra.mxu0 0.0
        %1480 = vmatprep.subr.mxu0 0.0
        %1481 = vmatpush1.msra.mxu0 0.0
        %1482 = vmatprep.subr.mxu0 0.0
        %1483 = vmatpush1.msra.mxu0 0.0
        %1484 = vmatprep.subr.mxu0 0.0
        %1485 = vmatpush1.msra.mxu0 0.0
        %1486 = vmatprep.subr.mxu0 0.0
        %1487 = vmatpush1.msra.mxu0 0.0
        %1488 = vmatprep.subr.mxu0 0.0
        %1489 = vmatpush1.msra.mxu0 0.0
        %1490 = vmatprep.subr.mxu0 0.0
        %1491 = vmatpush1.msra.mxu0 0.0
        %1492 = vmatprep.subr.mxu0 0.0
        %1493 = vmatpush1.msra.mxu0 0.0
        %1494 = vmatprep.subr.mxu0 0.0
        %1495 = vmatpush1.msra.mxu0 0.0
        %1496 = vmatprep.subr.mxu0 0.0
        %1497 = vmatpush1.msra.mxu0 0.0
        %1498 = vmatprep.subr.mxu0 0.0
        %1499 = vmatpush1.msra.mxu0 0.0
        %1500 = vmatprep.subr.mxu0 0.0
        %1501 = vmatpush1.msra.mxu0 0.0
        %1502 = vmatprep.subr.mxu0 0.0
        %1503 = vmatpush1.msra.mxu0 0.0
        %1504 = vmatprep.subr.mxu0 0.0
        %1505 = vmatpush1.msra.mxu0 0.0
        %1506 = vmatprep.subr.mxu0 0.0
        %1507 = vmatpush1.msra.mxu0 0.0
        %1508 = vmatprep.subr.mxu0 0.0
        %1509 = vmatpush1.msra.mxu0 0.0
        %1510 = vmatprep.subr.mxu0 0.0
        %1511 = vmatpush1.msra.mxu0 0.0
        %1512 = vmatprep.mubr.f32.mxu0 0.0
        %1513 = vmatmul.mubr.f32.gmra.mrb[0].mxu0 %v1440
        %v1514 = vpop.f32.mrb[0].mxu0
        %v1515 = vadd.f32 0.0, %v1514
        %v1516 = vpop.f32.mrb[0].mxu0
        %1517 = vmatprep.mubr.f32.mxu0 0.0
        %1518 = vmatmul.mubr.f32.gmra.mrb[0].mxu0 %v1442
        %v1519 = vpop.f32.mrb[0].mxu0
        %v1520 = vadd.f32 0.0, %v1519
        %v1521 = vpop.f32.mrb[0].mxu0
        %1522 = vmatprep.mubr.f32.mxu0 0.0
        %1523 = vmatmul.mubr.f32.gmra.mrb[0].mxu0 %v1444
        %v1524 = vpop.f32.mrb[0].mxu0
        %v1525 = vadd.f32 0.0, %v1524
        %v1526 = vpop.f32.mrb[0].mxu0
        %1527 = vmatprep.mubr.f32.mxu0 0.0
        %1528 = vmatmul.mubr.f32.gmra.mrb[0].mxu0 %v1446
        %v1529 = vpop.f32.mrb[0].mxu0
        %v1530 = vadd.f32 0.0, %v1529
        %v1531 = vpop.f32.mrb[0].mxu0
        %1532 = vdwg.mxu0
        %v1533 = vsel %vm1439, %v1405, 0
        %v1535 = vsel %vm1439, %v1406, 0
        %v1537 = vsel %vm1439, %v1407, 0
        %v1539 = vsel %vm1439, %v1408, 0
        %1541 = vmatprep.subr.mxu0 0.0
        %1542 = vmatpush1.msra.mxu0 %v1411
        %1543 = vmatprep.subr.mxu0 0.0
        %1544 = vmatpush1.msra.mxu0 %v1412
        %1545 = vmatprep.subr.mxu0 0.0
        %1546 = vmatpush1.msra.mxu0 %v1413
        %1547 = vmatprep.subr.mxu0 0.0
        %1548 = vmatpush1.msra.mxu0 %v1414
        %1549 = vmatprep.subr.mxu0 0.0
        %1550 = vmatpush1.msra.mxu0 %v1415
        %1551 = vmatprep.subr.mxu0 0.0
        %1552 = vmatpush1.msra.mxu0 %v1416
        %1553 = vmatprep.subr.mxu0 0.0
        %1554 = vmatpush1.msra.mxu0 %v1417
        %1555 = vmatprep.subr.mxu0 0.0
        %1556 = vmatpush1.msra.mxu0 %v1418
        %1557 = vmatprep.subr.mxu0 0.0
        %1558 = vmatpush1.msra.mxu0 0.0
        %1559 = vmatprep.subr.mxu0 0.0
        %1560 = vmatpush1.msra.mxu0 0.0
        %1561 = vmatprep.subr.mxu0 0.0
        %1562 = vmatpush1.msra.mxu0 0.0
        %1563 = vmatprep.subr.mxu0 0.0
        %1564 = vmatpush1.msra.mxu0 0.0
        %1565 = vmatprep.subr.mxu0 0.0
        %1566 = vmatpush1.msra.mxu0 0.0
        %1567 = vmatprep.subr.mxu0 0.0
        %1568 = vmatpush1.msra.mxu0 0.0
        %1569 = vmatprep.subr.mxu0 0.0
        %1570 = vmatpush1.msra.mxu0 0.0
        %1571 = vmatprep.subr.mxu0 0.0
        %1572 = vmatpush1.msra.mxu0 0.0
        %1573 = vmatprep.subr.mxu0 0.0
        %1574 = vmatpush1.msra.mxu0 0.0
        %1575 = vmatprep.subr.mxu0 0.0
        %1576 = vmatpush1.msra.mxu0 0.0
        %1577 = vmatprep.subr.mxu0 0.0
        %1578 = vmatpush1.msra.mxu0 0.0
        %1579 = vmatprep.subr.mxu0 0.0
        %1580 = vmatpush1.msra.mxu0 0.0
        %1581 = vmatprep.subr.mxu0 0.0
        %1582 = vmatpush1.msra.mxu0 0.0
        %1583 = vmatprep.subr.mxu0 0.0
        %1584 = vmatpush1.msra.mxu0 0.0
        %1585 = vmatprep.subr.mxu0 0.0
        %1586 = vmatpush1.msra.mxu0 0.0
        %1587 = vmatprep.subr.mxu0 0.0
        %1588 = vmatpush1.msra.mxu0 0.0
        %1589 = vmatprep.subr.mxu0 0.0
        %1590 = vmatpush1.msra.mxu0 0.0
        %1591 = vmatprep.subr.mxu0 0.0
        %1592 = vmatpush1.msra.mxu0 0.0
        %1593 = vmatprep.subr.mxu0 0.0
        %1594 = vmatpush1.msra.mxu0 0.0
        %1595 = vmatprep.subr.mxu0 0.0
        %1596 = vmatpush1.msra.mxu0 0.0
        %1597 = vmatprep.subr.mxu0 0.0
        %1598 = vmatpush1.msra.mxu0 0.0
        %1599 = vmatprep.subr.mxu0 0.0
        %1600 = vmatpush1.msra.mxu0 0.0
        %1601 = vmatprep.subr.mxu0 0.0
        %1602 = vmatpush1.msra.mxu0 0.0
        %1603 = vmatprep.subr.mxu0 0.0
        %1604 = vmatpush1.msra.mxu0 0.0
        %1605 = vmatprep.mubr.f32.mxu0 0.0
        %1606 = vmatmul.mubr.f32.gmra.mrb[0].mxu0 %v1533
        %v1607 = vpop.f32.mrb[0].mxu0
        %v1608 = vadd.f32 %v1515, %v1607
        %v1609 = vpop.f32.mrb[0].mxu0
        %1610 = vmatprep.mubr.f32.mxu0 0.0
        %1611 = vmatmul.mubr.f32.gmra.mrb[0].mxu0 %v1535
        %v1612 = vpop.f32.mrb[0].mxu0
        %v1613 = vadd.f32 %v1520, %v1612
        %v1614 = vpop.f32.mrb[0].mxu0
        %1615 = vmatprep.mubr.f32.mxu0 0.0
        %1616 = vmatmul.mubr.f32.gmra.mrb[0].mxu0 %v1537
        %v1617 = vpop.f32.mrb[0].mxu0
        %v1618 = vadd.f32 %v1525, %v1617
        %v1619 = vpop.f32.mrb[0].mxu0
        %1620 = vmatprep.mubr.f32.mxu0 0.0
        %1621 = vmatmul.mubr.f32.gmra.mrb[0].mxu0 %v1539
        %v1622 = vpop.f32.mrb[0].mxu0
        %v1623 = vadd.f32 %v1530, %v1622
        %v1624 = vpop.f32.mrb[0].mxu0
        %1625 = vdwg.mxu0
        %s1626 = scalar_lea.vmem %s3, 128
        %v1627 = vld [vmem:[%s1626] sm:$0xff]
        %v1628 = vld [vmem:[%s1626 + $0x8] sm:$0xff]
        %v1629 = vld [vmem:[%s1626 + $0x10] sm:$0xff]
        %v1630 = vld [vmem:[%s1626 + $0x18] sm:$0xff]
        %v1631 = vld [vmem:[%s1626 + $0x20] sm:$0xff]
        %v1632 = vld [vmem:[%s1626 + $0x28] sm:$0xff]
        %v1633 = vld [vmem:[%s1626 + $0x30] sm:$0xff]
        %v1634 = vld [vmem:[%s1626 + $0x38] sm:$0xff]
        %vm1635 = vcmask 1045504
        %v1636 = vrot.slane %v1405, 2
        %v1637 = vrot.slane %v1406, 2
        %v1638 = vsel %vm1635, %v1636, %v1637
        %v1639 = vrot.slane %v1407, 2
        %v1640 = vsel %vm1635, %v1637, %v1639
        %v1641 = vrot.slane %v1408, 2
        %v1642 = vsel %vm1635, %v1639, %v1641
        %v1643 = vsel %vm1439, %v1638, 0
        %v1645 = vsel %vm1439, %v1640, 0
        %v1647 = vsel %vm1439, %v1642, 0
        %v1649 = vsel %vm1439, %v1641, 0
        %1651 = vmatprep.subr.mxu0 0.0
        %1652 = vmatpush1.msra.mxu0 %v1627
        %1653 = vmatprep.subr.mxu0 0.0
        %1654 = vmatpush1.msra.mxu0 %v1628
        %1655 = vmatprep.subr.mxu0 0.0
        %1656 = vmatpush1.msra.mxu0 %v1629
        %1657 = vmatprep.subr.mxu0 0.0
        %1658 = vmatpush1.msra.mxu0 %v1630
        %1659 = vmatprep.subr.mxu0 0.0
        %1660 = vmatpush1.msra.mxu0 %v1631
        %1661 = vmatprep.subr.mxu0 0.0
        %1662 = vmatpush1.msra.mxu0 %v1632
        %1663 = vmatprep.subr.mxu0 0.0
        %1664 = vmatpush1.msra.mxu0 %v1633
        %1665 = vmatprep.subr.mxu0 0.0
        %1666 = vmatpush1.msra.mxu0 %v1634
        %1667 = vmatprep.subr.mxu0 0.0
        %1668 = vmatpush1.msra.mxu0 0.0
        %1669 = vmatprep.subr.mxu0 0.0
        %1670 = vmatpush1.msra.mxu0 0.0
        %1671 = vmatprep.subr.mxu0 0.0
        %1672 = vmatpush1.msra.mxu0 0.0
        %1673 = vmatprep.subr.mxu0 0.0
        %1674 = vmatpush1.msra.mxu0 0.0
        %1675 = vmatprep.subr.mxu0 0.0
        %1676 = vmatpush1.msra.mxu0 0.0
        %1677 = vmatprep.subr.mxu0 0.0
        %1678 = vmatpush1.msra.mxu0 0.0
        %1679 = vmatprep.subr.mxu0 0.0
        %1680 = vmatpush1.msra.mxu0 0.0
        %1681 = vmatprep.subr.mxu0 0.0
        %1682 = vmatpush1.msra.mxu0 0.0
        %1683 = vmatprep.subr.mxu0 0.0
        %1684 = vmatpush1.msra.mxu0 0.0
        %1685 = vmatprep.subr.mxu0 0.0
        %1686 = vmatpush1.msra.mxu0 0.0
        %1687 = vmatprep.subr.mxu0 0.0
        %1688 = vmatpush1.msra.mxu0 0.0
        %1689 = vmatprep.subr.mxu0 0.0
        %1690 = vmatpush1.msra.mxu0 0.0
        %1691 = vmatprep.subr.mxu0 0.0
        %1692 = vmatpush1.msra.mxu0 0.0
        %1693 = vmatprep.subr.mxu0 0.0
        %1694 = vmatpush1.msra.mxu0 0.0
        %1695 = vmatprep.subr.mxu0 0.0
        %1696 = vmatpush1.msra.mxu0 0.0
        %1697 = vmatprep.subr.mxu0 0.0
        %1698 = vmatpush1.msra.mxu0 0.0
        %1699 = vmatprep.subr.mxu0 0.0
        %1700 = vmatpush1.msra.mxu0 0.0
        %1701 = vmatprep.subr.mxu0 0.0
        %1702 = vmatpush1.msra.mxu0 0.0
        %1703 = vmatprep.subr.mxu0 0.0
        %1704 = vmatpush1.msra.mxu0 0.0
        %1705 = vmatprep.subr.mxu0 0.0
        %1706 = vmatpush1.msra.mxu0 0.0
        %1707 = vmatprep.subr.mxu0 0.0
        %1708 = vmatpush1.msra.mxu0 0.0
        %1709 = vmatprep.subr.mxu0 0.0
        %1710 = vmatpush1.msra.mxu0 0.0
        %1711 = vmatprep.subr.mxu0 0.0
        %1712 = vmatpush1.msra.mxu0 0.0
        %1713 = vmatprep.subr.mxu0 0.0
        %1714 = vmatpush1.msra.mxu0 0.0
        %1715 = vmatprep.mubr.f32.mxu0 0.0
        %1716 = vmatmul.mubr.f32.gmra.mrb[0].mxu0 %v1643
        %v1717 = vpop.f32.mrb[0].mxu0
        %v1718 = vadd.f32 0.0, %v1717
        %v1719 = vpop.f32.mrb[0].mxu0
        %1720 = vmatprep.mubr.f32.mxu0 0.0
        %1721 = vmatmul.mubr.f32.gmra.mrb[0].mxu0 %v1645
        %v1722 = vpop.f32.mrb[0].mxu0
        %v1723 = vadd.f32 0.0, %v1722
        %v1724 = vpop.f32.mrb[0].mxu0
        %1725 = vmatprep.mubr.f32.mxu0 0.0
        %1726 = vmatmul.mubr.f32.gmra.mrb[0].mxu0 %v1647
        %v1727 = vpop.f32.mrb[0].mxu0
        %v1728 = vadd.f32 0.0, %v1727
        %v1729 = vpop.f32.mrb[0].mxu0
        %1730 = vmatprep.mubr.f32.mxu0 0.0
        %1731 = vmatmul.mubr.f32.gmra.mrb[0].mxu0 %v1649
        %v1732 = vpop.f32.mrb[0].mxu0
        %v1733 = vadd.f32 0.0, %v1732
        %v1734 = vpop.f32.mrb[0].mxu0
        %1735 = vdwg.mxu0
        %v1736 = vadd.f32 %v1608, %v1718
        %v1737 = vadd.f32 %v1613, %v1723
        %v1738 = vadd.f32 %v1618, %v1728
        %v1739 = vadd.f32 %v1623, %v1733
        %s1740 = scalar_lea.vmem %s3, 192
        %v1741 = vld [vmem:[%s1740] sm:$0xff]
        %v1742 = vld [vmem:[%s1740 + $0x8] sm:$0xff]
        %v1743 = vld [vmem:[%s1740 + $0x10] sm:$0xff]
        %v1744 = vld [vmem:[%s1740 + $0x18] sm:$0xff]
        %v1745 = vld [vmem:[%s1740 + $0x20] sm:$0xff]
        %v1746 = vld [vmem:[%s1740 + $0x28] sm:$0xff]
        %v1747 = vld [vmem:[%s1740 + $0x30] sm:$0xff]
        %v1748 = vld [vmem:[%s1740 + $0x38] sm:$0xff]
        %v1749 = vrot.slane %v1405, 7
        %v1750 = vrot.slane %v1406, 7
        %v1751 = vsel %vm600, %v1749, %v1750
        %v1752 = vrot.slane %v1407, 7
        %v1753 = vsel %vm600, %v1750, %v1752
        %v1754 = vrot.slane %v1408, 7
        %v1755 = vsel %vm600, %v1752, %v1754
        %v1756 = vsel %vm1439, %v1751, 0
        %v1758 = vsel %vm1439, %v1753, 0
        %v1760 = vsel %vm1439, %v1755, 0
        %v1762 = vsel %vm1439, %v1754, 0
        %1764 = vmatprep.subr.mxu0 0.0
        %1765 = vmatpush1.msra.mxu0 %v1741
        %1766 = vmatprep.subr.mxu0 0.0
        %1767 = vmatpush1.msra.mxu0 %v1742
        %1768 = vmatprep.subr.mxu0 0.0
        %1769 = vmatpush1.msra.mxu0 %v1743
        %1770 = vmatprep.subr.mxu0 0.0
        %1771 = vmatpush1.msra.mxu0 %v1744
        %1772 = vmatprep.subr.mxu0 0.0
        %1773 = vmatpush1.msra.mxu0 %v1745
        %1774 = vmatprep.subr.mxu0 0.0
        %1775 = vmatpush1.msra.mxu0 %v1746
        %1776 = vmatprep.subr.mxu0 0.0
        %1777 = vmatpush1.msra.mxu0 %v1747
        %1778 = vmatprep.subr.mxu0 0.0
        %1779 = vmatpush1.msra.mxu0 %v1748
        %1780 = vmatprep.subr.mxu0 0.0
        %1781 = vmatpush1.msra.mxu0 0.0
        %1782 = vmatprep.subr.mxu0 0.0
        %1783 = vmatpush1.msra.mxu0 0.0
        %1784 = vmatprep.subr.mxu0 0.0
        %1785 = vmatpush1.msra.mxu0 0.0
        %1786 = vmatprep.subr.mxu0 0.0
        %1787 = vmatpush1.msra.mxu0 0.0
        %1788 = vmatprep.subr.mxu0 0.0
        %1789 = vmatpush1.msra.mxu0 0.0
        %1790 = vmatprep.subr.mxu0 0.0
        %1791 = vmatpush1.msra.mxu0 0.0
        %1792 = vmatprep.subr.mxu0 0.0
        %1793 = vmatpush1.msra.mxu0 0.0
        %1794 = vmatprep.subr.mxu0 0.0
        %1795 = vmatpush1.msra.mxu0 0.0
        %1796 = vmatprep.subr.mxu0 0.0
        %1797 = vmatpush1.msra.mxu0 0.0
        %1798 = vmatprep.subr.mxu0 0.0
        %1799 = vmatpush1.msra.mxu0 0.0
        %1800 = vmatprep.subr.mxu0 0.0
        %1801 = vmatpush1.msra.mxu0 0.0
        %1802 = vmatprep.subr.mxu0 0.0
        %1803 = vmatpush1.msra.mxu0 0.0
        %1804 = vmatprep.subr.mxu0 0.0
        %1805 = vmatpush1.msra.mxu0 0.0
        %1806 = vmatprep.subr.mxu0 0.0
        %1807 = vmatpush1.msra.mxu0 0.0
        %1808 = vmatprep.subr.mxu0 0.0
        %1809 = vmatpush1.msra.mxu0 0.0
        %1810 = vmatprep.subr.mxu0 0.0
        %1811 = vmatpush1.msra.mxu0 0.0
        %1812 = vmatprep.subr.mxu0 0.0
        %1813 = vmatpush1.msra.mxu0 0.0
        %1814 = vmatprep.subr.mxu0 0.0
        %1815 = vmatpush1.msra.mxu0 0.0
        %1816 = vmatprep.subr.mxu0 0.0
        %1817 = vmatpush1.msra.mxu0 0.0
        %1818 = vmatprep.subr.mxu0 0.0
        %1819 = vmatpush1.msra.mxu0 0.0
        %1820 = vmatprep.subr.mxu0 0.0
        %1821 = vmatpush1.msra.mxu0 0.0
        %1822 = vmatprep.subr.mxu0 0.0
        %1823 = vmatpush1.msra.mxu0 0.0
        %1824 = vmatprep.subr.mxu0 0.0
        %1825 = vmatpush1.msra.mxu0 0.0
        %1826 = vmatprep.subr.mxu0 0.0
        %1827 = vmatpush1.msra.mxu0 0.0
        %1828 = vmatprep.mubr.f32.mxu0 0.0
        %1829 = vmatmul.mubr.f32.gmra.mrb[0].mxu0 %v1756
        %v1830 = vpop.f32.mrb[0].mxu0
        %v1831 = vadd.f32 0.0, %v1830
        %v1832 = vpop.f32.mrb[0].mxu0
        %1833 = vmatprep.mubr.f32.mxu0 0.0
        %1834 = vmatmul.mubr.f32.gmra.mrb[0].mxu0 %v1758
        %v1835 = vpop.f32.mrb[0].mxu0
        %v1836 = vadd.f32 0.0, %v1835
        %v1837 = vpop.f32.mrb[0].mxu0
        %1838 = vmatprep.mubr.f32.mxu0 0.0
        %1839 = vmatmul.mubr.f32.gmra.mrb[0].mxu0 %v1760
        %v1840 = vpop.f32.mrb[0].mxu0
        %v1841 = vadd.f32 0.0, %v1840
        %v1842 = vpop.f32.mrb[0].mxu0
        %1843 = vmatprep.mubr.f32.mxu0 0.0
        %1844 = vmatmul.mubr.f32.gmra.mrb[0].mxu0 %v1762
        %v1845 = vpop.f32.mrb[0].mxu0
        %v1846 = vadd.f32 0.0, %v1845
        %v1847 = vpop.f32.mrb[0].mxu0
        %1848 = vdwg.mxu0
        %v1849 = vadd.f32 %v1736, %v1831
        %v1850 = vadd.f32 %v1737, %v1836
        %v1851 = vadd.f32 %v1738, %v1841
        %v1852 = vadd.f32 %v1739, %v1846
        %s1853 = scalar_lea.vmem %s3, 256
        %v1854 = vld [vmem:[%s1853] sm:$0xff]
        %v1855 = vld [vmem:[%s1853 + $0x8] sm:$0xff]
        %v1856 = vld [vmem:[%s1853 + $0x10] sm:$0xff]
        %v1857 = vld [vmem:[%s1853 + $0x18] sm:$0xff]
        %v1858 = vld [vmem:[%s1853 + $0x20] sm:$0xff]
        %v1859 = vld [vmem:[%s1853 + $0x28] sm:$0xff]
        %v1860 = vld [vmem:[%s1853 + $0x30] sm:$0xff]
        %v1861 = vld [vmem:[%s1853 + $0x38] sm:$0xff]
        %v1863 = vsel %vm1439, %v1409, 0
        %1865 = vmatprep.subr.mxu0 0.0
        %1866 = vmatpush1.msra.mxu0 %v1854
        %1867 = vmatprep.subr.mxu0 0.0
        %1868 = vmatpush1.msra.mxu0 %v1855
        %1869 = vmatprep.subr.mxu0 0.0
        %1870 = vmatpush1.msra.mxu0 %v1856
        %1871 = vmatprep.subr.mxu0 0.0
        %1872 = vmatpush1.msra.mxu0 %v1857
        %1873 = vmatprep.subr.mxu0 0.0
        %1874 = vmatpush1.msra.mxu0 %v1858
        %1875 = vmatprep.subr.mxu0 0.0
        %1876 = vmatpush1.msra.mxu0 %v1859
        %1877 = vmatprep.subr.mxu0 0.0
        %1878 = vmatpush1.msra.mxu0 %v1860
        %1879 = vmatprep.subr.mxu0 0.0
        %1880 = vmatpush1.msra.mxu0 %v1861
        %1881 = vmatprep.subr.mxu0 0.0
        %1882 = vmatpush1.msra.mxu0 0.0
        %1883 = vmatprep.subr.mxu0 0.0
        %1884 = vmatpush1.msra.mxu0 0.0
        %1885 = vmatprep.subr.mxu0 0.0
        %1886 = vmatpush1.msra.mxu0 0.0
        %1887 = vmatprep.subr.mxu0 0.0
        %1888 = vmatpush1.msra.mxu0 0.0
        %1889 = vmatprep.subr.mxu0 0.0
        %1890 = vmatpush1.msra.mxu0 0.0
        %1891 = vmatprep.subr.mxu0 0.0
        %1892 = vmatpush1.msra.mxu0 0.0
        %1893 = vmatprep.subr.mxu0 0.0
        %1894 = vmatpush1.msra.mxu0 0.0
        %1895 = vmatprep.subr.mxu0 0.0
        %1896 = vmatpush1.msra.mxu0 0.0
        %1897 = vmatprep.subr.mxu0 0.0
        %1898 = vmatpush1.msra.mxu0 0.0
        %1899 = vmatprep.subr.mxu0 0.0
        %1900 = vmatpush1.msra.mxu0 0.0
        %1901 = vmatprep.subr.mxu0 0.0
        %1902 = vmatpush1.msra.mxu0 0.0
        %1903 = vmatprep.subr.mxu0 0.0
        %1904 = vmatpush1.msra.mxu0 0.0
        %1905 = vmatprep.subr.mxu0 0.0
        %1906 = vmatpush1.msra.mxu0 0.0
        %1907 = vmatprep.subr.mxu0 0.0
        %1908 = vmatpush1.msra.mxu0 0.0
        %1909 = vmatprep.subr.mxu0 0.0
        %1910 = vmatpush1.msra.mxu0 0.0
        %1911 = vmatprep.subr.mxu0 0.0
        %1912 = vmatpush1.msra.mxu0 0.0
        %1913 = vmatprep.subr.mxu0 0.0
        %1914 = vmatpush1.msra.mxu0 0.0
        %1915 = vmatprep.subr.mxu0 0.0
        %1916 = vmatpush1.msra.mxu0 0.0
        %1917 = vmatprep.subr.mxu0 0.0
        %1918 = vmatpush1.msra.mxu0 0.0
        %1919 = vmatprep.subr.mxu0 0.0
        %1920 = vmatpush1.msra.mxu0 0.0
        %1921 = vmatprep.subr.mxu0 0.0
        %1922 = vmatpush1.msra.mxu0 0.0
        %1923 = vmatprep.subr.mxu0 0.0
        %1924 = vmatpush1.msra.mxu0 0.0
        %1925 = vmatprep.subr.mxu0 0.0
        %1926 = vmatpush1.msra.mxu0 0.0
        %1927 = vmatprep.subr.mxu0 0.0
        %1928 = vmatpush1.msra.mxu0 0.0
        %1929 = vmatprep.mubr.f32.mxu0 0.0
        %1930 = vmatmul.mubr.f32.gmra.mrb[0].mxu0 %v1535
        %v1931 = vpop.f32.mrb[0].mxu0
        %v1932 = vadd.f32 0.0, %v1931
        %v1933 = vpop.f32.mrb[0].mxu0
        %1934 = vmatprep.mubr.f32.mxu0 0.0
        %1935 = vmatmul.mubr.f32.gmra.mrb[0].mxu0 %v1537
        %v1936 = vpop.f32.mrb[0].mxu0
        %v1937 = vadd.f32 0.0, %v1936
        %v1938 = vpop.f32.mrb[0].mxu0
        %1939 = vmatprep.mubr.f32.mxu0 0.0
        %1940 = vmatmul.mubr.f32.gmra.mrb[0].mxu0 %v1539
        %v1941 = vpop.f32.mrb[0].mxu0
        %v1942 = vadd.f32 0.0, %v1941
        %v1943 = vpop.f32.mrb[0].mxu0
        %1944 = vmatprep.mubr.f32.mxu0 0.0
        %1945 = vmatmul.mubr.f32.gmra.mrb[0].mxu0 %v1863
        %v1946 = vpop.f32.mrb[0].mxu0
        %v1947 = vadd.f32 0.0, %v1946
        %v1948 = vpop.f32.mrb[0].mxu0
        %1949 = vdwg.mxu0
        %v1950 = vadd.f32 %v1849, %v1932
        %v1951 = vadd.f32 %v1850, %v1937
        %v1952 = vadd.f32 %v1851, %v1942
        %v1953 = vadd.f32 %v1852, %v1947
        %s1954 = scalar_lea.vmem %s3, 320
        %v1955 = vld [vmem:[%s1954] sm:$0xff]
        %v1956 = vld [vmem:[%s1954 + $0x8] sm:$0xff]
        %v1957 = vld [vmem:[%s1954 + $0x10] sm:$0xff]
        %v1958 = vld [vmem:[%s1954 + $0x18] sm:$0xff]
        %v1959 = vld [vmem:[%s1954 + $0x20] sm:$0xff]
        %v1960 = vld [vmem:[%s1954 + $0x28] sm:$0xff]
        %v1961 = vld [vmem:[%s1954 + $0x30] sm:$0xff]
        %v1962 = vld [vmem:[%s1954 + $0x38] sm:$0xff]
        %v1963 = vrot.slane %v1409, 1
        %v1964 = vsel %vm422, %v1437, %v1963
        %v1965 = vsel %vm1439, %v1964, 0
        %v1967 = vsel %vm1439, %v1963, 0
        %1969 = vmatprep.subr.mxu0 0.0
        %1970 = vmatpush1.msra.mxu0 %v1955
        %1971 = vmatprep.subr.mxu0 0.0
        %1972 = vmatpush1.msra.mxu0 %v1956
        %1973 = vmatprep.subr.mxu0 0.0
        %1974 = vmatpush1.msra.mxu0 %v1957
        %1975 = vmatprep.subr.mxu0 0.0
        %1976 = vmatpush1.msra.mxu0 %v1958
        %1977 = vmatprep.subr.mxu0 0.0
        %1978 = vmatpush1.msra.mxu0 %v1959
        %1979 = vmatprep.subr.mxu0 0.0
        %1980 = vmatpush1.msra.mxu0 %v1960
        %1981 = vmatprep.subr.mxu0 0.0
        %1982 = vmatpush1.msra.mxu0 %v1961
        %1983 = vmatprep.subr.mxu0 0.0
        %1984 = vmatpush1.msra.mxu0 %v1962
        %1985 = vmatprep.subr.mxu0 0.0
        %1986 = vmatpush1.msra.mxu0 0.0
        %1987 = vmatprep.subr.mxu0 0.0
        %1988 = vmatpush1.msra.mxu0 0.0
        %1989 = vmatprep.subr.mxu0 0.0
        %1990 = vmatpush1.msra.mxu0 0.0
        %1991 = vmatprep.subr.mxu0 0.0
        %1992 = vmatpush1.msra.mxu0 0.0
        %1993 = vmatprep.subr.mxu0 0.0
        %1994 = vmatpush1.msra.mxu0 0.0
        %1995 = vmatprep.subr.mxu0 0.0
        %1996 = vmatpush1.msra.mxu0 0.0
        %1997 = vmatprep.subr.mxu0 0.0
        %1998 = vmatpush1.msra.mxu0 0.0
        %1999 = vmatprep.subr.mxu0 0.0
        %2000 = vmatpush1.msra.mxu0 0.0
        %2001 = vmatprep.subr.mxu0 0.0
        %2002 = vmatpush1.msra.mxu0 0.0
        %2003 = vmatprep.subr.mxu0 0.0
        %2004 = vmatpush1.msra.mxu0 0.0
        %2005 = vmatprep.subr.mxu0 0.0
        %2006 = vmatpush1.msra.mxu0 0.0
        %2007 = vmatprep.subr.mxu0 0.0
        %2008 = vmatpush1.msra.mxu0 0.0
        %2009 = vmatprep.subr.mxu0 0.0
        %2010 = vmatpush1.msra.mxu0 0.0
        %2011 = vmatprep.subr.mxu0 0.0
        %2012 = vmatpush1.msra.mxu0 0.0
        %2013 = vmatprep.subr.mxu0 0.0
        %2014 = vmatpush1.msra.mxu0 0.0
        %2015 = vmatprep.subr.mxu0 0.0
        %2016 = vmatpush1.msra.mxu0 0.0
        %2017 = vmatprep.subr.mxu0 0.0
        %2018 = vmatpush1.msra.mxu0 0.0
        %2019 = vmatprep.subr.mxu0 0.0
        %2020 = vmatpush1.msra.mxu0 0.0
        %2021 = vmatprep.subr.mxu0 0.0
        %2022 = vmatpush1.msra.mxu0 0.0
        %2023 = vmatprep.subr.mxu0 0.0
        %2024 = vmatpush1.msra.mxu0 0.0
        %2025 = vmatprep.subr.mxu0 0.0
        %2026 = vmatpush1.msra.mxu0 0.0
        %2027 = vmatprep.subr.mxu0 0.0
        %2028 = vmatpush1.msra.mxu0 0.0
        %2029 = vmatprep.subr.mxu0 0.0
        %2030 = vmatpush1.msra.mxu0 0.0
        %2031 = vmatprep.subr.mxu0 0.0
        %2032 = vmatpush1.msra.mxu0 0.0
        %2033 = vmatprep.mubr.f32.mxu0 0.0
        %2034 = vmatmul.mubr.f32.gmra.mrb[0].mxu0 %v1442
        %v2035 = vpop.f32.mrb[0].mxu0
        %v2036 = vadd.f32 0.0, %v2035
        %v2037 = vpop.f32.mrb[0].mxu0
        %2038 = vmatprep.mubr.f32.mxu0 0.0
        %2039 = vmatmul.mubr.f32.gmra.mrb[0].mxu0 %v1444
        %v2040 = vpop.f32.mrb[0].mxu0
        %v2041 = vadd.f32 0.0, %v2040
        %v2042 = vpop.f32.mrb[0].mxu0
        %2043 = vmatprep.mubr.f32.mxu0 0.0
        %2044 = vmatmul.mubr.f32.gmra.mrb[0].mxu0 %v1965
        %v2045 = vpop.f32.mrb[0].mxu0
        %v2046 = vadd.f32 0.0, %v2045
        %v2047 = vpop.f32.mrb[0].mxu0
        %2048 = vmatprep.mubr.f32.mxu0 0.0
        %2049 = vmatmul.mubr.f32.gmra.mrb[0].mxu0 %v1967
        %v2050 = vpop.f32.mrb[0].mxu0
        %v2051 = vadd.f32 0.0, %v2050
        %v2052 = vpop.f32.mrb[0].mxu0
        %2053 = vdwg.mxu0
        %v2054 = vadd.f32 %v1950, %v2036
        %v2055 = vadd.f32 %v1951, %v2041
        %v2056 = vadd.f32 %v1952, %v2046
        %v2057 = vadd.f32 %v1953, %v2051
        %s2058 = scalar_lea.vmem %s3, 384
        %v2059 = vld [vmem:[%s2058] sm:$0xff]
        %v2060 = vld [vmem:[%s2058 + $0x8] sm:$0xff]
        %v2061 = vld [vmem:[%s2058 + $0x10] sm:$0xff]
        %v2062 = vld [vmem:[%s2058 + $0x18] sm:$0xff]
        %v2063 = vld [vmem:[%s2058 + $0x20] sm:$0xff]
        %v2064 = vld [vmem:[%s2058 + $0x28] sm:$0xff]
        %v2065 = vld [vmem:[%s2058 + $0x30] sm:$0xff]
        %v2066 = vld [vmem:[%s2058 + $0x38] sm:$0xff]
        %vm2067 = vcmask 1041408
        %v2068 = vrot.slane %v1406, 6
        %v2069 = vrot.slane %v1407, 6
        %v2070 = vsel %vm2067, %v2068, %v2069
        %v2071 = vrot.slane %v1408, 6
        %v2072 = vsel %vm2067, %v2069, %v2071
        %v2073 = vrot.slane %v1409, 6
        %v2074 = vsel %vm2067, %v2071, %v2073
        %v2075 = vsel %vm1439, %v2070, 0
        %v2077 = vsel %vm1439, %v2072, 0
        %v2079 = vsel %vm1439, %v2074, 0
        %v2081 = vsel %vm1439, %v2073, 0
        %2083 = vmatprep.subr.mxu0 0.0
        %2084 = vmatpush1.msra.mxu0 %v2059
        %2085 = vmatprep.subr.mxu0 0.0
        %2086 = vmatpush1.msra.mxu0 %v2060
        %2087 = vmatprep.subr.mxu0 0.0
        %2088 = vmatpush1.msra.mxu0 %v2061
        %2089 = vmatprep.subr.mxu0 0.0
        %2090 = vmatpush1.msra.mxu0 %v2062
        %2091 = vmatprep.subr.mxu0 0.0
        %2092 = vmatpush1.msra.mxu0 %v2063
        %2093 = vmatprep.subr.mxu0 0.0
        %2094 = vmatpush1.msra.mxu0 %v2064
        %2095 = vmatprep.subr.mxu0 0.0
        %2096 = vmatpush1.msra.mxu0 %v2065
        %2097 = vmatprep.subr.mxu0 0.0
        %2098 = vmatpush1.msra.mxu0 %v2066
        %2099 = vmatprep.subr.mxu0 0.0
        %2100 = vmatpush1.msra.mxu0 0.0
        %2101 = vmatprep.subr.mxu0 0.0
        %2102 = vmatpush1.msra.mxu0 0.0
        %2103 = vmatprep.subr.mxu0 0.0
        %2104 = vmatpush1.msra.mxu0 0.0
        %2105 = vmatprep.subr.mxu0 0.0
        %2106 = vmatpush1.msra.mxu0 0.0
        %2107 = vmatprep.subr.mxu0 0.0
        %2108 = vmatpush1.msra.mxu0 0.0
        %2109 = vmatprep.subr.mxu0 0.0
        %2110 = vmatpush1.msra.mxu0 0.0
        %2111 = vmatprep.subr.mxu0 0.0
        %2112 = vmatpush1.msra.mxu0 0.0
        %2113 = vmatprep.subr.mxu0 0.0
        %2114 = vmatpush1.msra.mxu0 0.0
        %2115 = vmatprep.subr.mxu0 0.0
        %2116 = vmatpush1.msra.mxu0 0.0
        %2117 = vmatprep.subr.mxu0 0.0
        %2118 = vmatpush1.msra.mxu0 0.0
        %2119 = vmatprep.subr.mxu0 0.0
        %2120 = vmatpush1.msra.mxu0 0.0
        %2121 = vmatprep.subr.mxu0 0.0
        %2122 = vmatpush1.msra.mxu0 0.0
        %2123 = vmatprep.subr.mxu0 0.0
        %2124 = vmatpush1.msra.mxu0 0.0
        %2125 = vmatprep.subr.mxu0 0.0
        %2126 = vmatpush1.msra.mxu0 0.0
        %2127 = vmatprep.subr.mxu0 0.0
        %2128 = vmatpush1.msra.mxu0 0.0
        %2129 = vmatprep.subr.mxu0 0.0
        %2130 = vmatpush1.msra.mxu0 0.0
        %2131 = vmatprep.subr.mxu0 0.0
        %2132 = vmatpush1.msra.mxu0 0.0
        %2133 = vmatprep.subr.mxu0 0.0
        %2134 = vmatpush1.msra.mxu0 0.0
        %2135 = vmatprep.subr.mxu0 0.0
        %2136 = vmatpush1.msra.mxu0 0.0
        %2137 = vmatprep.subr.mxu0 0.0
        %2138 = vmatpush1.msra.mxu0 0.0
        %2139 = vmatprep.subr.mxu0 0.0
        %2140 = vmatpush1.msra.mxu0 0.0
        %2141 = vmatprep.subr.mxu0 0.0
        %2142 = vmatpush1.msra.mxu0 0.0
        %2143 = vmatprep.subr.mxu0 0.0
        %2144 = vmatpush1.msra.mxu0 0.0
        %2145 = vmatprep.subr.mxu0 0.0
        %2146 = vmatpush1.msra.mxu0 0.0
        %2147 = vmatprep.mubr.f32.mxu0 0.0
        %2148 = vmatmul.mubr.f32.gmra.mrb[0].mxu0 %v2075
        %v2149 = vpop.f32.mrb[0].mxu0
        %v2150 = vadd.f32 0.0, %v2149
        %v2151 = vpop.f32.mrb[0].mxu0
        %2152 = vmatprep.mubr.f32.mxu0 0.0
        %2153 = vmatmul.mubr.f32.gmra.mrb[0].mxu0 %v2077
        %v2154 = vpop.f32.mrb[0].mxu0
        %v2155 = vadd.f32 0.0, %v2154
        %v2156 = vpop.f32.mrb[0].mxu0
        %2157 = vmatprep.mubr.f32.mxu0 0.0
        %2158 = vmatmul.mubr.f32.gmra.mrb[0].mxu0 %v2079
        %v2159 = vpop.f32.mrb[0].mxu0
        %v2160 = vadd.f32 0.0, %v2159
        %v2161 = vpop.f32.mrb[0].mxu0
        %2162 = vmatprep.mubr.f32.mxu0 0.0
        %2163 = vmatmul.mubr.f32.gmra.mrb[0].mxu0 %v2081
        %v2164 = vpop.f32.mrb[0].mxu0
        %v2165 = vadd.f32 0.0, %v2164
        %v2166 = vpop.f32.mrb[0].mxu0
        %2167 = vdwg.mxu0
        %v2168 = vadd.f32 %v2054, %v2150
        %v2169 = vadd.f32 %v2055, %v2155
        %v2170 = vadd.f32 %v2056, %v2160
        %v2171 = vadd.f32 %v2057, %v2165
        %s2172 = scalar_lea.vmem %s3, 448
        %v2173 = vld [vmem:[%s2172] sm:$0xff]
        %v2174 = vld [vmem:[%s2172 + $0x8] sm:$0xff]
        %v2175 = vld [vmem:[%s2172 + $0x10] sm:$0xff]
        %v2176 = vld [vmem:[%s2172 + $0x18] sm:$0xff]
        %v2177 = vld [vmem:[%s2172 + $0x20] sm:$0xff]
        %v2178 = vld [vmem:[%s2172 + $0x28] sm:$0xff]
        %v2179 = vld [vmem:[%s2172 + $0x30] sm:$0xff]
        %v2180 = vld [vmem:[%s2172 + $0x38] sm:$0xff]
        %v2181 = vrot.slane %v1409, 7
        %v2182 = vsel %vm600, %v1754, %v2181
        %v2183 = vsel %vm1439, %v2182, 0
        %v2185 = vsel %vm1439, %v2181, 0
        %2187 = vmatprep.subr.mxu0 0.0
        %2188 = vmatpush1.msra.mxu0 %v2173
        %2189 = vmatprep.subr.mxu0 0.0
        %2190 = vmatpush1.msra.mxu0 %v2174
        %2191 = vmatprep.subr.mxu0 0.0
        %2192 = vmatpush1.msra.mxu0 %v2175
        %2193 = vmatprep.subr.mxu0 0.0
        %2194 = vmatpush1.msra.mxu0 %v2176
        %2195 = vmatprep.subr.mxu0 0.0
        %2196 = vmatpush1.msra.mxu0 %v2177
        %2197 = vmatprep.subr.mxu0 0.0
        %2198 = vmatpush1.msra.mxu0 %v2178
        %2199 = vmatprep.subr.mxu0 0.0
        %2200 = vmatpush1.msra.mxu0 %v2179
        %2201 = vmatprep.subr.mxu0 0.0
        %2202 = vmatpush1.msra.mxu0 %v2180
        %2203 = vmatprep.subr.mxu0 0.0
        %2204 = vmatpush1.msra.mxu0 0.0
        %2205 = vmatprep.subr.mxu0 0.0
        %2206 = vmatpush1.msra.mxu0 0.0
        %2207 = vmatprep.subr.mxu0 0.0
        %2208 = vmatpush1.msra.mxu0 0.0
        %2209 = vmatprep.subr.mxu0 0.0
        %2210 = vmatpush1.msra.mxu0 0.0
        %2211 = vmatprep.subr.mxu0 0.0
        %2212 = vmatpush1.msra.mxu0 0.0
        %2213 = vmatprep.subr.mxu0 0.0
        %2214 = vmatpush1.msra.mxu0 0.0
        %2215 = vmatprep.subr.mxu0 0.0
        %2216 = vmatpush1.msra.mxu0 0.0
        %2217 = vmatprep.subr.mxu0 0.0
        %2218 = vmatpush1.msra.mxu0 0.0
        %2219 = vmatprep.subr.mxu0 0.0
        %2220 = vmatpush1.msra.mxu0 0.0
        %2221 = vmatprep.subr.mxu0 0.0
        %2222 = vmatpush1.msra.mxu0 0.0
        %2223 = vmatprep.subr.mxu0 0.0
        %2224 = vmatpush1.msra.mxu0 0.0
        %2225 = vmatprep.subr.mxu0 0.0
        %2226 = vmatpush1.msra.mxu0 0.0
        %2227 = vmatprep.subr.mxu0 0.0
        %2228 = vmatpush1.msra.mxu0 0.0
        %2229 = vmatprep.subr.mxu0 0.0
        %2230 = vmatpush1.msra.mxu0 0.0
        %2231 = vmatprep.subr.mxu0 0.0
        %2232 = vmatpush1.msra.mxu0 0.0
        %2233 = vmatprep.subr.mxu0 0.0
        %2234 = vmatpush1.msra.mxu0 0.0
        %2235 = vmatprep.subr.mxu0 0.0
        %2236 = vmatpush1.msra.mxu0 0.0
        %2237 = vmatprep.subr.mxu0 0.0
        %2238 = vmatpush1.msra.mxu0 0.0
        %2239 = vmatprep.subr.mxu0 0.0
        %2240 = vmatpush1.msra.mxu0 0.0
        %2241 = vmatprep.subr.mxu0 0.0
        %2242 = vmatpush1.msra.mxu0 0.0
        %2243 = vmatprep.subr.mxu0 0.0
        %2244 = vmatpush1.msra.mxu0 0.0
        %2245 = vmatprep.subr.mxu0 0.0
        %2246 = vmatpush1.msra.mxu0 0.0
        %2247 = vmatprep.subr.mxu0 0.0
        %2248 = vmatpush1.msra.mxu0 0.0
        %2249 = vmatprep.subr.mxu0 0.0
        %2250 = vmatpush1.msra.mxu0 0.0
        %2251 = vmatprep.mubr.f32.mxu0 0.0
        %2252 = vmatmul.mubr.f32.gmra.mrb[0].mxu0 %v1758
        %v2253 = vpop.f32.mrb[0].mxu0
        %v2254 = vadd.f32 0.0, %v2253
        %v2255 = vpop.f32.mrb[0].mxu0
        %2256 = vmatprep.mubr.f32.mxu0 0.0
        %2257 = vmatmul.mubr.f32.gmra.mrb[0].mxu0 %v1760
        %v2258 = vpop.f32.mrb[0].mxu0
        %v2259 = vadd.f32 0.0, %v2258
        %v2260 = vpop.f32.mrb[0].mxu0
        %2261 = vmatprep.mubr.f32.mxu0 0.0
        %2262 = vmatmul.mubr.f32.gmra.mrb[0].mxu0 %v2183
        %v2263 = vpop.f32.mrb[0].mxu0
        %v2264 = vadd.f32 0.0, %v2263
        %v2265 = vpop.f32.mrb[0].mxu0
        %2266 = vmatprep.mubr.f32.mxu0 0.0
        %2267 = vmatmul.mubr.f32.gmra.mrb[0].mxu0 %v2185
        %v2268 = vpop.f32.mrb[0].mxu0
        %v2269 = vadd.f32 0.0, %v2268
        %v2270 = vpop.f32.mrb[0].mxu0
        %2271 = vdwg.mxu0
        %v2272 = vadd.f32 %v2168, %v2254
        %v2273 = vadd.f32 %v2169, %v2259
        %v2274 = vadd.f32 %v2170, %v2264
        %v2275 = vadd.f32 %v2171, %v2269
        %s2276 = scalar_lea.vmem %s3, 512
        %v2277 = vld [vmem:[%s2276] sm:$0xff]
        %v2278 = vld [vmem:[%s2276 + $0x8] sm:$0xff]
        %v2279 = vld [vmem:[%s2276 + $0x10] sm:$0xff]
        %v2280 = vld [vmem:[%s2276 + $0x18] sm:$0xff]
        %v2281 = vld [vmem:[%s2276 + $0x20] sm:$0xff]
        %v2282 = vld [vmem:[%s2276 + $0x28] sm:$0xff]
        %v2283 = vld [vmem:[%s2276 + $0x30] sm:$0xff]
        %v2284 = vld [vmem:[%s2276 + $0x38] sm:$0xff]
        %v2286 = vsel %vm1439, %v1410, 0
        %2288 = vmatprep.subr.mxu0 0.0
        %2289 = vmatpush1.msra.mxu0 %v2277
        %2290 = vmatprep.subr.mxu0 0.0
        %2291 = vmatpush1.msra.mxu0 %v2278
        %2292 = vmatprep.subr.mxu0 0.0
        %2293 = vmatpush1.msra.mxu0 %v2279
        %2294 = vmatprep.subr.mxu0 0.0
        %2295 = vmatpush1.msra.mxu0 %v2280
        %2296 = vmatprep.subr.mxu0 0.0
        %2297 = vmatpush1.msra.mxu0 %v2281
        %2298 = vmatprep.subr.mxu0 0.0
        %2299 = vmatpush1.msra.mxu0 %v2282
        %2300 = vmatprep.subr.mxu0 0.0
        %2301 = vmatpush1.msra.mxu0 %v2283
        %2302 = vmatprep.subr.mxu0 0.0
        %2303 = vmatpush1.msra.mxu0 %v2284
        %2304 = vmatprep.subr.mxu0 0.0
        %2305 = vmatpush1.msra.mxu0 0.0
        %2306 = vmatprep.subr.mxu0 0.0
        %2307 = vmatpush1.msra.mxu0 0.0
        %2308 = vmatprep.subr.mxu0 0.0
        %2309 = vmatpush1.msra.mxu0 0.0
        %2310 = vmatprep.subr.mxu0 0.0
        %2311 = vmatpush1.msra.mxu0 0.0
        %2312 = vmatprep.subr.mxu0 0.0
        %2313 = vmatpush1.msra.mxu0 0.0
        %2314 = vmatprep.subr.mxu0 0.0
        %2315 = vmatpush1.msra.mxu0 0.0
        %2316 = vmatprep.subr.mxu0 0.0
        %2317 = vmatpush1.msra.mxu0 0.0
        %2318 = vmatprep.subr.mxu0 0.0
        %2319 = vmatpush1.msra.mxu0 0.0
        %2320 = vmatprep.subr.mxu0 0.0
        %2321 = vmatpush1.msra.mxu0 0.0
        %2322 = vmatprep.subr.mxu0 0.0
        %2323 = vmatpush1.msra.mxu0 0.0
        %2324 = vmatprep.subr.mxu0 0.0
        %2325 = vmatpush1.msra.mxu0 0.0
        %2326 = vmatprep.subr.mxu0 0.0
        %2327 = vmatpush1.msra.mxu0 0.0
        %2328 = vmatprep.subr.mxu0 0.0
        %2329 = vmatpush1.msra.mxu0 0.0
        %2330 = vmatprep.subr.mxu0 0.0
        %2331 = vmatpush1.msra.mxu0 0.0
        %2332 = vmatprep.subr.mxu0 0.0
        %2333 = vmatpush1.msra.mxu0 0.0
        %2334 = vmatprep.subr.mxu0 0.0
        %2335 = vmatpush1.msra.mxu0 0.0
        %2336 = vmatprep.subr.mxu0 0.0
        %2337 = vmatpush1.msra.mxu0 0.0
        %2338 = vmatprep.subr.mxu0 0.0
        %2339 = vmatpush1.msra.mxu0 0.0
        %2340 = vmatprep.subr.mxu0 0.0
        %2341 = vmatpush1.msra.mxu0 0.0
        %2342 = vmatprep.subr.mxu0 0.0
        %2343 = vmatpush1.msra.mxu0 0.0
        %2344 = vmatprep.subr.mxu0 0.0
        %2345 = vmatpush1.msra.mxu0 0.0
        %2346 = vmatprep.subr.mxu0 0.0
        %2347 = vmatpush1.msra.mxu0 0.0
        %2348 = vmatprep.subr.mxu0 0.0
        %2349 = vmatpush1.msra.mxu0 0.0
        %2350 = vmatprep.subr.mxu0 0.0
        %2351 = vmatpush1.msra.mxu0 0.0
        %2352 = vmatprep.mubr.f32.mxu0 0.0
        %2353 = vmatmul.mubr.f32.gmra.mrb[0].mxu0 %v1537
        %v2354 = vpop.f32.mrb[0].mxu0
        %v2355 = vadd.f32 0.0, %v2354
        %v2356 = vpop.f32.mrb[0].mxu0
        %2357 = vmatprep.mubr.f32.mxu0 0.0
        %2358 = vmatmul.mubr.f32.gmra.mrb[0].mxu0 %v1539
        %v2359 = vpop.f32.mrb[0].mxu0
        %v2360 = vadd.f32 0.0, %v2359
        %v2361 = vpop.f32.mrb[0].mxu0
        %2362 = vmatprep.mubr.f32.mxu0 0.0
        %2363 = vmatmul.mubr.f32.gmra.mrb[0].mxu0 %v1863
        %v2364 = vpop.f32.mrb[0].mxu0
        %v2365 = vadd.f32 0.0, %v2364
        %v2366 = vpop.f32.mrb[0].mxu0
        %2367 = vmatprep.mubr.f32.mxu0 0.0
        %2368 = vmatmul.mubr.f32.gmra.mrb[0].mxu0 %v2286
        %v2369 = vpop.f32.mrb[0].mxu0
        %v2370 = vadd.f32 0.0, %v2369
        %v2371 = vpop.f32.mrb[0].mxu0
        %2372 = vdwg.mxu0
        %v2373 = vadd.f32 %v2272, %v2355
        %v2374 = vadd.f32 %v2273, %v2360
        %v2375 = vadd.f32 %v2274, %v2365
        %v2376 = vadd.f32 %v2275, %v2370
        %v2377 = vld [vmem:[%s4] sm:$0x1]
        %v2379 = vlaneseq
        %v2380 = vshrl.u32 %v2379, 7
        %v2381 = vsub.s32 0, %v2380
        %v2382 = vrot.slane %v2377, %v2381
        %v2384 = vadd.f32 %v2373, %v2382
        %v2385 = vadd.f32 %v2374, %v2382
        %v2386 = vadd.f32 %v2375, %v2382
        %v2387 = vadd.f32 %v2376, %v2382
        %v2388 = vmax.f32 %v2384, 0.0
        %v2389 = vmax.f32 %v2385, 0.0
        %v2390 = vmax.f32 %v2386, 0.0
        %v2391 = vmax.f32 %v2387, 0.0
        %v2392 = vld [vmem:[%s6] sm:$0x1]
        %v2394 = vrot.slane %v2388, 1
        %v2396 = vmax.f32 %v2388, %v2394
        %v2398 = vrot.slane %v2389, 1
        %v2400 = vmax.f32 %v2388, %v2398
        %v2402 = vrot.slane %v2400, 7
        %v2404 = vmax.f32 %v2396, %v2402
        %v2405 = vld [vmem:[%s5] sm:$0xff]
        %v2406 = vld [vmem:[%s5 + $0x8] sm:$0xff]
        %v2407 = vld [vmem:[%s5 + $0x10] sm:$0xff]
        %v2408 = vld [vmem:[%s5 + $0x18] sm:$0xff]
        %vm2409 = vcmask 261120
        %v2411 = vsel %vm2409, %v2404, 0
        %2413 = vmatprep.subr.mxu0 0.0
        %2414 = vmatpush1.msra.mxu0 %v2405
        %2415 = vmatprep.subr.mxu0 0.0
        %2416 = vmatpush1.msra.mxu0 %v2406
        %2417 = vmatprep.subr.mxu0 0.0
        %2418 = vmatpush1.msra.mxu0 %v2407
        %2419 = vmatprep.subr.mxu0 0.0
        %2420 = vmatpush1.msra.mxu0 %v2408
        %2421 = vmatprep.subr.mxu0 0.0
        %2422 = vmatpush1.msra.mxu0 0.0
        %2423 = vmatprep.subr.mxu0 0.0
        %2424 = vmatpush1.msra.mxu0 0.0
        %2425 = vmatprep.subr.mxu0 0.0
        %2426 = vmatpush1.msra.mxu0 0.0
        %2427 = vmatprep.subr.mxu0 0.0
        %2428 = vmatpush1.msra.mxu0 0.0
        %2429 = vmatprep.subr.mxu0 0.0
        %2430 = vmatpush1.msra.mxu0 0.0
        %2431 = vmatprep.subr.mxu0 0.0
        %2432 = vmatpush1.msra.mxu0 0.0
        %2433 = vmatprep.subr.mxu0 0.0
        %2434 = vmatpush1.msra.mxu0 0.0
        %2435 = vmatprep.subr.mxu0 0.0
        %2436 = vmatpush1.msra.mxu0 0.0
        %2437 = vmatprep.subr.mxu0 0.0
        %2438 = vmatpush1.msra.mxu0 0.0
        %2439 = vmatprep.subr.mxu0 0.0
        %2440 = vmatpush1.msra.mxu0 0.0
        %2441 = vmatprep.subr.mxu0 0.0
        %2442 = vmatpush1.msra.mxu0 0.0
        %2443 = vmatprep.subr.mxu0 0.0
        %2444 = vmatpush1.msra.mxu0 0.0
        %2445 = vmatprep.subr.mxu0 0.0
        %2446 = vmatpush1.msra.mxu0 0.0
        %2447 = vmatprep.subr.mxu0 0.0
        %2448 = vmatpush1.msra.mxu0 0.0
        %2449 = vmatprep.subr.mxu0 0.0
        %2450 = vmatpush1.msra.mxu0 0.0
        %2451 = vmatprep.subr.mxu0 0.0
        %2452 = vmatpush1.msra.mxu0 0.0
        %2453 = vmatprep.subr.mxu0 0.0
        %2454 = vmatpush1.msra.mxu0 0.0
        %2455 = vmatprep.subr.mxu0 0.0
        %2456 = vmatpush1.msra.mxu0 0.0
        %2457 = vmatprep.subr.mxu0 0.0
        %2458 = vmatpush1.msra.mxu0 0.0
        %2459 = vmatprep.subr.mxu0 0.0
        %2460 = vmatpush1.msra.mxu0 0.0
        %2461 = vmatprep.subr.mxu0 0.0
        %2462 = vmatpush1.msra.mxu0 0.0
        %2463 = vmatprep.subr.mxu0 0.0
        %2464 = vmatpush1.msra.mxu0 0.0
        %2465 = vmatprep.subr.mxu0 0.0
        %2466 = vmatpush1.msra.mxu0 0.0
        %2467 = vmatprep.subr.mxu0 0.0
        %2468 = vmatpush1.msra.mxu0 0.0
        %2469 = vmatprep.subr.mxu0 0.0
        %2470 = vmatpush1.msra.mxu0 0.0
        %2471 = vmatprep.subr.mxu0 0.0
        %2472 = vmatpush1.msra.mxu0 0.0
        %2473 = vmatprep.subr.mxu0 0.0
        %2474 = vmatpush1.msra.mxu0 0.0
        %2475 = vmatprep.subr.mxu0 0.0
        %2476 = vmatpush1.msra.mxu0 0.0
        %2477 = vmatprep.mubr.f32.mxu0 0.0
        %2478 = vmatmul.mubr.f32.gmra.mrb[0].mxu0 %v2411
        %v2479 = vpop.f32.mrb[0].mxu0
        %v2480 = vadd.f32 0.0, %v2479
        %v2481 = vpop.f32.mrb[0].mxu0
        %2482 = vdwg.mxu0
        %v2483 = vadd.f32 %v2392, %v2480
        %v2484 = vmax.f32 %v2389, %v2398
        %v2486 = vrot.slane %v2484, 7
        %v2488 = vmax.f32 %v2396, %v2486
        %s2489 = scalar_lea.vmem %s5, 32
        %v2490 = vld [vmem:[%s2489] sm:$0xff]
        %v2491 = vld [vmem:[%s2489 + $0x8] sm:$0xff]
        %v2492 = vld [vmem:[%s2489 + $0x10] sm:$0xff]
        %v2493 = vld [vmem:[%s2489 + $0x18] sm:$0xff]
        %v2495 = vrot.slane %v2488, 2
        %v2496 = vsel %vm2409, %v2495, 0
        %2498 = vmatprep.subr.mxu0 0.0
        %2499 = vmatpush1.msra.mxu0 %v2490
        %2500 = vmatprep.subr.mxu0 0.0
        %2501 = vmatpush1.msra.mxu0 %v2491
        %2502 = vmatprep.subr.mxu0 0.0
        %2503 = vmatpush1.msra.mxu0 %v2492
        %2504 = vmatprep.subr.mxu0 0.0
        %2505 = vmatpush1.msra.mxu0 %v2493
        %2506 = vmatprep.subr.mxu0 0.0
        %2507 = vmatpush1.msra.mxu0 0.0
        %2508 = vmatprep.subr.mxu0 0.0
        %2509 = vmatpush1.msra.mxu0 0.0
        %2510 = vmatprep.subr.mxu0 0.0
        %2511 = vmatpush1.msra.mxu0 0.0
        %2512 = vmatprep.subr.mxu0 0.0
        %2513 = vmatpush1.msra.mxu0 0.0
        %2514 = vmatprep.subr.mxu0 0.0
        %2515 = vmatpush1.msra.mxu0 0.0
        %2516 = vmatprep.subr.mxu0 0.0
        %2517 = vmatpush1.msra.mxu0 0.0
        %2518 = vmatprep.subr.mxu0 0.0
        %2519 = vmatpush1.msra.mxu0 0.0
        %2520 = vmatprep.subr.mxu0 0.0
        %2521 = vmatpush1.msra.mxu0 0.0
        %2522 = vmatprep.subr.mxu0 0.0
        %2523 = vmatpush1.msra.mxu0 0.0
        %2524 = vmatprep.subr.mxu0 0.0
        %2525 = vmatpush1.msra.mxu0 0.0
        %2526 = vmatprep.subr.mxu0 0.0
        %2527 = vmatpush1.msra.mxu0 0.0
        %2528 = vmatprep.subr.mxu0 0.0
        %2529 = vmatpush1.msra.mxu0 0.0
        %2530 = vmatprep.subr.mxu0 0.0
        %2531 = vmatpush1.msra.mxu0 0.0
        %2532 = vmatprep.subr.mxu0 0.0
        %2533 = vmatpush1.msra.mxu0 0.0
        %2534 = vmatprep.subr.mxu0 0.0
        %2535 = vmatpush1.msra.mxu0 0.0
        %2536 = vmatprep.subr.mxu0 0.0
        %2537 = vmatpush1.msra.mxu0 0.0
        %2538 = vmatprep.subr.mxu0 0.0
        %2539 = vmatpush1.msra.mxu0 0.0
        %2540 = vmatprep.subr.mxu0 0.0
        %2541 = vmatpush1.msra.mxu0 0.0
        %2542 = vmatprep.subr.mxu0 0.0
        %2543 = vmatpush1.msra.mxu0 0.0
        %2544 = vmatprep.subr.mxu0 0.0
        %2545 = vmatpush1.msra.mxu0 0.0
        %2546 = vmatprep.subr.mxu0 0.0
        %2547 = vmatpush1.msra.mxu0 0.0
        %2548 = vmatprep.subr.mxu0 0.0
        %2549 = vmatpush1.msra.mxu0 0.0
        %2550 = vmatprep.subr.mxu0 0.0
        %2551 = vmatpush1.msra.mxu0 0.0
        %2552 = vmatprep.subr.mxu0 0.0
        %2553 = vmatpush1.msra.mxu0 0.0
        %2554 = vmatprep.subr.mxu0 0.0
        %2555 = vmatpush1.msra.mxu0 0.0
        %2556 = vmatprep.subr.mxu0 0.0
        %2557 = vmatpush1.msra.mxu0 0.0
        %2558 = vmatprep.subr.mxu0 0.0
        %2559 = vmatpush1.msra.mxu0 0.0
        %2560 = vmatprep.subr.mxu0 0.0
        %2561 = vmatpush1.msra.mxu0 0.0
        %2562 = vmatprep.mubr.f32.mxu0 0.0
        %2563 = vmatmul.mubr.f32.gmra.mrb[0].mxu0 %v2496
        %v2564 = vpop.f32.mrb[0].mxu0
        %v2565 = vadd.f32 0.0, %v2564
        %v2566 = vpop.f32.mrb[0].mxu0
        %2567 = vdwg.mxu0
        %v2568 = vadd.f32 %v2483, %v2565
        %v2570 = vrot.slane %v2390, 1
        %v2572 = vmax.f32 %v2390, %v2570
        %v2574 = vrot.slane %v2572, 7
        %v2576 = vmax.f32 %v2484, %v2574
        %s2577 = scalar_lea.vmem %s5, 64
        %v2578 = vld [vmem:[%s2577] sm:$0xff]
        %v2579 = vld [vmem:[%s2577 + $0x8] sm:$0xff]
        %v2580 = vld [vmem:[%s2577 + $0x10] sm:$0xff]
        %v2581 = vld [vmem:[%s2577 + $0x18] sm:$0xff]
        %v2583 = vrot.slane %v2576, 6
        %v2584 = vsel %vm2409, %v2583, 0
        %2586 = vmatprep.subr.mxu0 0.0
        %2587 = vmatpush1.msra.mxu0 %v2578
        %2588 = vmatprep.subr.mxu0 0.0
        %2589 = vmatpush1.msra.mxu0 %v2579
        %2590 = vmatprep.subr.mxu0 0.0
        %2591 = vmatpush1.msra.mxu0 %v2580
        %2592 = vmatprep.subr.mxu0 0.0
        %2593 = vmatpush1.msra.mxu0 %v2581
        %2594 = vmatprep.subr.mxu0 0.0
        %2595 = vmatpush1.msra.mxu0 0.0
        %2596 = vmatprep.subr.mxu0 0.0
        %2597 = vmatpush1.msra.mxu0 0.0
        %2598 = vmatprep.subr.mxu0 0.0
        %2599 = vmatpush1.msra.mxu0 0.0
        %2600 = vmatprep.subr.mxu0 0.0
        %2601 = vmatpush1.msra.mxu0 0.0
        %2602 = vmatprep.subr.mxu0 0.0
        %2603 = vmatpush1.msra.mxu0 0.0
        %2604 = vmatprep.subr.mxu0 0.0
        %2605 = vmatpush1.msra.mxu0 0.0
        %2606 = vmatprep.subr.mxu0 0.0
        %2607 = vmatpush1.msra.mxu0 0.0
        %2608 = vmatprep.subr.mxu0 0.0
        %2609 = vmatpush1.msra.mxu0 0.0
        %2610 = vmatprep.subr.mxu0 0.0
        %2611 = vmatpush1.msra.mxu0 0.0
        %2612 = vmatprep.subr.mxu0 0.0
        %2613 = vmatpush1.msra.mxu0 0.0
        %2614 = vmatprep.subr.mxu0 0.0
        %2615 = vmatpush1.msra.mxu0 0.0
        %2616 = vmatprep.subr.mxu0 0.0
        %2617 = vmatpush1.msra.mxu0 0.0
        %2618 = vmatprep.subr.mxu0 0.0
        %2619 = vmatpush1.msra.mxu0 0.0
        %2620 = vmatprep.subr.mxu0 0.0
        %2621 = vmatpush1.msra.mxu0 0.0
        %2622 = vmatprep.subr.mxu0 0.0
        %2623 = vmatpush1.msra.mxu0 0.0
        %2624 = vmatprep.subr.mxu0 0.0
        %2625 = vmatpush1.msra.mxu0 0.0
        %2626 = vmatprep.subr.mxu0 0.0
        %2627 = vmatpush1.msra.mxu0 0.0
        %2628 = vmatprep.subr.mxu0 0.0
        %2629 = vmatpush1.msra.mxu0 0.0
        %2630 = vmatprep.subr.mxu0 0.0
        %2631 = vmatpush1.msra.mxu0 0.0
        %2632 = vmatprep.subr.mxu0 0.0
        %2633 = vmatpush1.msra.mxu0 0.0
        %2634 = vmatprep.subr.mxu0 0.0
        %2635 = vmatpush1.msra.mxu0 0.0
        %2636 = vmatprep.subr.mxu0 0.0
        %2637 = vmatpush1.msra.mxu0 0.0
        %2638 = vmatprep.subr.mxu0 0.0
        %2639 = vmatpush1.msra.mxu0 0.0
        %2640 = vmatprep.subr.mxu0 0.0
        %2641 = vmatpush1.msra.mxu0 0.0
        %2642 = vmatprep.subr.mxu0 0.0
        %2643 = vmatpush1.msra.mxu0 0.0
        %2644 = vmatprep.subr.mxu0 0.0
        %2645 = vmatpush1.msra.mxu0 0.0
        %2646 = vmatprep.subr.mxu0 0.0
        %2647 = vmatpush1.msra.mxu0 0.0
        %2648 = vmatprep.subr.mxu0 0.0
        %2649 = vmatpush1.msra.mxu0 0.0
        %2650 = vmatprep.mubr.f32.mxu0 0.0
        %2651 = vmatmul.mubr.f32.gmra.mrb[0].mxu0 %v2584
        %v2652 = vpop.f32.mrb[0].mxu0
        %v2653 = vadd.f32 0.0, %v2652
        %v2654 = vpop.f32.mrb[0].mxu0
        %2655 = vdwg.mxu0
        %v2656 = vadd.f32 %v2568, %v2653
        %v2658 = vrot.slane %v2391, 1
        %v2660 = vmax.f32 %v2390, %v2658
        %v2662 = vrot.slane %v2660, 7
        %v2664 = vmax.f32 %v2572, %v2662
        %s2665 = scalar_lea.vmem %s5, 96
        %v2666 = vld [vmem:[%s2665] sm:$0xff]
        %v2667 = vld [vmem:[%s2665 + $0x8] sm:$0xff]
        %v2668 = vld [vmem:[%s2665 + $0x10] sm:$0xff]
        %v2669 = vld [vmem:[%s2665 + $0x18] sm:$0xff]
        %v2671 = vsel %vm2409, %v2664, 0
        %2673 = vmatprep.subr.mxu0 0.0
        %2674 = vmatpush1.msra.mxu0 %v2666
        %2675 = vmatprep.subr.mxu0 0.0
        %2676 = vmatpush1.msra.mxu0 %v2667
        %2677 = vmatprep.subr.mxu0 0.0
        %2678 = vmatpush1.msra.mxu0 %v2668
        %2679 = vmatprep.subr.mxu0 0.0
        %2680 = vmatpush1.msra.mxu0 %v2669
        %2681 = vmatprep.subr.mxu0 0.0
        %2682 = vmatpush1.msra.mxu0 0.0
        %2683 = vmatprep.subr.mxu0 0.0
        %2684 = vmatpush1.msra.mxu0 0.0
        %2685 = vmatprep.subr.mxu0 0.0
        %2686 = vmatpush1.msra.mxu0 0.0
        %2687 = vmatprep.subr.mxu0 0.0
        %2688 = vmatpush1.msra.mxu0 0.0
        %2689 = vmatprep.subr.mxu0 0.0
        %2690 = vmatpush1.msra.mxu0 0.0
        %2691 = vmatprep.subr.mxu0 0.0
        %2692 = vmatpush1.msra.mxu0 0.0
        %2693 = vmatprep.subr.mxu0 0.0
        %2694 = vmatpush1.msra.mxu0 0.0
        %2695 = vmatprep.subr.mxu0 0.0
        %2696 = vmatpush1.msra.mxu0 0.0
        %2697 = vmatprep.subr.mxu0 0.0
        %2698 = vmatpush1.msra.mxu0 0.0
        %2699 = vmatprep.subr.mxu0 0.0
        %2700 = vmatpush1.msra.mxu0 0.0
        %2701 = vmatprep.subr.mxu0 0.0
        %2702 = vmatpush1.msra.mxu0 0.0
        %2703 = vmatprep.subr.mxu0 0.0
        %2704 = vmatpush1.msra.mxu0 0.0
        %2705 = vmatprep.subr.mxu0 0.0
        %2706 = vmatpush1.msra.mxu0 0.0
        %2707 = vmatprep.subr.mxu0 0.0
        %2708 = vmatpush1.msra.mxu0 0.0
        %2709 = vmatprep.subr.mxu0 0.0
        %2710 = vmatpush1.msra.mxu0 0.0
        %2711 = vmatprep.subr.mxu0 0.0
        %2712 = vmatpush1.msra.mxu0 0.0
        %2713 = vmatprep.subr.mxu0 0.0
        %2714 = vmatpush1.msra.mxu0 0.0
        %2715 = vmatprep.subr.mxu0 0.0
        %2716 = vmatpush1.msra.mxu0 0.0
        %2717 = vmatprep.subr.mxu0 0.0
        %2718 = vmatpush1.msra.mxu0 0.0
        %2719 = vmatprep.subr.mxu0 0.0
        %2720 = vmatpush1.msra.mxu0 0.0
        %2721 = vmatprep.subr.mxu0 0.0
        %2722 = vmatpush1.msra.mxu0 0.0
        %2723 = vmatprep.subr.mxu0 0.0
        %2724 = vmatpush1.msra.mxu0 0.0
        %2725 = vmatprep.subr.mxu0 0.0
        %2726 = vmatpush1.msra.mxu0 0.0
        %2727 = vmatprep.subr.mxu0 0.0
        %2728 = vmatpush1.msra.mxu0 0.0
        %2729 = vmatprep.subr.mxu0 0.0
        %2730 = vmatpush1.msra.mxu0 0.0
        %2731 = vmatprep.subr.mxu0 0.0
        %2732 = vmatpush1.msra.mxu0 0.0
        %2733 = vmatprep.subr.mxu0 0.0
        %2734 = vmatpush1.msra.mxu0 0.0
        %2735 = vmatprep.subr.mxu0 0.0
        %2736 = vmatpush1.msra.mxu0 0.0
        %2737 = vmatprep.mubr.f32.mxu0 0.0
        %2738 = vmatmul.mubr.f32.gmra.mrb[0].mxu0 %v2671
        %v2739 = vpop.f32.mrb[0].mxu0
        %v2740 = vadd.f32 0.0, %v2739
        %v2741 = vpop.f32.mrb[0].mxu0
        %2742 = vdwg.mxu0
        %v2743 = vadd.f32 %v2656, %v2740
        %vm2744 = vcmask 8192
        %v2745 = vsel %vm2744, %v2743, -inf
        %2746 = vmax.xlane.f32.xlu0 %v2745
        %v2747 = vpop.xlane.xlu0 %2746
        %v2748 = vsub.f32 %v2743, %v2747
        %v2749 = vmul.f32 %v2748, 1.442695
        %v2750 = vpow.pop %v2749
        %v2751 = vsel %vm2744, %v2750, 0.0
        %2752 = vadd.xlane.f32.xlu0 %v2751
        %v2753 = vpop.xlane.xlu0 %2752
        %v2754 = vlog2.pop %v2753
        %v2755 = vmul.f32 %v2754, 0.6931472
        %v2756 = vadd.f32 %v2747, %v2755
        %v2757 = vsub.f32 %v2743, %v2756
        %2758 = vst.msk [vmem:[%s273] sm:$0x1] %vm2744, %v2757
        %s2759 = sand.u32 %s181, 1
        %s2760 = scalar_lea.sflag [#allocation3], %s2759
        %s2761 = sand.u32 %s181, 1
        %s2762 = scalar_lea.vmem [#allocation2], %s2761
        // Predicated region
        $region49: #{forward.1} parent=47 // pred_check
          %p2763 = pneg %p191
        $region50: #{forward.1} parent=47 // pred_check_branch
          %2765 = sbr.rel (%p2763) target = $region52
        $region51: #{forward.1} parent=47 // pred_region
          %s2767 = ssub.s32 16, 16
          %2768 = vsyncadd %s2760, %s2767
          %s2769 = smul.addr %s21, 16
          %s2770 = scalar_lea.hbm %s7, %s2769
          %s2772 = sshll.u32 %s2762, 4
          %s2773 = int_to_ptr.vmem [resolvable:$true] %s2772
          %2775 = dma.vmem_to_hbm [thread:$0]  %s2773, 16, %s2770, %s2760
        $region52: #{forward.1} parent=47 // pred_fallthru
          _
      $region48: #{forward.1} parent=5 // pred_fallthru
        _
      %p2776 = scmp.le.s32.totalorder 2, %s16
      // Predicated region
      $region53: #{forward.1} parent=5 // pred_check
        %p2777 = pneg %p2776
      $region54: #{forward.1} parent=5 // pred_check_branch
        %2779 = sbr.rel (%p2777) target = $region56
      $region55: #{forward.1} parent=5 // pred_region
        %s2780 = ssub.s32 %s16, 2
        // Predicated region
        $region57: #{forward.1} parent=55 // pred_check
          %p2781 = pneg %p197
        $region58: #{forward.1} parent=55 // pred_check_branch
          %2783 = sbr.rel (%p2781) target = $region60
        $region59: #{forward.1} parent=55 // pred_region
          %s2784 = sand.u32 %s182, 1
          %s2785 = scalar_lea.sflag [#allocation3], %s2784
          %s2786 = sand.u32 %s182, 1
          %s2787 = scalar_lea.vmem [#allocation2], %s2786
          %2788 = dma.done %s2785, 16
        $region60: #{forward.1} parent=55 // pred_fallthru
          _
      $region56: #{forward.1} parent=5 // pred_fallthru
        _
    $region6: #{forward.1} parent=1 // loop_footer
      %s20 = sadd.s32 1, %s16
    $region7: #{forward.1} parent=1 // loop_footer_branch
      %15 = sbr.rel target = $region3
    $region8: #{forward.1} parent=1 // loop_exit
      _
    %2789 = vsyncpa [#allocation3], 1
    %s2790 = scalar_lea.sflag [#allocation3], 1
    %2791 = vsyncpa %s2790, 1

</llo_original>
